<compile_context>
chip_gen: v6e
topology: v6e:2x2x1
jax: 0.10.0
libtpu: 0.0.40
codegen_flags: <defaults>
</compile_context>

<pallas_src>
import functools

import jax
import jax.numpy as jnp
import numpy as np
from jax.experimental import pallas as pl
from jax.experimental.pallas import tpu as pltpu


def _shifted_loss_kernel(maskT_ref, g_ref, fm1_ref, fm2_ref, out_ref, *, shifts):
    """Per-batch-tile body.

    Block shapes:
      maskT_ref: (hw, n_shifts) f32  fused validity * 1/(C*H'*W') columns (resident)
      g_ref    : (TB, TB*C)     f32  channel-group indicator matrix (resident)
      fm1_ref  : (TB*C, hw)          this tile's feature maps (sample-major rows)
      fm2_ref  : (TB*C, hw)
      out_ref  : (TB, 128)      f32  lane-dense broadcast of the per-sample losses
    """
    a = fm1_ref[...].astype(jnp.float32)          # (TB*C, hw); lane axis = H*W
    b = fm2_ref[...].astype(jnp.float32)
    maskT = maskT_ref[...]                        # (hw, S)
    g = g_ref[...]                                # (TB, TB*C)
    tb = g.shape[0]

    # Running per-sample minimum, kept in registers (no scratch / stores).
    m = jnp.full((tb, 1), jnp.finfo(jnp.float32).max, dtype=jnp.float32)

    # One roll (XLU) + subtract/square (VPU) per shift; lane reduction, validity
    # mask, normalization and channel-group reduction all run on the MXU, so the
    # XLU carries only the rolls and there are no per-shift masked stores.
    for s_idx, amt in enumerate(shifts):
        aligned = b if amt == 0 else pltpu.roll(b, shift=amt, axis=1)
        d = a - aligned
        per_cn = jnp.dot(d * d, maskT, preferred_element_type=jnp.float32)   # (TB*C, S)
        per_s = jnp.dot(g, per_cn, preferred_element_type=jnp.float32)       # (TB,   S)
        m = jnp.minimum(m, per_s[:, s_idx:s_idx + 1])                        # this shift's column

    out_ref[...] = jnp.broadcast_to(m, out_ref.shape)    # lane-dense (TB, 128) store


def _build_shift_tables(c, h, w, hshift, vshift):
    """Trace-time tables: roll amounts + fused validity/normalization mask columns."""
    hw = h * w
    cols = np.arange(w)
    rows = np.arange(h)
    shifts, mask_cols = [], []
    for bh in range(-hshift, hshift + 1):
        for bv in range(-vshift, vshift + 1):
            wp, hp = w - abs(bh), h - abs(bv)
            if wp <= 0 or hp <= 0:
                # Degenerate shift: empty overlap window (0/0 NaN in the reference) -> skip.
                continue
            cmask = ((cols + bh >= 0) & (cols + bh < w)).astype(np.float32)
            rmask = ((rows + bv >= 0) & (rows + bv < h)).astype(np.float32)
            mcol = (rmask[:, None] * cmask[None, :]).reshape(hw)
            mask_cols.append(mcol * (1.0 / float(c * hp * wp)))
            # aligned[f] = fm2_flat[f + bv*w + bh]  <=>  roll by -(bv*w + bh) (mod hw)
            shifts.append(int((-(bv * w + bh)) % hw))
    maskT = np.stack(mask_cols, axis=1).astype(np.float32)   # (hw, n_shifts)
    return tuple(shifts), maskT


def _pick_tile_batch(bs, c, hw):
    """Samples per grid step: big enough to amortize per-step overhead, small
    enough that 2 inputs x 2 pipeline buffers stay far below VMEM (64 MiB on
    v7x, 16/32 MiB scoped defaults)."""
    budget_bytes = 8 * 1024 * 1024
    tb = budget_bytes // max(1, 2 * 2 * c * hw * 4)
    tb = int(min(128, max(8, (tb // 8) * 8)))
    bs8 = ((bs + 7) // 8) * 8
    return min(tb, bs8)


def shifted_loss(fm1, fm2, hshift, vshift):
    """Pallas implementation of ShiftedLoss.forward (NCHW inputs)."""
    bs, c, h, w = fm1.shape
    if w < hshift:
        hshift = hshift % w
    if h < vshift:
        vshift = vshift % h
    hw = h * w

    shifts, maskT_np = _build_shift_tables(c, h, w, hshift, vshift)
    n_shifts = maskT_np.shape[1]

    tb = _pick_tile_batch(bs, c, hw)
    bs_pad = ((bs + tb - 1) // tb) * tb

    fm1r = fm1.reshape(bs, c, hw)
    fm2r = fm2.reshape(bs, c, hw)
    if bs_pad != bs:
        pad = ((0, bs_pad - bs), (0, 0), (0, 0))
        fm1r = jnp.pad(fm1r, pad)
        fm2r = jnp.pad(fm2r, pad)
    fm1r = fm1r.reshape(bs_pad * c, hw)
    fm2r = fm2r.reshape(bs_pad * c, hw)

    maskT = jnp.asarray(maskT_np, dtype=jnp.float32)                      # (hw, S)
    g = jnp.asarray(np.repeat(np.eye(tb, dtype=np.float32), c, axis=1))   # (TB, TB*C)

    kernel = functools.partial(_shifted_loss_kernel, shifts=shifts)

    out = pl.pallas_call(
        kernel,
        out_shape=jax.ShapeDtypeStruct((bs_pad, 128), jnp.float32),
        grid_spec=pltpu.PrefetchScalarGridSpec(
            num_scalar_prefetch=0,
            grid=(bs_pad // tb,),
            in_specs=[
                pl.BlockSpec((hw, n_shifts), lambda i: (0, 0)),   # resident, fetched once
                pl.BlockSpec((tb, tb * c), lambda i: (0, 0)),     # resident, fetched once
                pl.BlockSpec((tb * c, hw), lambda i: (i, 0)),
                pl.BlockSpec((tb * c, hw), lambda i: (i, 0)),
            ],
            out_specs=pl.BlockSpec((tb, 128), lambda i: (i, 0)),
        ),
        compiler_params=pltpu.CompilerParams(
            dimension_semantics=("parallel",),     # batch axis -> both TCs on v7x
            vmem_limit_bytes=48 * 1024 * 1024,     # explicit, well under v7x's 64 MiB
        ),
    )(maskT, g, fm1r, fm2r)

    # PyTorch module ends with .squeeze(): (bs,) for bs > 1, 0-d scalar for bs == 1.
    return jnp.squeeze(out[:bs, 0])


def _reference_shifted_loss(fm1, fm2, hshift, vshift):
    """Plain numpy reference mirroring the PyTorch module."""
    fm1 = np.asarray(fm1, dtype=np.float32)
    fm2 = np.asarray(fm2, dtype=np.float32)
    bs, c, h, w = fm1.shape
    if w < hshift:
        hshift = hshift % w
    if h < vshift:
        vshift = vshift % h
    min_dist = np.full((bs,), np.finfo(np.float32).max, dtype=np.float32)
    for bh in range(-hshift, hshift + 1):
        for bv in range(-vshift, vshift + 1):
            if bh >= 0:
                r1, r2 = fm1[:, :, :, : w - bh], fm2[:, :, :, bh:]
            else:
                r1, r2 = fm1[:, :, :, -bh:], fm2[:, :, :, : w + bh]
            if bv >= 0:
                r1, r2 = r1[:, :, : h - bv, :], r2[:, :, bv:, :]
            else:
                r1, r2 = r1[:, :, -bv:, :], r2[:, :, : h + bv, :]
            d = (r1 - r2).reshape(bs, -1)
            if d.size == 0:
                continue
            dist = (d * d).sum(1) / d.size * bs
            min_dist = np.minimum(min_dist, dist)
    return min_dist


if __name__ == "__main__":
    # Module __init__ takes (hshift, vshift); no learnable parameters.
    HSHIFT, VSHIFT = 2, 2

    key = jax.random.PRNGKey(0)
    k1, k2 = jax.random.split(key)
    # NCHW, small deterministic feature maps.
    fm1 = jax.random.normal(k1, (2, 4, 16, 16), dtype=jnp.float32)
    fm2 = jax.random.normal(k2, (2, 4, 16, 16), dtype=jnp.float32)

    out = shifted_loss(fm1, fm2, HSHIFT, VSHIFT)
    out = jax.block_until_ready(out)

    ref = _reference_shifted_loss(np.array(fm1), np.array(fm2), HSHIFT, VSHIFT)
    np.testing.assert_allclose(np.array(out), ref, rtol=1e-5, atol=1e-5)

    print("KERNEL_OK")
</pallas_src>

<mosaic_0001>
module attributes {stable_mosaic.version = 11 : i64} {
  func.func @_shifted_loss_kernel(%arg0: i32, %arg1: memref<256x25xf32, #tpu.memory_space<vmem>>, %arg2: memref<8x32xf32, #tpu.memory_space<vmem>>, %arg3: memref<32x256xf32, #tpu.memory_space<vmem>>, %arg4: memref<32x256xf32, #tpu.memory_space<vmem>>, %arg5: memref<8x128xf32, #tpu.memory_space<vmem>>) attributes {dimension_semantics = [#tpu.dimension_semantics<parallel>], iteration_bounds = array<i64: 1>, scalar_prefetch = 0 : i64, scratch_operands = 0 : i64, tpu.core_type = #tpu.core_type<tc>, window_params = [{pipeline_mode = #tpu.pipeline_mode<synchronous>, transform_indices = @transform_0, window_bounds = array<i64: 256, 25>}, {pipeline_mode = #tpu.pipeline_mode<synchronous>, transform_indices = @transform_1, window_bounds = array<i64: 8, 32>}, {transform_indices = @transform_2, window_bounds = array<i64: 32, 256>}, {transform_indices = @transform_3, window_bounds = array<i64: 32, 256>}, {transform_indices = @transform_4, window_bounds = array<i64: 8, 128>}]} {
    %c0 = arith.constant 0 : index
    %c0_0 = arith.constant 0 : index
    %0 = vector.load %arg3[%c0, %c0_0] : memref<32x256xf32, #tpu.memory_space<vmem>>, vector<32x256xf32>
    %c0_1 = arith.constant 0 : index
    %c0_2 = arith.constant 0 : index
    %1 = vector.load %arg4[%c0_1, %c0_2] : memref<32x256xf32, #tpu.memory_space<vmem>>, vector<32x256xf32>
    %c0_3 = arith.constant 0 : index
    %c0_4 = arith.constant 0 : index
    %2 = vector.load %arg1[%c0_3, %c0_4] : memref<256x25xf32, #tpu.memory_space<vmem>>, vector<256x25xf32>
    %c0_5 = arith.constant 0 : index
    %c0_6 = arith.constant 0 : index
    %3 = vector.load %arg2[%c0_5, %c0_6] : memref<8x32xf32, #tpu.memory_space<vmem>>, vector<8x32xf32>
    %cst = arith.constant 3.40282347E+38 : f32
    %4 = vector.broadcast %cst : f32 to vector<8x1xf32>
    %c34_i32 = arith.constant 34 : i32
    %5 = tpu.dynamic_rotate %1 by %c34_i32 dim 1 : vector<32x256xf32>, i32 -> vector<32x256xf32>
    %6 = arith.subf %0, %5 : vector<32x256xf32>
    %7 = arith.mulf %6, %6 : vector<32x256xf32>
    %cst_7 = arith.constant dense<0.000000e+00> : vector<32x25xf32>
    %8 = tpu.matmul %7, %2, %cst_7 {dimension_numbers = #tpu.dot_dimension_numbers<[1], [0], [0], [1], [0, 0, 1, 1], [], []>} : vector<32x256xf32>, vector<256x25xf32>, vector<32x25xf32> -> vector<32x25xf32>
    %cst_8 = arith.constant dense<0.000000e+00> : vector<8x25xf32>
    %9 = tpu.matmul %3, %8, %cst_8 {dimension_numbers = #tpu.dot_dimension_numbers<[1], [0], [0], [1], [0, 0, 1, 1], [], []>} : vector<8x32xf32>, vector<32x25xf32>, vector<8x25xf32> -> vector<8x25xf32>
    %10 = vector.extract_strided_slice %9 {offsets = [0, 0], sizes = [8, 1], strides = [1, 1]} : vector<8x25xf32> to vector<8x1xf32>
    %11 = arith.minimumf %4, %10 : vector<8x1xf32>
    %c18_i32 = arith.constant 18 : i32
    %12 = tpu.dynamic_rotate %1 by %c18_i32 dim 1 : vector<32x256xf32>, i32 -> vector<32x256xf32>
    %13 = arith.subf %0, %12 : vector<32x256xf32>
    %14 = arith.mulf %13, %13 : vector<32x256xf32>
    %cst_9 = arith.constant dense<0.000000e+00> : vector<32x25xf32>
    %15 = tpu.matmul %14, %2, %cst_9 {dimension_numbers = #tpu.dot_dimension_numbers<[1], [0], [0], [1], [0, 0, 1, 1], [], []>} : vector<32x256xf32>, vector<256x25xf32>, vector<32x25xf32> -> vector<32x25xf32>
    %cst_10 = arith.constant dense<0.000000e+00> : vector<8x25xf32>
    %16 = tpu.matmul %3, %15, %cst_10 {dimension_numbers = #tpu.dot_dimension_numbers<[1], [0], [0], [1], [0, 0, 1, 1], [], []>} : vector<8x32xf32>, vector<32x25xf32>, vector<8x25xf32> -> vector<8x25xf32>
    %17 = vector.extract_strided_slice %16 {offsets = [0, 1], sizes = [8, 1], strides = [1, 1]} : vector<8x25xf32> to vector<8x1xf32>
    %18 = arith.minimumf %11, %17 : vector<8x1xf32>
    %c2_i32 = arith.constant 2 : i32
    %19 = tpu.dynamic_rotate %1 by %c2_i32 dim 1 : vector<32x256xf32>, i32 -> vector<32x256xf32>
    %20 = arith.subf %0, %19 : vector<32x256xf32>
    %21 = arith.mulf %20, %20 : vector<32x256xf32>
    %cst_11 = arith.constant dense<0.000000e+00> : vector<32x25xf32>
    %22 = tpu.matmul %21, %2, %cst_11 {dimension_numbers = #tpu.dot_dimension_numbers<[1], [0], [0], [1], [0, 0, 1, 1], [], []>} : vector<32x256xf32>, vector<256x25xf32>, vector<32x25xf32> -> vector<32x25xf32>
    %cst_12 = arith.constant dense<0.000000e+00> : vector<8x25xf32>
    %23 = tpu.matmul %3, %22, %cst_12 {dimension_numbers = #tpu.dot_dimension_numbers<[1], [0], [0], [1], [0, 0, 1, 1], [], []>} : vector<8x32xf32>, vector<32x25xf32>, vector<8x25xf32> -> vector<8x25xf32>
    %24 = vector.extract_strided_slice %23 {offsets = [0, 2], sizes = [8, 1], strides = [1, 1]} : vector<8x25xf32> to vector<8x1xf32>
    %25 = arith.minimumf %18, %24 : vector<8x1xf32>
    %c242_i32 = arith.constant 242 : i32
    %26 = tpu.dynamic_rotate %1 by %c242_i32 dim 1 : vector<32x256xf32>, i32 -> vector<32x256xf32>
    %27 = arith.subf %0, %26 : vector<32x256xf32>
    %28 = arith.mulf %27, %27 : vector<32x256xf32>
    %cst_13 = arith.constant dense<0.000000e+00> : vector<32x25xf32>
    %29 = tpu.matmul %28, %2, %cst_13 {dimension_numbers = #tpu.dot_dimension_numbers<[1], [0], [0], [1], [0, 0, 1, 1], [], []>} : vector<32x256xf32>, vector<256x25xf32>, vector<32x25xf32> -> vector<32x25xf32>
    %cst_14 = arith.constant dense<0.000000e+00> : vector<8x25xf32>
    %30 = tpu.matmul %3, %29, %cst_14 {dimension_numbers = #tpu.dot_dimension_numbers<[1], [0], [0], [1], [0, 0, 1, 1], [], []>} : vector<8x32xf32>, vector<32x25xf32>, vector<8x25xf32> -> vector<8x25xf32>
    %31 = vector.extract_strided_slice %30 {offsets = [0, 3], sizes = [8, 1], strides = [1, 1]} : vector<8x25xf32> to vector<8x1xf32>
    %32 = arith.minimumf %25, %31 : vector<8x1xf32>
    %c226_i32 = arith.constant 226 : i32
    %33 = tpu.dynamic_rotate %1 by %c226_i32 dim 1 : vector<32x256xf32>, i32 -> vector<32x256xf32>
    %34 = arith.subf %0, %33 : vector<32x256xf32>
    %35 = arith.mulf %34, %34 : vector<32x256xf32>
    %cst_15 = arith.constant dense<0.000000e+00> : vector<32x25xf32>
    %36 = tpu.matmul %35, %2, %cst_15 {dimension_numbers = #tpu.dot_dimension_numbers<[1], [0], [0], [1], [0, 0, 1, 1], [], []>} : vector<32x256xf32>, vector<256x25xf32>, vector<32x25xf32> -> vector<32x25xf32>
    %cst_16 = arith.constant dense<0.000000e+00> : vector<8x25xf32>
    %37 = tpu.matmul %3, %36, %cst_16 {dimension_numbers = #tpu.dot_dimension_numbers<[1], [0], [0], [1], [0, 0, 1, 1], [], []>} : vector<8x32xf32>, vector<32x25xf32>, vector<8x25xf32> -> vector<8x25xf32>
    %38 = vector.extract_strided_slice %37 {offsets = [0, 4], sizes = [8, 1], strides = [1, 1]} : vector<8x25xf32> to vector<8x1xf32>
    %39 = arith.minimumf %32, %38 : vector<8x1xf32>
    %c33_i32 = arith.constant 33 : i32
    %40 = tpu.dynamic_rotate %1 by %c33_i32 dim 1 : vector<32x256xf32>, i32 -> vector<32x256xf32>
    %41 = arith.subf %0, %40 : vector<32x256xf32>
    %42 = arith.mulf %41, %41 : vector<32x256xf32>
    %cst_17 = arith.constant dense<0.000000e+00> : vector<32x25xf32>
    %43 = tpu.matmul %42, %2, %cst_17 {dimension_numbers = #tpu.dot_dimension_numbers<[1], [0], [0], [1], [0, 0, 1, 1], [], []>} : vector<32x256xf32>, vector<256x25xf32>, vector<32x25xf32> -> vector<32x25xf32>
    %cst_18 = arith.constant dense<0.000000e+00> : vector<8x25xf32>
    %44 = tpu.matmul %3, %43, %cst_18 {dimension_numbers = #tpu.dot_dimension_numbers<[1], [0], [0], [1], [0, 0, 1, 1], [], []>} : vector<8x32xf32>, vector<32x25xf32>, vector<8x25xf32> -> vector<8x25xf32>
    %45 = vector.extract_strided_slice %44 {offsets = [0, 5], sizes = [8, 1], strides = [1, 1]} : vector<8x25xf32> to vector<8x1xf32>
    %46 = arith.minimumf %39, %45 : vector<8x1xf32>
    %c17_i32 = arith.constant 17 : i32
    %47 = tpu.dynamic_rotate %1 by %c17_i32 dim 1 : vector<32x256xf32>, i32 -> vector<32x256xf32>
    %48 = arith.subf %0, %47 : vector<32x256xf32>
    %49 = arith.mulf %48, %48 : vector<32x256xf32>
    %cst_19 = arith.constant dense<0.000000e+00> : vector<32x25xf32>
    %50 = tpu.matmul %49, %2, %cst_19 {dimension_numbers = #tpu.dot_dimension_numbers<[1], [0], [0], [1], [0, 0, 1, 1], [], []>} : vector<32x256xf32>, vector<256x25xf32>, vector<32x25xf32> -> vector<32x25xf32>
    %cst_20 = arith.constant dense<0.000000e+00> : vector<8x25xf32>
    %51 = tpu.matmul %3, %50, %cst_20 {dimension_numbers = #tpu.dot_dimension_numbers<[1], [0], [0], [1], [0, 0, 1, 1], [], []>} : vector<8x32xf32>, vector<32x25xf32>, vector<8x25xf32> -> vector<8x25xf32>
    %52 = vector.extract_strided_slice %51 {offsets = [0, 6], sizes = [8, 1], strides = [1, 1]} : vector<8x25xf32> to vector<8x1xf32>
    %53 = arith.minimumf %46, %52 : vector<8x1xf32>
    %c1_i32 = arith.constant 1 : i32
    %54 = tpu.dynamic_rotate %1 by %c1_i32 dim 1 : vector<32x256xf32>, i32 -> vector<32x256xf32>
    %55 = arith.subf %0, %54 : vector<32x256xf32>
    %56 = arith.mulf %55, %55 : vector<32x256xf32>
    %cst_21 = arith.constant dense<0.000000e+00> : vector<32x25xf32>
    %57 = tpu.matmul %56, %2, %cst_21 {dimension_numbers = #tpu.dot_dimension_numbers<[1], [0], [0], [1], [0, 0, 1, 1], [], []>} : vector<32x256xf32>, vector<256x25xf32>, vector<32x25xf32> -> vector<32x25xf32>
    %cst_22 = arith.constant dense<0.000000e+00> : vector<8x25xf32>
    %58 = tpu.matmul %3, %57, %cst_22 {dimension_numbers = #tpu.dot_dimension_numbers<[1], [0], [0], [1], [0, 0, 1, 1], [], []>} : vector<8x32xf32>, vector<32x25xf32>, vector<8x25xf32> -> vector<8x25xf32>
    %59 = vector.extract_strided_slice %58 {offsets = [0, 7], sizes = [8, 1], strides = [1, 1]} : vector<8x25xf32> to vector<8x1xf32>
    %60 = arith.minimumf %53, %59 : vector<8x1xf32>
    %c241_i32 = arith.constant 241 : i32
    %61 = tpu.dynamic_rotate %1 by %c241_i32 dim 1 : vector<32x256xf32>, i32 -> vector<32x256xf32>
    %62 = arith.subf %0, %61 : vector<32x256xf32>
    %63 = arith.mulf %62, %62 : vector<32x256xf32>
    %cst_23 = arith.constant dense<0.000000e+00> : vector<32x25xf32>
    %64 = tpu.matmul %63, %2, %cst_23 {dimension_numbers = #tpu.dot_dimension_numbers<[1], [0], [0], [1], [0, 0, 1, 1], [], []>} : vector<32x256xf32>, vector<256x25xf32>, vector<32x25xf32> -> vector<32x25xf32>
    %cst_24 = arith.constant dense<0.000000e+00> : vector<8x25xf32>
    %65 = tpu.matmul %3, %64, %cst_24 {dimension_numbers = #tpu.dot_dimension_numbers<[1], [0], [0], [1], [0, 0, 1, 1], [], []>} : vector<8x32xf32>, vector<32x25xf32>, vector<8x25xf32> -> vector<8x25xf32>
    %66 = vector.extract_strided_slice %65 {offsets = [0, 8], sizes = [8, 1], strides = [1, 1]} : vector<8x25xf32> to vector<8x1xf32>
    %67 = arith.minimumf %60, %66 : vector<8x1xf32>
    %c225_i32 = arith.constant 225 : i32
    %68 = tpu.dynamic_rotate %1 by %c225_i32 dim 1 : vector<32x256xf32>, i32 -> vector<32x256xf32>
    %69 = arith.subf %0, %68 : vector<32x256xf32>
    %70 = arith.mulf %69, %69 : vector<32x256xf32>
    %cst_25 = arith.constant dense<0.000000e+00> : vector<32x25xf32>
    %71 = tpu.matmul %70, %2, %cst_25 {dimension_numbers = #tpu.dot_dimension_numbers<[1], [0], [0], [1], [0, 0, 1, 1], [], []>} : vector<32x256xf32>, vector<256x25xf32>, vector<32x25xf32> -> vector<32x25xf32>
    %cst_26 = arith.constant dense<0.000000e+00> : vector<8x25xf32>
    %72 = tpu.matmul %3, %71, %cst_26 {dimension_numbers = #tpu.dot_dimension_numbers<[1], [0], [0], [1], [0, 0, 1, 1], [], []>} : vector<8x32xf32>, vector<32x25xf32>, vector<8x25xf32> -> vector<8x25xf32>
    %73 = vector.extract_strided_slice %72 {offsets = [0, 9], sizes = [8, 1], strides = [1, 1]} : vector<8x25xf32> to vector<8x1xf32>
    %74 = arith.minimumf %67, %73 : vector<8x1xf32>
    %c32_i32 = arith.constant 32 : i32
    %75 = tpu.dynamic_rotate %1 by %c32_i32 dim 1 : vector<32x256xf32>, i32 -> vector<32x256xf32>
    %76 = arith.subf %0, %75 : vector<32x256xf32>
    %77 = arith.mulf %76, %76 : vector<32x256xf32>
    %cst_27 = arith.constant dense<0.000000e+00> : vector<32x25xf32>
    %78 = tpu.matmul %77, %2, %cst_27 {dimension_numbers = #tpu.dot_dimension_numbers<[1], [0], [0], [1], [0, 0, 1, 1], [], []>} : vector<32x256xf32>, vector<256x25xf32>, vector<32x25xf32> -> vector<32x25xf32>
    %cst_28 = arith.constant dense<0.000000e+00> : vector<8x25xf32>
    %79 = tpu.matmul %3, %78, %cst_28 {dimension_numbers = #tpu.dot_dimension_numbers<[1], [0], [0], [1], [0, 0, 1, 1], [], []>} : vector<8x32xf32>, vector<32x25xf32>, vector<8x25xf32> -> vector<8x25xf32>
    %80 = vector.extract_strided_slice %79 {offsets = [0, 10], sizes = [8, 1], strides = [1, 1]} : vector<8x25xf32> to vector<8x1xf32>
    %81 = arith.minimumf %74, %80 : vector<8x1xf32>
    %c16_i32 = arith.constant 16 : i32
    %82 = tpu.dynamic_rotate %1 by %c16_i32 dim 1 : vector<32x256xf32>, i32 -> vector<32x256xf32>
    %83 = arith.subf %0, %82 : vector<32x256xf32>
    %84 = arith.mulf %83, %83 : vector<32x256xf32>
    %cst_29 = arith.constant dense<0.000000e+00> : vector<32x25xf32>
    %85 = tpu.matmul %84, %2, %cst_29 {dimension_numbers = #tpu.dot_dimension_numbers<[1], [0], [0], [1], [0, 0, 1, 1], [], []>} : vector<32x256xf32>, vector<256x25xf32>, vector<32x25xf32> -> vector<32x25xf32>
    %cst_30 = arith.constant dense<0.000000e+00> : vector<8x25xf32>
    %86 = tpu.matmul %3, %85, %cst_30 {dimension_numbers = #tpu.dot_dimension_numbers<[1], [0], [0], [1], [0, 0, 1, 1], [], []>} : vector<8x32xf32>, vector<32x25xf32>, vector<8x25xf32> -> vector<8x25xf32>
    %87 = vector.extract_strided_slice %86 {offsets = [0, 11], sizes = [8, 1], strides = [1, 1]} : vector<8x25xf32> to vector<8x1xf32>
    %88 = arith.minimumf %81, %87 : vector<8x1xf32>
    %89 = arith.subf %0, %1 : vector<32x256xf32>
    %90 = arith.mulf %89, %89 : vector<32x256xf32>
    %cst_31 = arith.constant dense<0.000000e+00> : vector<32x25xf32>
    %91 = tpu.matmul %90, %2, %cst_31 {dimension_numbers = #tpu.dot_dimension_numbers<[1], [0], [0], [1], [0, 0, 1, 1], [], []>} : vector<32x256xf32>, vector<256x25xf32>, vector<32x25xf32> -> vector<32x25xf32>
    %cst_32 = arith.constant dense<0.000000e+00> : vector<8x25xf32>
    %92 = tpu.matmul %3, %91, %cst_32 {dimension_numbers = #tpu.dot_dimension_numbers<[1], [0], [0], [1], [0, 0, 1, 1], [], []>} : vector<8x32xf32>, vector<32x25xf32>, vector<8x25xf32> -> vector<8x25xf32>
    %93 = vector.extract_strided_slice %92 {offsets = [0, 12], sizes = [8, 1], strides = [1, 1]} : vector<8x25xf32> to vector<8x1xf32>
    %94 = arith.minimumf %88, %93 : vector<8x1xf32>
    %c240_i32 = arith.constant 240 : i32
    %95 = tpu.dynamic_rotate %1 by %c240_i32 dim 1 : vector<32x256xf32>, i32 -> vector<32x256xf32>
    %96 = arith.subf %0, %95 : vector<32x256xf32>
    %97 = arith.mulf %96, %96 : vector<32x256xf32>
    %cst_33 = arith.constant dense<0.000000e+00> : vector<32x25xf32>
    %98 = tpu.matmul %97, %2, %cst_33 {dimension_numbers = #tpu.dot_dimension_numbers<[1], [0], [0], [1], [0, 0, 1, 1], [], []>} : vector<32x256xf32>, vector<256x25xf32>, vector<32x25xf32> -> vector<32x25xf32>
    %cst_34 = arith.constant dense<0.000000e+00> : vector<8x25xf32>
    %99 = tpu.matmul %3, %98, %cst_34 {dimension_numbers = #tpu.dot_dimension_numbers<[1], [0], [0], [1], [0, 0, 1, 1], [], []>} : vector<8x32xf32>, vector<32x25xf32>, vector<8x25xf32> -> vector<8x25xf32>
    %100 = vector.extract_strided_slice %99 {offsets = [0, 13], sizes = [8, 1], strides = [1, 1]} : vector<8x25xf32> to vector<8x1xf32>
    %101 = arith.minimumf %94, %100 : vector<8x1xf32>
    %c224_i32 = arith.constant 224 : i32
    %102 = tpu.dynamic_rotate %1 by %c224_i32 dim 1 : vector<32x256xf32>, i32 -> vector<32x256xf32>
    %103 = arith.subf %0, %102 : vector<32x256xf32>
    %104 = arith.mulf %103, %103 : vector<32x256xf32>
    %cst_35 = arith.constant dense<0.000000e+00> : vector<32x25xf32>
    %105 = tpu.matmul %104, %2, %cst_35 {dimension_numbers = #tpu.dot_dimension_numbers<[1], [0], [0], [1], [0, 0, 1, 1], [], []>} : vector<32x256xf32>, vector<256x25xf32>, vector<32x25xf32> -> vector<32x25xf32>
    %cst_36 = arith.constant dense<0.000000e+00> : vector<8x25xf32>
    %106 = tpu.matmul %3, %105, %cst_36 {dimension_numbers = #tpu.dot_dimension_numbers<[1], [0], [0], [1], [0, 0, 1, 1], [], []>} : vector<8x32xf32>, vector<32x25xf32>, vector<8x25xf32> -> vector<8x25xf32>
    %107 = vector.extract_strided_slice %106 {offsets = [0, 14], sizes = [8, 1], strides = [1, 1]} : vector<8x25xf32> to vector<8x1xf32>
    %108 = arith.minimumf %101, %107 : vector<8x1xf32>
    %c31_i32 = arith.constant 31 : i32
    %109 = tpu.dynamic_rotate %1 by %c31_i32 dim 1 : vector<32x256xf32>, i32 -> vector<32x256xf32>
    %110 = arith.subf %0, %109 : vector<32x256xf32>
    %111 = arith.mulf %110, %110 : vector<32x256xf32>
    %cst_37 = arith.constant dense<0.000000e+00> : vector<32x25xf32>
    %112 = tpu.matmul %111, %2, %cst_37 {dimension_numbers = #tpu.dot_dimension_numbers<[1], [0], [0], [1], [0, 0, 1, 1], [], []>} : vector<32x256xf32>, vector<256x25xf32>, vector<32x25xf32> -> vector<32x25xf32>
    %cst_38 = arith.constant dense<0.000000e+00> : vector<8x25xf32>
    %113 = tpu.matmul %3, %112, %cst_38 {dimension_numbers = #tpu.dot_dimension_numbers<[1], [0], [0], [1], [0, 0, 1, 1], [], []>} : vector<8x32xf32>, vector<32x25xf32>, vector<8x25xf32> -> vector<8x25xf32>
    %114 = vector.extract_strided_slice %113 {offsets = [0, 15], sizes = [8, 1], strides = [1, 1]} : vector<8x25xf32> to vector<8x1xf32>
    %115 = arith.minimumf %108, %114 : vector<8x1xf32>
    %c15_i32 = arith.constant 15 : i32
    %116 = tpu.dynamic_rotate %1 by %c15_i32 dim 1 : vector<32x256xf32>, i32 -> vector<32x256xf32>
    %117 = arith.subf %0, %116 : vector<32x256xf32>
    %118 = arith.mulf %117, %117 : vector<32x256xf32>
    %cst_39 = arith.constant dense<0.000000e+00> : vector<32x25xf32>
    %119 = tpu.matmul %118, %2, %cst_39 {dimension_numbers = #tpu.dot_dimension_numbers<[1], [0], [0], [1], [0, 0, 1, 1], [], []>} : vector<32x256xf32>, vector<256x25xf32>, vector<32x25xf32> -> vector<32x25xf32>
    %cst_40 = arith.constant dense<0.000000e+00> : vector<8x25xf32>
    %120 = tpu.matmul %3, %119, %cst_40 {dimension_numbers = #tpu.dot_dimension_numbers<[1], [0], [0], [1], [0, 0, 1, 1], [], []>} : vector<8x32xf32>, vector<32x25xf32>, vector<8x25xf32> -> vector<8x25xf32>
    %121 = vector.extract_strided_slice %120 {offsets = [0, 16], sizes = [8, 1], strides = [1, 1]} : vector<8x25xf32> to vector<8x1xf32>
    %122 = arith.minimumf %115, %121 : vector<8x1xf32>
    %c255_i32 = arith.constant 255 : i32
    %123 = tpu.dynamic_rotate %1 by %c255_i32 dim 1 : vector<32x256xf32>, i32 -> vector<32x256xf32>
    %124 = arith.subf %0, %123 : vector<32x256xf32>
    %125 = arith.mulf %124, %124 : vector<32x256xf32>
    %cst_41 = arith.constant dense<0.000000e+00> : vector<32x25xf32>
    %126 = tpu.matmul %125, %2, %cst_41 {dimension_numbers = #tpu.dot_dimension_numbers<[1], [0], [0], [1], [0, 0, 1, 1], [], []>} : vector<32x256xf32>, vector<256x25xf32>, vector<32x25xf32> -> vector<32x25xf32>
    %cst_42 = arith.constant dense<0.000000e+00> : vector<8x25xf32>
    %127 = tpu.matmul %3, %126, %cst_42 {dimension_numbers = #tpu.dot_dimension_numbers<[1], [0], [0], [1], [0, 0, 1, 1], [], []>} : vector<8x32xf32>, vector<32x25xf32>, vector<8x25xf32> -> vector<8x25xf32>
    %128 = vector.extract_strided_slice %127 {offsets = [0, 17], sizes = [8, 1], strides = [1, 1]} : vector<8x25xf32> to vector<8x1xf32>
    %129 = arith.minimumf %122, %128 : vector<8x1xf32>
    %c239_i32 = arith.constant 239 : i32
    %130 = tpu.dynamic_rotate %1 by %c239_i32 dim 1 : vector<32x256xf32>, i32 -> vector<32x256xf32>
    %131 = arith.subf %0, %130 : vector<32x256xf32>
    %132 = arith.mulf %131, %131 : vector<32x256xf32>
    %cst_43 = arith.constant dense<0.000000e+00> : vector<32x25xf32>
    %133 = tpu.matmul %132, %2, %cst_43 {dimension_numbers = #tpu.dot_dimension_numbers<[1], [0], [0], [1], [0, 0, 1, 1], [], []>} : vector<32x256xf32>, vector<256x25xf32>, vector<32x25xf32> -> vector<32x25xf32>
    %cst_44 = arith.constant dense<0.000000e+00> : vector<8x25xf32>
    %134 = tpu.matmul %3, %133, %cst_44 {dimension_numbers = #tpu.dot_dimension_numbers<[1], [0], [0], [1], [0, 0, 1, 1], [], []>} : vector<8x32xf32>, vector<32x25xf32>, vector<8x25xf32> -> vector<8x25xf32>
    %135 = vector.extract_strided_slice %134 {offsets = [0, 18], sizes = [8, 1], strides = [1, 1]} : vector<8x25xf32> to vector<8x1xf32>
    %136 = arith.minimumf %129, %135 : vector<8x1xf32>
    %c223_i32 = arith.constant 223 : i32
    %137 = tpu.dynamic_rotate %1 by %c223_i32 dim 1 : vector<32x256xf32>, i32 -> vector<32x256xf32>
    %138 = arith.subf %0, %137 : vector<32x256xf32>
    %139 = arith.mulf %138, %138 : vector<32x256xf32>
    %cst_45 = arith.constant dense<0.000000e+00> : vector<32x25xf32>
    %140 = tpu.matmul %139, %2, %cst_45 {dimension_numbers = #tpu.dot_dimension_numbers<[1], [0], [0], [1], [0, 0, 1, 1], [], []>} : vector<32x256xf32>, vector<256x25xf32>, vector<32x25xf32> -> vector<32x25xf32>
    %cst_46 = arith.constant dense<0.000000e+00> : vector<8x25xf32>
    %141 = tpu.matmul %3, %140, %cst_46 {dimension_numbers = #tpu.dot_dimension_numbers<[1], [0], [0], [1], [0, 0, 1, 1], [], []>} : vector<8x32xf32>, vector<32x25xf32>, vector<8x25xf32> -> vector<8x25xf32>
    %142 = vector.extract_strided_slice %141 {offsets = [0, 19], sizes = [8, 1], strides = [1, 1]} : vector<8x25xf32> to vector<8x1xf32>
    %143 = arith.minimumf %136, %142 : vector<8x1xf32>
    %c30_i32 = arith.constant 30 : i32
    %144 = tpu.dynamic_rotate %1 by %c30_i32 dim 1 : vector<32x256xf32>, i32 -> vector<32x256xf32>
    %145 = arith.subf %0, %144 : vector<32x256xf32>
    %146 = arith.mulf %145, %145 : vector<32x256xf32>
    %cst_47 = arith.constant dense<0.000000e+00> : vector<32x25xf32>
    %147 = tpu.matmul %146, %2, %cst_47 {dimension_numbers = #tpu.dot_dimension_numbers<[1], [0], [0], [1], [0, 0, 1, 1], [], []>} : vector<32x256xf32>, vector<256x25xf32>, vector<32x25xf32> -> vector<32x25xf32>
    %cst_48 = arith.constant dense<0.000000e+00> : vector<8x25xf32>
    %148 = tpu.matmul %3, %147, %cst_48 {dimension_numbers = #tpu.dot_dimension_numbers<[1], [0], [0], [1], [0, 0, 1, 1], [], []>} : vector<8x32xf32>, vector<32x25xf32>, vector<8x25xf32> -> vector<8x25xf32>
    %149 = vector.extract_strided_slice %148 {offsets = [0, 20], sizes = [8, 1], strides = [1, 1]} : vector<8x25xf32> to vector<8x1xf32>
    %150 = arith.minimumf %143, %149 : vector<8x1xf32>
    %c14_i32 = arith.constant 14 : i32
    %151 = tpu.dynamic_rotate %1 by %c14_i32 dim 1 : vector<32x256xf32>, i32 -> vector<32x256xf32>
    %152 = arith.subf %0, %151 : vector<32x256xf32>
    %153 = arith.mulf %152, %152 : vector<32x256xf32>
    %cst_49 = arith.constant dense<0.000000e+00> : vector<32x25xf32>
    %154 = tpu.matmul %153, %2, %cst_49 {dimension_numbers = #tpu.dot_dimension_numbers<[1], [0], [0], [1], [0, 0, 1, 1], [], []>} : vector<32x256xf32>, vector<256x25xf32>, vector<32x25xf32> -> vector<32x25xf32>
    %cst_50 = arith.constant dense<0.000000e+00> : vector<8x25xf32>
    %155 = tpu.matmul %3, %154, %cst_50 {dimension_numbers = #tpu.dot_dimension_numbers<[1], [0], [0], [1], [0, 0, 1, 1], [], []>} : vector<8x32xf32>, vector<32x25xf32>, vector<8x25xf32> -> vector<8x25xf32>
    %156 = vector.extract_strided_slice %155 {offsets = [0, 21], sizes = [8, 1], strides = [1, 1]} : vector<8x25xf32> to vector<8x1xf32>
    %157 = arith.minimumf %150, %156 : vector<8x1xf32>
    %c254_i32 = arith.constant 254 : i32
    %158 = tpu.dynamic_rotate %1 by %c254_i32 dim 1 : vector<32x256xf32>, i32 -> vector<32x256xf32>
    %159 = arith.subf %0, %158 : vector<32x256xf32>
    %160 = arith.mulf %159, %159 : vector<32x256xf32>
    %cst_51 = arith.constant dense<0.000000e+00> : vector<32x25xf32>
    %161 = tpu.matmul %160, %2, %cst_51 {dimension_numbers = #tpu.dot_dimension_numbers<[1], [0], [0], [1], [0, 0, 1, 1], [], []>} : vector<32x256xf32>, vector<256x25xf32>, vector<32x25xf32> -> vector<32x25xf32>
    %cst_52 = arith.constant dense<0.000000e+00> : vector<8x25xf32>
    %162 = tpu.matmul %3, %161, %cst_52 {dimension_numbers = #tpu.dot_dimension_numbers<[1], [0], [0], [1], [0, 0, 1, 1], [], []>} : vector<8x32xf32>, vector<32x25xf32>, vector<8x25xf32> -> vector<8x25xf32>
    %163 = vector.extract_strided_slice %162 {offsets = [0, 22], sizes = [8, 1], strides = [1, 1]} : vector<8x25xf32> to vector<8x1xf32>
    %164 = arith.minimumf %157, %163 : vector<8x1xf32>
    %c238_i32 = arith.constant 238 : i32
    %165 = tpu.dynamic_rotate %1 by %c238_i32 dim 1 : vector<32x256xf32>, i32 -> vector<32x256xf32>
    %166 = arith.subf %0, %165 : vector<32x256xf32>
    %167 = arith.mulf %166, %166 : vector<32x256xf32>
    %cst_53 = arith.constant dense<0.000000e+00> : vector<32x25xf32>
    %168 = tpu.matmul %167, %2, %cst_53 {dimension_numbers = #tpu.dot_dimension_numbers<[1], [0], [0], [1], [0, 0, 1, 1], [], []>} : vector<32x256xf32>, vector<256x25xf32>, vector<32x25xf32> -> vector<32x25xf32>
    %cst_54 = arith.constant dense<0.000000e+00> : vector<8x25xf32>
    %169 = tpu.matmul %3, %168, %cst_54 {dimension_numbers = #tpu.dot_dimension_numbers<[1], [0], [0], [1], [0, 0, 1, 1], [], []>} : vector<8x32xf32>, vector<32x25xf32>, vector<8x25xf32> -> vector<8x25xf32>
    %170 = vector.extract_strided_slice %169 {offsets = [0, 23], sizes = [8, 1], strides = [1, 1]} : vector<8x25xf32> to vector<8x1xf32>
    %171 = arith.minimumf %164, %170 : vector<8x1xf32>
    %c222_i32 = arith.constant 222 : i32
    %172 = tpu.dynamic_rotate %1 by %c222_i32 dim 1 : vector<32x256xf32>, i32 -> vector<32x256xf32>
    %173 = arith.subf %0, %172 : vector<32x256xf32>
    %174 = arith.mulf %173, %173 : vector<32x256xf32>
    %cst_55 = arith.constant dense<0.000000e+00> : vector<32x25xf32>
    %175 = tpu.matmul %174, %2, %cst_55 {dimension_numbers = #tpu.dot_dimension_numbers<[1], [0], [0], [1], [0, 0, 1, 1], [], []>} : vector<32x256xf32>, vector<256x25xf32>, vector<32x25xf32> -> vector<32x25xf32>
    %cst_56 = arith.constant dense<0.000000e+00> : vector<8x25xf32>
    %176 = tpu.matmul %3, %175, %cst_56 {dimension_numbers = #tpu.dot_dimension_numbers<[1], [0], [0], [1], [0, 0, 1, 1], [], []>} : vector<8x32xf32>, vector<32x25xf32>, vector<8x25xf32> -> vector<8x25xf32>
    %177 = vector.extract_strided_slice %176 {offsets = [0, 24], sizes = [8, 1], strides = [1, 1]} : vector<8x25xf32> to vector<8x1xf32>
    %178 = arith.minimumf %171, %177 : vector<8x1xf32>
    %179 = vector.shape_cast %178 : vector<8x1xf32> to vector<8x1xf32>
    %180 = vector.broadcast %179 : vector<8x1xf32> to vector<8x128xf32>
    %c0_57 = arith.constant 0 : index
    %c0_58 = arith.constant 0 : index
    %181 = vector.load %arg5[%c0_57, %c0_58] : memref<8x128xf32, #tpu.memory_space<vmem>>, vector<8x128xf32>
    tpu.vector_store %arg5[%c0_57, %c0_58], %180 {strides = array<i32>} : memref<8x128xf32, #tpu.memory_space<vmem>>, vector<8x128xf32>,
    return
  }
  func.func @transform_0(%arg0: i32) -> (i32, i32) {
    %c0_i32 = arith.constant 0 : i32
    %c0_i32_0 = arith.constant 0 : i32
    %c0_i32_1 = arith.constant 0 : i32
    return %c0_i32, %c0_i32_0 : i32, i32
  }
  func.func @transform_1(%arg0: i32) -> (i32, i32) {
    %c0_i32 = arith.constant 0 : i32
    %c0_i32_0 = arith.constant 0 : i32
    %c0_i32_1 = arith.constant 0 : i32
    return %c0_i32, %c0_i32_0 : i32, i32
  }
  func.func @transform_2(%arg0: i32) -> (i32, i32) {
    %c0_i32 = arith.constant 0 : i32
    %c0_i32_0 = arith.constant 0 : i32
    return %arg0, %c0_i32 : i32, i32
  }
  func.func @transform_3(%arg0: i32) -> (i32, i32) {
    %c0_i32 = arith.constant 0 : i32
    %c0_i32_0 = arith.constant 0 : i32
    return %arg0, %c0_i32 : i32, i32
  }
  func.func @transform_4(%arg0: i32) -> (i32, i32) {
    %c0_i32 = arith.constant 0 : i32
    %c0_i32_0 = arith.constant 0 : i32
    return %arg0, %c0_i32 : i32, i32
  }
}

</mosaic_0001>

<llo_original>
// kernel: tpu_custom_call.1
$region0: #{tpu_custom_call.1}
  #allocation0 [shape = 'u32[]', space=smem, size = 0x4, offset = 0x4, fixed_abs, tag = 'smem constant byte address 0x4 - core index']
  #allocation1 [shape = 'u32[144,128]{1,0:T(1,128)}', space=vmem, size = 0x12000, scoped, tag = 'internal scratch']
  %s0 = inlined_call_operand.vmem [shape: f32[256,25], index: 0, kind: input, shape index: {}]
  %s1 = inlined_call_operand.vmem [shape: f32[8,32], index: 1, kind: input, shape index: {}]
  %s2 = inlined_call_operand.vmem [shape: f32[32,256], index: 2, kind: input, shape index: {}]
  %s3 = inlined_call_operand.vmem [shape: f32[32,256], index: 3, kind: input, shape index: {}]
  %s4 = inlined_call_operand.hbm [shape: f32[8,128], index: 4, kind: output, shape index: {}]
  %s5 = sld [smem:[#allocation0]]
  $region26: #{tpu_custom_call.1} parent=0
    _
  %s7 = ssub.s32 1, %s5
  %s8 = scalar_select 0, %s7, %s5
  $region1: #{tpu_custom_call.1} parent=0
    #allocation2 [shape = 'u8[4096]{0}', space=vmem, size = 0x1000, scoped, tag = 'output window, operand 0, single buffered']
    #allocation3 [shape = 's32[1]{0}', space=sflag, size = 0x4, scoped, tag = 'scoped memory for tpu_custom_call.1']
    %9 = vsyncpa [#allocation3], 0
    // Predicated region
    $region2: #{tpu_custom_call.1} parent=1 // pred_check
      _
    $region3: #{tpu_custom_call.1} parent=1 // pred_check_branch
      %11 = sbr.rel (0) target = $region5
    $region4: #{tpu_custom_call.1} parent=1 // pred_region
      _
    $region5: #{tpu_custom_call.1} parent=1 // pred_fallthru
      _
    // Predicated region
    $region6: #{tpu_custom_call.1} parent=1 // pred_check
      _
    $region7: #{tpu_custom_call.1} parent=1 // pred_check_branch
      %13 = sbr.rel (0) target = $region9
    $region8: #{tpu_custom_call.1} parent=1 // pred_region
      _
    $region9: #{tpu_custom_call.1} parent=1 // pred_fallthru
      _
    // Predicated region
    $region10: #{tpu_custom_call.1} parent=1 // pred_check
      _
    $region11: #{tpu_custom_call.1} parent=1 // pred_check_branch
      %15 = sbr.rel (0) target = $region13
    $region12: #{tpu_custom_call.1} parent=1 // pred_region
      _
    $region13: #{tpu_custom_call.1} parent=1 // pred_fallthru
      _
    // Predicated region
    $region14: #{tpu_custom_call.1} parent=1 // pred_check
      _
    $region15: #{tpu_custom_call.1} parent=1 // pred_check_branch
      %17 = sbr.rel (0) target = $region17
    $region16: #{tpu_custom_call.1} parent=1 // pred_region
      _
    $region17: #{tpu_custom_call.1} parent=1 // pred_fallthru
      _
    %v18 = vld [vmem:[%s2] sm:$0xff]
    %v19 = vld [vmem:[%s2 + $0x8] sm:$0xff]
    %v20 = vld [vmem:[%s2 + $0x10] sm:$0xff]
    %v21 = vld [vmem:[%s2 + $0x18] sm:$0xff]
    %v22 = vld [vmem:[%s2 + $0x20] sm:$0xff]
    %v23 = vld [vmem:[%s2 + $0x28] sm:$0xff]
    %v24 = vld [vmem:[%s2 + $0x30] sm:$0xff]
    %v25 = vld [vmem:[%s2 + $0x38] sm:$0xff]
    %v26 = vld [vmem:[%s3] sm:$0xff]
    %v27 = vld [vmem:[%s3 + $0x8] sm:$0xff]
    %v28 = vld [vmem:[%s3 + $0x10] sm:$0xff]
    %v29 = vld [vmem:[%s3 + $0x18] sm:$0xff]
    %v30 = vld [vmem:[%s3 + $0x20] sm:$0xff]
    %v31 = vld [vmem:[%s3 + $0x28] sm:$0xff]
    %v32 = vld [vmem:[%s3 + $0x30] sm:$0xff]
    %v33 = vld [vmem:[%s3 + $0x38] sm:$0xff]
    %v34 = vld [vmem:[%s0] sm:$0xff]
    %v35 = vld [vmem:[%s0 + $0x8] sm:$0xff]
    %v36 = vld [vmem:[%s0 + $0x10] sm:$0xff]
    %v37 = vld [vmem:[%s0 + $0x18] sm:$0xff]
    %v38 = vld [vmem:[%s0 + $0x20] sm:$0xff]
    %v39 = vld [vmem:[%s0 + $0x28] sm:$0xff]
    %v40 = vld [vmem:[%s0 + $0x30] sm:$0xff]
    %v41 = vld [vmem:[%s0 + $0x38] sm:$0xff]
    %v42 = vld [vmem:[%s0 + $0x40] sm:$0xff]
    %v43 = vld [vmem:[%s0 + $0x48] sm:$0xff]
    %v44 = vld [vmem:[%s0 + $0x50] sm:$0xff]
    %v45 = vld [vmem:[%s0 + $0x58] sm:$0xff]
    %v46 = vld [vmem:[%s0 + $0x60] sm:$0xff]
    %v47 = vld [vmem:[%s0 + $0x68] sm:$0xff]
    %v48 = vld [vmem:[%s0 + $0x70] sm:$0xff]
    %v49 = vld [vmem:[%s0 + $0x78] sm:$0xff]
    %v50 = vld [vmem:[%s0 + $0x80] sm:$0xff]
    %v51 = vld [vmem:[%s0 + $0x88] sm:$0xff]
    %v52 = vld [vmem:[%s0 + $0x90] sm:$0xff]
    %v53 = vld [vmem:[%s0 + $0x98] sm:$0xff]
    %v54 = vld [vmem:[%s0 + $0xa0] sm:$0xff]
    %v55 = vld [vmem:[%s0 + $0xa8] sm:$0xff]
    %v56 = vld [vmem:[%s0 + $0xb0] sm:$0xff]
    %v57 = vld [vmem:[%s0 + $0xb8] sm:$0xff]
    %v58 = vld [vmem:[%s0 + $0xc0] sm:$0xff]
    %v59 = vld [vmem:[%s0 + $0xc8] sm:$0xff]
    %v60 = vld [vmem:[%s0 + $0xd0] sm:$0xff]
    %v61 = vld [vmem:[%s0 + $0xd8] sm:$0xff]
    %v62 = vld [vmem:[%s0 + $0xe0] sm:$0xff]
    %v63 = vld [vmem:[%s0 + $0xe8] sm:$0xff]
    %v64 = vld [vmem:[%s0 + $0xf0] sm:$0xff]
    %v65 = vld [vmem:[%s0 + $0xf8] sm:$0xff]
    %v66 = vld [vmem:[%s1] sm:$0xff]
    %67 = vrot.lane.b32.xlu0 %v26, 34
    %v68 = vpop.permute.xlu0 %67
    %69 = vrot.lane.b32.xlu0 %v28, 34
    %v70 = vpop.permute.xlu0 %69
    %71 = vrot.lane.b32.xlu0 %v30, 34
    %v72 = vpop.permute.xlu0 %71
    %73 = vrot.lane.b32.xlu0 %v32, 34
    %v74 = vpop.permute.xlu0 %73
    %75 = vrot.lane.b32.xlu0 %v27, 34
    %v76 = vpop.permute.xlu0 %75
    %77 = vrot.lane.b32.xlu0 %v29, 34
    %v78 = vpop.permute.xlu0 %77
    %79 = vrot.lane.b32.xlu0 %v31, 34
    %v80 = vpop.permute.xlu0 %79
    %81 = vrot.lane.b32.xlu0 %v33, 34
    %v82 = vpop.permute.xlu0 %81
    %v83 = vlaneseq
    %v84 = vand.u32 %v83, 127
    %vm85 = vcmp.lt.s32.totalorder %v84, 34
    %v86 = vsel %vm85, %v68, %v76
    %v87 = vsel %vm85, %v70, %v78
    %v88 = vsel %vm85, %v72, %v80
    %v89 = vsel %vm85, %v74, %v82
    %v90 = vsel %vm85, %v76, %v68
    %v91 = vsel %vm85, %v78, %v70
    %v92 = vsel %vm85, %v80, %v72
    %v93 = vsel %vm85, %v82, %v74
    %v94 = vsub.f32 %v18, %v90
    %v95 = vsub.f32 %v19, %v86
    %v96 = vsub.f32 %v20, %v91
    %v97 = vsub.f32 %v21, %v87
    %v98 = vsub.f32 %v22, %v92
    %v99 = vsub.f32 %v23, %v88
    %v100 = vsub.f32 %v24, %v93
    %v101 = vsub.f32 %v25, %v89
    %v102 = vmul.f32 %v94, %v94
    %v103 = vmul.f32 %v95, %v95
    %v104 = vmul.f32 %v96, %v96
    %v105 = vmul.f32 %v97, %v97
    %v106 = vmul.f32 %v98, %v98
    %v107 = vmul.f32 %v99, %v99
    %v108 = vmul.f32 %v100, %v100
    %v109 = vmul.f32 %v101, %v101
    %110 = vmatprep.subr.mxu0 0.0
    %111 = vmatpush1.msra.mxu0 %v49
    %112 = vmatprep.subr.mxu0 0.0
    %113 = vmatpush1.msra.mxu0 %v48
    %114 = vmatprep.subr.mxu0 0.0
    %115 = vmatpush1.msra.mxu0 %v47
    %116 = vmatprep.subr.mxu0 0.0
    %117 = vmatpush1.msra.mxu0 %v46
    %118 = vmatprep.subr.mxu0 0.0
    %119 = vmatpush1.msra.mxu0 %v45
    %120 = vmatprep.subr.mxu0 0.0
    %121 = vmatpush1.msra.mxu0 %v44
    %122 = vmatprep.subr.mxu0 0.0
    %123 = vmatpush1.msra.mxu0 %v43
    %124 = vmatprep.subr.mxu0 0.0
    %125 = vmatpush1.msra.mxu0 %v42
    %126 = vmatprep.subr.mxu0 0.0
    %127 = vmatpush1.msra.mxu0 %v41
    %128 = vmatprep.subr.mxu0 0.0
    %129 = vmatpush1.msra.mxu0 %v40
    %130 = vmatprep.subr.mxu0 0.0
    %131 = vmatpush1.msra.mxu0 %v39
    %132 = vmatprep.subr.mxu0 0.0
    %133 = vmatpush1.msra.mxu0 %v38
    %134 = vmatprep.subr.mxu0 0.0
    %135 = vmatpush1.msra.mxu0 %v37
    %136 = vmatprep.subr.mxu0 0.0
    %137 = vmatpush1.msra.mxu0 %v36
    %138 = vmatprep.subr.mxu0 0.0
    %139 = vmatpush1.msra.mxu0 %v35
    %140 = vmatprep.subr.mxu0 0.0
    %141 = vmatpush1.msra.mxu0 %v34
    %142 = vmatprep.subr.mxu0 0.0
    %143 = vmatpush2.msra.mxu0 %v65
    %144 = vmatprep.subr.mxu0 0.0
    %145 = vmatpush2.msra.mxu0 %v64
    %146 = vmatprep.subr.mxu0 0.0
    %147 = vmatpush2.msra.mxu0 %v63
    %148 = vmatprep.subr.mxu0 0.0
    %149 = vmatpush2.msra.mxu0 %v62
    %150 = vmatprep.subr.mxu0 0.0
    %151 = vmatpush2.msra.mxu0 %v61
    %152 = vmatprep.subr.mxu0 0.0
    %153 = vmatpush2.msra.mxu0 %v60
    %154 = vmatprep.subr.mxu0 0.0
    %155 = vmatpush2.msra.mxu0 %v59
    %156 = vmatprep.subr.mxu0 0.0
    %157 = vmatpush2.msra.mxu0 %v58
    %158 = vmatprep.subr.mxu0 0.0
    %159 = vmatpush2.msra.mxu0 %v57
    %160 = vmatprep.subr.mxu0 0.0
    %161 = vmatpush2.msra.mxu0 %v56
    %162 = vmatprep.subr.mxu0 0.0
    %163 = vmatpush2.msra.mxu0 %v55
    %164 = vmatprep.subr.mxu0 0.0
    %165 = vmatpush2.msra.mxu0 %v54
    %166 = vmatprep.subr.mxu0 0.0
    %167 = vmatpush2.msra.mxu0 %v53
    %168 = vmatprep.subr.mxu0 0.0
    %169 = vmatpush2.msra.mxu0 %v52
    %170 = vmatprep.subr.mxu0 0.0
    %171 = vmatpush2.msra.mxu0 %v51
    %172 = vmatprep.subr.mxu0 0.0
    %173 = vmatpush2.msra.mxu0 %v50
    %174 = vmatprep.mubr.f32.mxu0 %v103
    %175 = vmatmul.mubr.f32.gmra.mxu0 %v102
    %v176 = vpop.f32.mrf.mxu0
    %v177 = vadd.f32 0.0, %v176
    %v178 = vpop.f32.mrf.mxu0
    %179 = vmatprep.mubr.f32.mxu0 %v105
    %180 = vmatmul.mubr.f32.gmra.mxu0 %v104
    %v181 = vpop.f32.mrf.mxu0
    %v182 = vadd.f32 0.0, %v181
    %v183 = vpop.f32.mrf.mxu0
    %184 = vmatprep.mubr.f32.mxu0 %v107
    %185 = vmatmul.mubr.f32.gmra.mxu0 %v106
    %v186 = vpop.f32.mrf.mxu0
    %v187 = vadd.f32 0.0, %v186
    %v188 = vpop.f32.mrf.mxu0
    %189 = vmatprep.mubr.f32.mxu0 %v109
    %190 = vmatmul.mubr.f32.gmra.mxu0 %v108
    %v191 = vpop.f32.mrf.mxu0
    %v192 = vadd.f32 0.0, %v191
    %v193 = vpop.f32.mrf.mxu0
    %194 = vdwg.mxu0
    %vm195 = vcmask 261120
    %v197 = vsel %vm195, %v66, 0
    %199 = vmatprep.subr.mxu0 0.0
    %200 = vmatpush1.msra.mxu0 0.0
    %201 = vmatprep.subr.mxu0 0.0
    %202 = vmatpush1.msra.mxu0 0.0
    %203 = vmatprep.subr.mxu0 0.0
    %204 = vmatpush1.msra.mxu0 0.0
    %205 = vmatprep.subr.mxu0 0.0
    %206 = vmatpush1.msra.mxu0 0.0
    %207 = vmatprep.subr.mxu0 0.0
    %208 = vmatpush1.msra.mxu0 0.0
    %209 = vmatprep.subr.mxu0 0.0
    %210 = vmatpush1.msra.mxu0 0.0
    %211 = vmatprep.subr.mxu0 0.0
    %212 = vmatpush1.msra.mxu0 0.0
    %213 = vmatprep.subr.mxu0 0.0
    %214 = vmatpush1.msra.mxu0 0.0
    %215 = vmatprep.subr.mxu0 0.0
    %216 = vmatpush1.msra.mxu0 0.0
    %217 = vmatprep.subr.mxu0 0.0
    %218 = vmatpush1.msra.mxu0 0.0
    %219 = vmatprep.subr.mxu0 0.0
    %220 = vmatpush1.msra.mxu0 0.0
    %221 = vmatprep.subr.mxu0 0.0
    %222 = vmatpush1.msra.mxu0 0.0
    %223 = vmatprep.subr.mxu0 0.0
    %224 = vmatpush1.msra.mxu0 %v192
    %225 = vmatprep.subr.mxu0 0.0
    %226 = vmatpush1.msra.mxu0 %v187
    %227 = vmatprep.subr.mxu0 0.0
    %228 = vmatpush1.msra.mxu0 %v182
    %229 = vmatprep.subr.mxu0 0.0
    %230 = vmatpush1.msra.mxu0 %v177
    %231 = vmatprep.subr.mxu0 0.0
    %232 = vmatpush2.msra.mxu0 0.0
    %233 = vmatprep.subr.mxu0 0.0
    %234 = vmatpush2.msra.mxu0 0.0
    %235 = vmatprep.subr.mxu0 0.0
    %236 = vmatpush2.msra.mxu0 0.0
    %237 = vmatprep.subr.mxu0 0.0
    %238 = vmatpush2.msra.mxu0 0.0
    %239 = vmatprep.subr.mxu0 0.0
    %240 = vmatpush2.msra.mxu0 0.0
    %241 = vmatprep.subr.mxu0 0.0
    %242 = vmatpush2.msra.mxu0 0.0
    %243 = vmatprep.subr.mxu0 0.0
    %244 = vmatpush2.msra.mxu0 0.0
    %245 = vmatprep.subr.mxu0 0.0
    %246 = vmatpush2.msra.mxu0 0.0
    %247 = vmatprep.subr.mxu0 0.0
    %248 = vmatpush2.msra.mxu0 0.0
    %249 = vmatprep.subr.mxu0 0.0
    %250 = vmatpush2.msra.mxu0 0.0
    %251 = vmatprep.subr.mxu0 0.0
    %252 = vmatpush2.msra.mxu0 0.0
    %253 = vmatprep.subr.mxu0 0.0
    %254 = vmatpush2.msra.mxu0 0.0
    %255 = vmatprep.subr.mxu0 0.0
    %256 = vmatpush2.msra.mxu0 0.0
    %257 = vmatprep.subr.mxu0 0.0
    %258 = vmatpush2.msra.mxu0 0.0
    %259 = vmatprep.subr.mxu0 0.0
    %260 = vmatpush2.msra.mxu0 0.0
    %261 = vmatprep.subr.mxu0 0.0
    %262 = vmatpush2.msra.mxu0 0.0
    %263 = vmatprep.mubr.f32.mxu0 0.0
    %264 = vmatmul.mubr.f32.gmra.mxu0 %v197
    %v265 = vpop.f32.mrf.mxu0
    %v266 = vadd.f32 0.0, %v265
    %v267 = vpop.f32.mrf.mxu0
    %268 = vdwg.mxu0
    %v269 = vmin.f32 %v266, 3.4028235e+38
    %270 = vrot.lane.b32.xlu0 %v26, 18
    %v271 = vpop.permute.xlu0 %270
    %272 = vrot.lane.b32.xlu0 %v28, 18
    %v273 = vpop.permute.xlu0 %272
    %274 = vrot.lane.b32.xlu0 %v30, 18
    %v275 = vpop.permute.xlu0 %274
    %276 = vrot.lane.b32.xlu0 %v32, 18
    %v277 = vpop.permute.xlu0 %276
    %278 = vrot.lane.b32.xlu0 %v27, 18
    %v279 = vpop.permute.xlu0 %278
    %280 = vrot.lane.b32.xlu0 %v29, 18
    %v281 = vpop.permute.xlu0 %280
    %282 = vrot.lane.b32.xlu0 %v31, 18
    %v283 = vpop.permute.xlu0 %282
    %284 = vrot.lane.b32.xlu0 %v33, 18
    %v285 = vpop.permute.xlu0 %284
    %vm286 = vcmp.lt.s32.totalorder %v84, 18
    %v287 = vsel %vm286, %v271, %v279
    %v288 = vsel %vm286, %v273, %v281
    %v289 = vsel %vm286, %v275, %v283
    %v290 = vsel %vm286, %v277, %v285
    %v291 = vsel %vm286, %v279, %v271
    %v292 = vsel %vm286, %v281, %v273
    %v293 = vsel %vm286, %v283, %v275
    %v294 = vsel %vm286, %v285, %v277
    %v295 = vsub.f32 %v18, %v291
    %v296 = vsub.f32 %v19, %v287
    %v297 = vsub.f32 %v20, %v292
    %v298 = vsub.f32 %v21, %v288
    %v299 = vsub.f32 %v22, %v293
    %v300 = vsub.f32 %v23, %v289
    %v301 = vsub.f32 %v24, %v294
    %v302 = vsub.f32 %v25, %v290
    %v303 = vmul.f32 %v295, %v295
    %v304 = vmul.f32 %v296, %v296
    %v305 = vmul.f32 %v297, %v297
    %v306 = vmul.f32 %v298, %v298
    %v307 = vmul.f32 %v299, %v299
    %v308 = vmul.f32 %v300, %v300
    %v309 = vmul.f32 %v301, %v301
    %v310 = vmul.f32 %v302, %v302
    %311 = vmatprep.subr.mxu0 0.0
    %312 = vmatpush1.msra.mxu0 %v49
    %313 = vmatprep.subr.mxu0 0.0
    %314 = vmatpush1.msra.mxu0 %v48
    %315 = vmatprep.subr.mxu0 0.0
    %316 = vmatpush1.msra.mxu0 %v47
    %317 = vmatprep.subr.mxu0 0.0
    %318 = vmatpush1.msra.mxu0 %v46
    %319 = vmatprep.subr.mxu0 0.0
    %320 = vmatpush1.msra.mxu0 %v45
    %321 = vmatprep.subr.mxu0 0.0
    %322 = vmatpush1.msra.mxu0 %v44
    %323 = vmatprep.subr.mxu0 0.0
    %324 = vmatpush1.msra.mxu0 %v43
    %325 = vmatprep.subr.mxu0 0.0
    %326 = vmatpush1.msra.mxu0 %v42
    %327 = vmatprep.subr.mxu0 0.0
    %328 = vmatpush1.msra.mxu0 %v41
    %329 = vmatprep.subr.mxu0 0.0
    %330 = vmatpush1.msra.mxu0 %v40
    %331 = vmatprep.subr.mxu0 0.0
    %332 = vmatpush1.msra.mxu0 %v39
    %333 = vmatprep.subr.mxu0 0.0
    %334 = vmatpush1.msra.mxu0 %v38
    %335 = vmatprep.subr.mxu0 0.0
    %336 = vmatpush1.msra.mxu0 %v37
    %337 = vmatprep.subr.mxu0 0.0
    %338 = vmatpush1.msra.mxu0 %v36
    %339 = vmatprep.subr.mxu0 0.0
    %340 = vmatpush1.msra.mxu0 %v35
    %341 = vmatprep.subr.mxu0 0.0
    %342 = vmatpush1.msra.mxu0 %v34
    %343 = vmatprep.subr.mxu0 0.0
    %344 = vmatpush2.msra.mxu0 %v65
    %345 = vmatprep.subr.mxu0 0.0
    %346 = vmatpush2.msra.mxu0 %v64
    %347 = vmatprep.subr.mxu0 0.0
    %348 = vmatpush2.msra.mxu0 %v63
    %349 = vmatprep.subr.mxu0 0.0
    %350 = vmatpush2.msra.mxu0 %v62
    %351 = vmatprep.subr.mxu0 0.0
    %352 = vmatpush2.msra.mxu0 %v61
    %353 = vmatprep.subr.mxu0 0.0
    %354 = vmatpush2.msra.mxu0 %v60
    %355 = vmatprep.subr.mxu0 0.0
    %356 = vmatpush2.msra.mxu0 %v59
    %357 = vmatprep.subr.mxu0 0.0
    %358 = vmatpush2.msra.mxu0 %v58
    %359 = vmatprep.subr.mxu0 0.0
    %360 = vmatpush2.msra.mxu0 %v57
    %361 = vmatprep.subr.mxu0 0.0
    %362 = vmatpush2.msra.mxu0 %v56
    %363 = vmatprep.subr.mxu0 0.0
    %364 = vmatpush2.msra.mxu0 %v55
    %365 = vmatprep.subr.mxu0 0.0
    %366 = vmatpush2.msra.mxu0 %v54
    %367 = vmatprep.subr.mxu0 0.0
    %368 = vmatpush2.msra.mxu0 %v53
    %369 = vmatprep.subr.mxu0 0.0
    %370 = vmatpush2.msra.mxu0 %v52
    %371 = vmatprep.subr.mxu0 0.0
    %372 = vmatpush2.msra.mxu0 %v51
    %373 = vmatprep.subr.mxu0 0.0
    %374 = vmatpush2.msra.mxu0 %v50
    %375 = vmatprep.mubr.f32.mxu0 %v304
    %376 = vmatmul.mubr.f32.gmra.mxu0 %v303
    %v377 = vpop.f32.mrf.mxu0
    %v378 = vadd.f32 0.0, %v377
    %v379 = vpop.f32.mrf.mxu0
    %380 = vmatprep.mubr.f32.mxu0 %v306
    %381 = vmatmul.mubr.f32.gmra.mxu0 %v305
    %v382 = vpop.f32.mrf.mxu0
    %v383 = vadd.f32 0.0, %v382
    %v384 = vpop.f32.mrf.mxu0
    %385 = vmatprep.mubr.f32.mxu0 %v308
    %386 = vmatmul.mubr.f32.gmra.mxu0 %v307
    %v387 = vpop.f32.mrf.mxu0
    %v388 = vadd.f32 0.0, %v387
    %v389 = vpop.f32.mrf.mxu0
    %390 = vmatprep.mubr.f32.mxu0 %v310
    %391 = vmatmul.mubr.f32.gmra.mxu0 %v309
    %v392 = vpop.f32.mrf.mxu0
    %v393 = vadd.f32 0.0, %v392
    %v394 = vpop.f32.mrf.mxu0
    %395 = vdwg.mxu0
    %396 = vmatprep.subr.mxu0 0.0
    %397 = vmatpush1.msra.mxu0 0.0
    %398 = vmatprep.subr.mxu0 0.0
    %399 = vmatpush1.msra.mxu0 0.0
    %400 = vmatprep.subr.mxu0 0.0
    %401 = vmatpush1.msra.mxu0 0.0
    %402 = vmatprep.subr.mxu0 0.0
    %403 = vmatpush1.msra.mxu0 0.0
    %404 = vmatprep.subr.mxu0 0.0
    %405 = vmatpush1.msra.mxu0 0.0
    %406 = vmatprep.subr.mxu0 0.0
    %407 = vmatpush1.msra.mxu0 0.0
    %408 = vmatprep.subr.mxu0 0.0
    %409 = vmatpush1.msra.mxu0 0.0
    %410 = vmatprep.subr.mxu0 0.0
    %411 = vmatpush1.msra.mxu0 0.0
    %412 = vmatprep.subr.mxu0 0.0
    %413 = vmatpush1.msra.mxu0 0.0
    %414 = vmatprep.subr.mxu0 0.0
    %415 = vmatpush1.msra.mxu0 0.0
    %416 = vmatprep.subr.mxu0 0.0
    %417 = vmatpush1.msra.mxu0 0.0
    %418 = vmatprep.subr.mxu0 0.0
    %419 = vmatpush1.msra.mxu0 0.0
    %420 = vmatprep.subr.mxu0 0.0
    %421 = vmatpush1.msra.mxu0 %v393
    %422 = vmatprep.subr.mxu0 0.0
    %423 = vmatpush1.msra.mxu0 %v388
    %424 = vmatprep.subr.mxu0 0.0
    %425 = vmatpush1.msra.mxu0 %v383
    %426 = vmatprep.subr.mxu0 0.0
    %427 = vmatpush1.msra.mxu0 %v378
    %428 = vmatprep.subr.mxu0 0.0
    %429 = vmatpush2.msra.mxu0 0.0
    %430 = vmatprep.subr.mxu0 0.0
    %431 = vmatpush2.msra.mxu0 0.0
    %432 = vmatprep.subr.mxu0 0.0
    %433 = vmatpush2.msra.mxu0 0.0
    %434 = vmatprep.subr.mxu0 0.0
    %435 = vmatpush2.msra.mxu0 0.0
    %436 = vmatprep.subr.mxu0 0.0
    %437 = vmatpush2.msra.mxu0 0.0
    %438 = vmatprep.subr.mxu0 0.0
    %439 = vmatpush2.msra.mxu0 0.0
    %440 = vmatprep.subr.mxu0 0.0
    %441 = vmatpush2.msra.mxu0 0.0
    %442 = vmatprep.subr.mxu0 0.0
    %443 = vmatpush2.msra.mxu0 0.0
    %444 = vmatprep.subr.mxu0 0.0
    %445 = vmatpush2.msra.mxu0 0.0
    %446 = vmatprep.subr.mxu0 0.0
    %447 = vmatpush2.msra.mxu0 0.0
    %448 = vmatprep.subr.mxu0 0.0
    %449 = vmatpush2.msra.mxu0 0.0
    %450 = vmatprep.subr.mxu0 0.0
    %451 = vmatpush2.msra.mxu0 0.0
    %452 = vmatprep.subr.mxu0 0.0
    %453 = vmatpush2.msra.mxu0 0.0
    %454 = vmatprep.subr.mxu0 0.0
    %455 = vmatpush2.msra.mxu0 0.0
    %456 = vmatprep.subr.mxu0 0.0
    %457 = vmatpush2.msra.mxu0 0.0
    %458 = vmatprep.subr.mxu0 0.0
    %459 = vmatpush2.msra.mxu0 0.0
    %460 = vmatprep.mubr.f32.mxu0 0.0
    %461 = vmatmul.mubr.f32.gmra.mxu0 %v197
    %v462 = vpop.f32.mrf.mxu0
    %v463 = vadd.f32 0.0, %v462
    %v464 = vpop.f32.mrf.mxu0
    %465 = vdwg.mxu0
    %467 = vrot.lane.b32.xlu0 %v463, 127
    %v468 = vpop.permute.xlu0 %467
    %v470 = vmin.f32 %v269, %v468
    %471 = vrot.lane.b32.xlu0 %v26, 2
    %v472 = vpop.permute.xlu0 %471
    %473 = vrot.lane.b32.xlu0 %v28, 2
    %v474 = vpop.permute.xlu0 %473
    %475 = vrot.lane.b32.xlu0 %v30, 2
    %v476 = vpop.permute.xlu0 %475
    %477 = vrot.lane.b32.xlu0 %v32, 2
    %v478 = vpop.permute.xlu0 %477
    %479 = vrot.lane.b32.xlu0 %v27, 2
    %v480 = vpop.permute.xlu0 %479
    %481 = vrot.lane.b32.xlu0 %v29, 2
    %v482 = vpop.permute.xlu0 %481
    %483 = vrot.lane.b32.xlu0 %v31, 2
    %v484 = vpop.permute.xlu0 %483
    %485 = vrot.lane.b32.xlu0 %v33, 2
    %v486 = vpop.permute.xlu0 %485
    %vm487 = vcmp.lt.s32.totalorder %v84, 2
    %v488 = vsel %vm487, %v472, %v480
    %v489 = vsel %vm487, %v474, %v482
    %v490 = vsel %vm487, %v476, %v484
    %v491 = vsel %vm487, %v478, %v486
    %v492 = vsel %vm487, %v480, %v472
    %v493 = vsel %vm487, %v482, %v474
    %v494 = vsel %vm487, %v484, %v476
    %v495 = vsel %vm487, %v486, %v478
    %v496 = vsub.f32 %v18, %v492
    %v497 = vsub.f32 %v19, %v488
    %v498 = vsub.f32 %v20, %v493
    %v499 = vsub.f32 %v21, %v489
    %v500 = vsub.f32 %v22, %v494
    %v501 = vsub.f32 %v23, %v490
    %v502 = vsub.f32 %v24, %v495
    %v503 = vsub.f32 %v25, %v491
    %v504 = vmul.f32 %v496, %v496
    %v505 = vmul.f32 %v497, %v497
    %v506 = vmul.f32 %v498, %v498
    %v507 = vmul.f32 %v499, %v499
    %v508 = vmul.f32 %v500, %v500
    %v509 = vmul.f32 %v501, %v501
    %v510 = vmul.f32 %v502, %v502
    %v511 = vmul.f32 %v503, %v503
    %512 = vmatprep.subr.mxu0 0.0
    %513 = vmatpush1.msra.mxu0 %v49
    %514 = vmatprep.subr.mxu0 0.0
    %515 = vmatpush1.msra.mxu0 %v48
    %516 = vmatprep.subr.mxu0 0.0
    %517 = vmatpush1.msra.mxu0 %v47
    %518 = vmatprep.subr.mxu0 0.0
    %519 = vmatpush1.msra.mxu0 %v46
    %520 = vmatprep.subr.mxu0 0.0
    %521 = vmatpush1.msra.mxu0 %v45
    %522 = vmatprep.subr.mxu0 0.0
    %523 = vmatpush1.msra.mxu0 %v44
    %524 = vmatprep.subr.mxu0 0.0
    %525 = vmatpush1.msra.mxu0 %v43
    %526 = vmatprep.subr.mxu0 0.0
    %527 = vmatpush1.msra.mxu0 %v42
    %528 = vmatprep.subr.mxu0 0.0
    %529 = vmatpush1.msra.mxu0 %v41
    %530 = vmatprep.subr.mxu0 0.0
    %531 = vmatpush1.msra.mxu0 %v40
    %532 = vmatprep.subr.mxu0 0.0
    %533 = vmatpush1.msra.mxu0 %v39
    %534 = vmatprep.subr.mxu0 0.0
    %535 = vmatpush1.msra.mxu0 %v38
    %536 = vmatprep.subr.mxu0 0.0
    %537 = vmatpush1.msra.mxu0 %v37
    %538 = vmatprep.subr.mxu0 0.0
    %539 = vmatpush1.msra.mxu0 %v36
    %540 = vmatprep.subr.mxu0 0.0
    %541 = vmatpush1.msra.mxu0 %v35
    %542 = vmatprep.subr.mxu0 0.0
    %543 = vmatpush1.msra.mxu0 %v34
    %544 = vmatprep.subr.mxu0 0.0
    %545 = vmatpush2.msra.mxu0 %v65
    %546 = vmatprep.subr.mxu0 0.0
    %547 = vmatpush2.msra.mxu0 %v64
    %548 = vmatprep.subr.mxu0 0.0
    %549 = vmatpush2.msra.mxu0 %v63
    %550 = vmatprep.subr.mxu0 0.0
    %551 = vmatpush2.msra.mxu0 %v62
    %552 = vmatprep.subr.mxu0 0.0
    %553 = vmatpush2.msra.mxu0 %v61
    %554 = vmatprep.subr.mxu0 0.0
    %555 = vmatpush2.msra.mxu0 %v60
    %556 = vmatprep.subr.mxu0 0.0
    %557 = vmatpush2.msra.mxu0 %v59
    %558 = vmatprep.subr.mxu0 0.0
    %559 = vmatpush2.msra.mxu0 %v58
    %560 = vmatprep.subr.mxu0 0.0
    %561 = vmatpush2.msra.mxu0 %v57
    %562 = vmatprep.subr.mxu0 0.0
    %563 = vmatpush2.msra.mxu0 %v56
    %564 = vmatprep.subr.mxu0 0.0
    %565 = vmatpush2.msra.mxu0 %v55
    %566 = vmatprep.subr.mxu0 0.0
    %567 = vmatpush2.msra.mxu0 %v54
    %568 = vmatprep.subr.mxu0 0.0
    %569 = vmatpush2.msra.mxu0 %v53
    %570 = vmatprep.subr.mxu0 0.0
    %571 = vmatpush2.msra.mxu0 %v52
    %572 = vmatprep.subr.mxu0 0.0
    %573 = vmatpush2.msra.mxu0 %v51
    %574 = vmatprep.subr.mxu0 0.0
    %575 = vmatpush2.msra.mxu0 %v50
    %576 = vmatprep.mubr.f32.mxu0 %v505
    %577 = vmatmul.mubr.f32.gmra.mxu0 %v504
    %v578 = vpop.f32.mrf.mxu0
    %v579 = vadd.f32 0.0, %v578
    %v580 = vpop.f32.mrf.mxu0
    %581 = vmatprep.mubr.f32.mxu0 %v507
    %582 = vmatmul.mubr.f32.gmra.mxu0 %v506
    %v583 = vpop.f32.mrf.mxu0
    %v584 = vadd.f32 0.0, %v583
    %v585 = vpop.f32.mrf.mxu0
    %586 = vmatprep.mubr.f32.mxu0 %v509
    %587 = vmatmul.mubr.f32.gmra.mxu0 %v508
    %v588 = vpop.f32.mrf.mxu0
    %v589 = vadd.f32 0.0, %v588
    %v590 = vpop.f32.mrf.mxu0
    %591 = vmatprep.mubr.f32.mxu0 %v511
    %592 = vmatmul.mubr.f32.gmra.mxu0 %v510
    %v593 = vpop.f32.mrf.mxu0
    %v594 = vadd.f32 0.0, %v593
    %v595 = vpop.f32.mrf.mxu0
    %596 = vdwg.mxu0
    %597 = vmatprep.subr.mxu0 0.0
    %598 = vmatpush1.msra.mxu0 0.0
    %599 = vmatprep.subr.mxu0 0.0
    %600 = vmatpush1.msra.mxu0 0.0
    %601 = vmatprep.subr.mxu0 0.0
    %602 = vmatpush1.msra.mxu0 0.0
    %603 = vmatprep.subr.mxu0 0.0
    %604 = vmatpush1.msra.mxu0 0.0
    %605 = vmatprep.subr.mxu0 0.0
    %606 = vmatpush1.msra.mxu0 0.0
    %607 = vmatprep.subr.mxu0 0.0
    %608 = vmatpush1.msra.mxu0 0.0
    %609 = vmatprep.subr.mxu0 0.0
    %610 = vmatpush1.msra.mxu0 0.0
    %611 = vmatprep.subr.mxu0 0.0
    %612 = vmatpush1.msra.mxu0 0.0
    %613 = vmatprep.subr.mxu0 0.0
    %614 = vmatpush1.msra.mxu0 0.0
    %615 = vmatprep.subr.mxu0 0.0
    %616 = vmatpush1.msra.mxu0 0.0
    %617 = vmatprep.subr.mxu0 0.0
    %618 = vmatpush1.msra.mxu0 0.0
    %619 = vmatprep.subr.mxu0 0.0
    %620 = vmatpush1.msra.mxu0 0.0
    %621 = vmatprep.subr.mxu0 0.0
    %622 = vmatpush1.msra.mxu0 %v594
    %623 = vmatprep.subr.mxu0 0.0
    %624 = vmatpush1.msra.mxu0 %v589
    %625 = vmatprep.subr.mxu0 0.0
    %626 = vmatpush1.msra.mxu0 %v584
    %627 = vmatprep.subr.mxu0 0.0
    %628 = vmatpush1.msra.mxu0 %v579
    %629 = vmatprep.subr.mxu0 0.0
    %630 = vmatpush2.msra.mxu0 0.0
    %631 = vmatprep.subr.mxu0 0.0
    %632 = vmatpush2.msra.mxu0 0.0
    %633 = vmatprep.subr.mxu0 0.0
    %634 = vmatpush2.msra.mxu0 0.0
    %635 = vmatprep.subr.mxu0 0.0
    %636 = vmatpush2.msra.mxu0 0.0
    %637 = vmatprep.subr.mxu0 0.0
    %638 = vmatpush2.msra.mxu0 0.0
    %639 = vmatprep.subr.mxu0 0.0
    %640 = vmatpush2.msra.mxu0 0.0
    %641 = vmatprep.subr.mxu0 0.0
    %642 = vmatpush2.msra.mxu0 0.0
    %643 = vmatprep.subr.mxu0 0.0
    %644 = vmatpush2.msra.mxu0 0.0
    %645 = vmatprep.subr.mxu0 0.0
    %646 = vmatpush2.msra.mxu0 0.0
    %647 = vmatprep.subr.mxu0 0.0
    %648 = vmatpush2.msra.mxu0 0.0
    %649 = vmatprep.subr.mxu0 0.0
    %650 = vmatpush2.msra.mxu0 0.0
    %651 = vmatprep.subr.mxu0 0.0
    %652 = vmatpush2.msra.mxu0 0.0
    %653 = vmatprep.subr.mxu0 0.0
    %654 = vmatpush2.msra.mxu0 0.0
    %655 = vmatprep.subr.mxu0 0.0
    %656 = vmatpush2.msra.mxu0 0.0
    %657 = vmatprep.subr.mxu0 0.0
    %658 = vmatpush2.msra.mxu0 0.0
    %659 = vmatprep.subr.mxu0 0.0
    %660 = vmatpush2.msra.mxu0 0.0
    %661 = vmatprep.mubr.f32.mxu0 0.0
    %662 = vmatmul.mubr.f32.gmra.mxu0 %v197
    %v663 = vpop.f32.mrf.mxu0
    %v664 = vadd.f32 0.0, %v663
    %v665 = vpop.f32.mrf.mxu0
    %666 = vdwg.mxu0
    %668 = vrot.lane.b32.xlu0 %v664, 126
    %v669 = vpop.permute.xlu0 %668
    %v671 = vmin.f32 %v470, %v669
    %672 = vrot.lane.b32.xlu0 %v26, 114
    %v673 = vpop.permute.xlu0 %672
    %674 = vrot.lane.b32.xlu0 %v28, 114
    %v675 = vpop.permute.xlu0 %674
    %676 = vrot.lane.b32.xlu0 %v30, 114
    %v677 = vpop.permute.xlu0 %676
    %678 = vrot.lane.b32.xlu0 %v32, 114
    %v679 = vpop.permute.xlu0 %678
    %680 = vrot.lane.b32.xlu0 %v27, 114
    %v681 = vpop.permute.xlu0 %680
    %682 = vrot.lane.b32.xlu0 %v29, 114
    %v683 = vpop.permute.xlu0 %682
    %684 = vrot.lane.b32.xlu0 %v31, 114
    %v685 = vpop.permute.xlu0 %684
    %686 = vrot.lane.b32.xlu0 %v33, 114
    %v687 = vpop.permute.xlu0 %686
    %vm688 = vcmp.lt.s32.totalorder %v84, 114
    %v689 = vsel %vm688, %v673, %v681
    %v690 = vsel %vm688, %v675, %v683
    %v691 = vsel %vm688, %v677, %v685
    %v692 = vsel %vm688, %v679, %v687
    %v693 = vsel %vm688, %v681, %v673
    %v694 = vsel %vm688, %v683, %v675
    %v695 = vsel %vm688, %v685, %v677
    %v696 = vsel %vm688, %v687, %v679
    %v697 = vsub.f32 %v18, %v689
    %v698 = vsub.f32 %v19, %v693
    %v699 = vsub.f32 %v20, %v690
    %v700 = vsub.f32 %v21, %v694
    %v701 = vsub.f32 %v22, %v691
    %v702 = vsub.f32 %v23, %v695
    %v703 = vsub.f32 %v24, %v692
    %v704 = vsub.f32 %v25, %v696
    %v705 = vmul.f32 %v697, %v697
    %v706 = vmul.f32 %v698, %v698
    %v707 = vmul.f32 %v699, %v699
    %v708 = vmul.f32 %v700, %v700
    %v709 = vmul.f32 %v701, %v701
    %v710 = vmul.f32 %v702, %v702
    %v711 = vmul.f32 %v703, %v703
    %v712 = vmul.f32 %v704, %v704
    %713 = vmatprep.subr.mxu0 0.0
    %714 = vmatpush1.msra.mxu0 %v49
    %715 = vmatprep.subr.mxu0 0.0
    %716 = vmatpush1.msra.mxu0 %v48
    %717 = vmatprep.subr.mxu0 0.0
    %718 = vmatpush1.msra.mxu0 %v47
    %719 = vmatprep.subr.mxu0 0.0
    %720 = vmatpush1.msra.mxu0 %v46
    %721 = vmatprep.subr.mxu0 0.0
    %722 = vmatpush1.msra.mxu0 %v45
    %723 = vmatprep.subr.mxu0 0.0
    %724 = vmatpush1.msra.mxu0 %v44
    %725 = vmatprep.subr.mxu0 0.0
    %726 = vmatpush1.msra.mxu0 %v43
    %727 = vmatprep.subr.mxu0 0.0
    %728 = vmatpush1.msra.mxu0 %v42
    %729 = vmatprep.subr.mxu0 0.0
    %730 = vmatpush1.msra.mxu0 %v41
    %731 = vmatprep.subr.mxu0 0.0
    %732 = vmatpush1.msra.mxu0 %v40
    %733 = vmatprep.subr.mxu0 0.0
    %734 = vmatpush1.msra.mxu0 %v39
    %735 = vmatprep.subr.mxu0 0.0
    %736 = vmatpush1.msra.mxu0 %v38
    %737 = vmatprep.subr.mxu0 0.0
    %738 = vmatpush1.msra.mxu0 %v37
    %739 = vmatprep.subr.mxu0 0.0
    %740 = vmatpush1.msra.mxu0 %v36
    %741 = vmatprep.subr.mxu0 0.0
    %742 = vmatpush1.msra.mxu0 %v35
    %743 = vmatprep.subr.mxu0 0.0
    %744 = vmatpush1.msra.mxu0 %v34
    %745 = vmatprep.subr.mxu0 0.0
    %746 = vmatpush2.msra.mxu0 %v65
    %747 = vmatprep.subr.mxu0 0.0
    %748 = vmatpush2.msra.mxu0 %v64
    %749 = vmatprep.subr.mxu0 0.0
    %750 = vmatpush2.msra.mxu0 %v63
    %751 = vmatprep.subr.mxu0 0.0
    %752 = vmatpush2.msra.mxu0 %v62
    %753 = vmatprep.subr.mxu0 0.0
    %754 = vmatpush2.msra.mxu0 %v61
    %755 = vmatprep.subr.mxu0 0.0
    %756 = vmatpush2.msra.mxu0 %v60
    %757 = vmatprep.subr.mxu0 0.0
    %758 = vmatpush2.msra.mxu0 %v59
    %759 = vmatprep.subr.mxu0 0.0
    %760 = vmatpush2.msra.mxu0 %v58
    %761 = vmatprep.subr.mxu0 0.0
    %762 = vmatpush2.msra.mxu0 %v57
    %763 = vmatprep.subr.mxu0 0.0
    %764 = vmatpush2.msra.mxu0 %v56
    %765 = vmatprep.subr.mxu0 0.0
    %766 = vmatpush2.msra.mxu0 %v55
    %767 = vmatprep.subr.mxu0 0.0
    %768 = vmatpush2.msra.mxu0 %v54
    %769 = vmatprep.subr.mxu0 0.0
    %770 = vmatpush2.msra.mxu0 %v53
    %771 = vmatprep.subr.mxu0 0.0
    %772 = vmatpush2.msra.mxu0 %v52
    %773 = vmatprep.subr.mxu0 0.0
    %774 = vmatpush2.msra.mxu0 %v51
    %775 = vmatprep.subr.mxu0 0.0
    %776 = vmatpush2.msra.mxu0 %v50
    %777 = vmatprep.mubr.f32.mxu0 %v706
    %778 = vmatmul.mubr.f32.gmra.mxu0 %v705
    %v779 = vpop.f32.mrf.mxu0
    %v780 = vadd.f32 0.0, %v779
    %v781 = vpop.f32.mrf.mxu0
    %782 = vmatprep.mubr.f32.mxu0 %v708
    %783 = vmatmul.mubr.f32.gmra.mxu0 %v707
    %v784 = vpop.f32.mrf.mxu0
    %v785 = vadd.f32 0.0, %v784
    %v786 = vpop.f32.mrf.mxu0
    %787 = vmatprep.mubr.f32.mxu0 %v710
    %788 = vmatmul.mubr.f32.gmra.mxu0 %v709
    %v789 = vpop.f32.mrf.mxu0
    %v790 = vadd.f32 0.0, %v789
    %v791 = vpop.f32.mrf.mxu0
    %792 = vmatprep.mubr.f32.mxu0 %v712
    %793 = vmatmul.mubr.f32.gmra.mxu0 %v711
    %v794 = vpop.f32.mrf.mxu0
    %v795 = vadd.f32 0.0, %v794
    %v796 = vpop.f32.mrf.mxu0
    %797 = vdwg.mxu0
    %798 = vmatprep.subr.mxu0 0.0
    %799 = vmatpush1.msra.mxu0 0.0
    %800 = vmatprep.subr.mxu0 0.0
    %801 = vmatpush1.msra.mxu0 0.0
    %802 = vmatprep.subr.mxu0 0.0
    %803 = vmatpush1.msra.mxu0 0.0
    %804 = vmatprep.subr.mxu0 0.0
    %805 = vmatpush1.msra.mxu0 0.0
    %806 = vmatprep.subr.mxu0 0.0
    %807 = vmatpush1.msra.mxu0 0.0
    %808 = vmatprep.subr.mxu0 0.0
    %809 = vmatpush1.msra.mxu0 0.0
    %810 = vmatprep.subr.mxu0 0.0
    %811 = vmatpush1.msra.mxu0 0.0
    %812 = vmatprep.subr.mxu0 0.0
    %813 = vmatpush1.msra.mxu0 0.0
    %814 = vmatprep.subr.mxu0 0.0
    %815 = vmatpush1.msra.mxu0 0.0
    %816 = vmatprep.subr.mxu0 0.0
    %817 = vmatpush1.msra.mxu0 0.0
    %818 = vmatprep.subr.mxu0 0.0
    %819 = vmatpush1.msra.mxu0 0.0
    %820 = vmatprep.subr.mxu0 0.0
    %821 = vmatpush1.msra.mxu0 0.0
    %822 = vmatprep.subr.mxu0 0.0
    %823 = vmatpush1.msra.mxu0 %v795
    %824 = vmatprep.subr.mxu0 0.0
    %825 = vmatpush1.msra.mxu0 %v790
    %826 = vmatprep.subr.mxu0 0.0
    %827 = vmatpush1.msra.mxu0 %v785
    %828 = vmatprep.subr.mxu0 0.0
    %829 = vmatpush1.msra.mxu0 %v780
    %830 = vmatprep.subr.mxu0 0.0
    %831 = vmatpush2.msra.mxu0 0.0
    %832 = vmatprep.subr.mxu0 0.0
    %833 = vmatpush2.msra.mxu0 0.0
    %834 = vmatprep.subr.mxu0 0.0
    %835 = vmatpush2.msra.mxu0 0.0
    %836 = vmatprep.subr.mxu0 0.0
    %837 = vmatpush2.msra.mxu0 0.0
    %838 = vmatprep.subr.mxu0 0.0
    %839 = vmatpush2.msra.mxu0 0.0
    %840 = vmatprep.subr.mxu0 0.0
    %841 = vmatpush2.msra.mxu0 0.0
    %842 = vmatprep.subr.mxu0 0.0
    %843 = vmatpush2.msra.mxu0 0.0
    %844 = vmatprep.subr.mxu0 0.0
    %845 = vmatpush2.msra.mxu0 0.0
    %846 = vmatprep.subr.mxu0 0.0
    %847 = vmatpush2.msra.mxu0 0.0
    %848 = vmatprep.subr.mxu0 0.0
    %849 = vmatpush2.msra.mxu0 0.0
    %850 = vmatprep.subr.mxu0 0.0
    %851 = vmatpush2.msra.mxu0 0.0
    %852 = vmatprep.subr.mxu0 0.0
    %853 = vmatpush2.msra.mxu0 0.0
    %854 = vmatprep.subr.mxu0 0.0
    %855 = vmatpush2.msra.mxu0 0.0
    %856 = vmatprep.subr.mxu0 0.0
    %857 = vmatpush2.msra.mxu0 0.0
    %858 = vmatprep.subr.mxu0 0.0
    %859 = vmatpush2.msra.mxu0 0.0
    %860 = vmatprep.subr.mxu0 0.0
    %861 = vmatpush2.msra.mxu0 0.0
    %862 = vmatprep.mubr.f32.mxu0 0.0
    %863 = vmatmul.mubr.f32.gmra.mxu0 %v197
    %v864 = vpop.f32.mrf.mxu0
    %v865 = vadd.f32 0.0, %v864
    %v866 = vpop.f32.mrf.mxu0
    %867 = vdwg.mxu0
    %869 = vrot.lane.b32.xlu0 %v865, 125
    %v870 = vpop.permute.xlu0 %869
    %v872 = vmin.f32 %v671, %v870
    %873 = vrot.lane.b32.xlu0 %v26, 98
    %v874 = vpop.permute.xlu0 %873
    %875 = vrot.lane.b32.xlu0 %v28, 98
    %v876 = vpop.permute.xlu0 %875
    %877 = vrot.lane.b32.xlu0 %v30, 98
    %v878 = vpop.permute.xlu0 %877
    %879 = vrot.lane.b32.xlu0 %v32, 98
    %v880 = vpop.permute.xlu0 %879
    %881 = vrot.lane.b32.xlu0 %v27, 98
    %v882 = vpop.permute.xlu0 %881
    %883 = vrot.lane.b32.xlu0 %v29, 98
    %v884 = vpop.permute.xlu0 %883
    %885 = vrot.lane.b32.xlu0 %v31, 98
    %v886 = vpop.permute.xlu0 %885
    %887 = vrot.lane.b32.xlu0 %v33, 98
    %v888 = vpop.permute.xlu0 %887
    %vm889 = vcmp.lt.s32.totalorder %v84, 98
    %v890 = vsel %vm889, %v874, %v882
    %v891 = vsel %vm889, %v876, %v884
    %v892 = vsel %vm889, %v878, %v886
    %v893 = vsel %vm889, %v880, %v888
    %v894 = vsel %vm889, %v882, %v874
    %v895 = vsel %vm889, %v884, %v876
    %v896 = vsel %vm889, %v886, %v878
    %v897 = vsel %vm889, %v888, %v880
    %v898 = vsub.f32 %v18, %v890
    %v899 = vsub.f32 %v19, %v894
    %v900 = vsub.f32 %v20, %v891
    %v901 = vsub.f32 %v21, %v895
    %v902 = vsub.f32 %v22, %v892
    %v903 = vsub.f32 %v23, %v896
    %v904 = vsub.f32 %v24, %v893
    %v905 = vsub.f32 %v25, %v897
    %v906 = vmul.f32 %v898, %v898
    %v907 = vmul.f32 %v899, %v899
    %v908 = vmul.f32 %v900, %v900
    %v909 = vmul.f32 %v901, %v901
    %v910 = vmul.f32 %v902, %v902
    %v911 = vmul.f32 %v903, %v903
    %v912 = vmul.f32 %v904, %v904
    %v913 = vmul.f32 %v905, %v905
    %914 = vmatprep.subr.mxu0 0.0
    %915 = vmatpush1.msra.mxu0 %v49
    %916 = vmatprep.subr.mxu0 0.0
    %917 = vmatpush1.msra.mxu0 %v48
    %918 = vmatprep.subr.mxu0 0.0
    %919 = vmatpush1.msra.mxu0 %v47
    %920 = vmatprep.subr.mxu0 0.0
    %921 = vmatpush1.msra.mxu0 %v46
    %922 = vmatprep.subr.mxu0 0.0
    %923 = vmatpush1.msra.mxu0 %v45
    %924 = vmatprep.subr.mxu0 0.0
    %925 = vmatpush1.msra.mxu0 %v44
    %926 = vmatprep.subr.mxu0 0.0
    %927 = vmatpush1.msra.mxu0 %v43
    %928 = vmatprep.subr.mxu0 0.0
    %929 = vmatpush1.msra.mxu0 %v42
    %930 = vmatprep.subr.mxu0 0.0
    %931 = vmatpush1.msra.mxu0 %v41
    %932 = vmatprep.subr.mxu0 0.0
    %933 = vmatpush1.msra.mxu0 %v40
    %934 = vmatprep.subr.mxu0 0.0
    %935 = vmatpush1.msra.mxu0 %v39
    %936 = vmatprep.subr.mxu0 0.0
    %937 = vmatpush1.msra.mxu0 %v38
    %938 = vmatprep.subr.mxu0 0.0
    %939 = vmatpush1.msra.mxu0 %v37
    %940 = vmatprep.subr.mxu0 0.0
    %941 = vmatpush1.msra.mxu0 %v36
    %942 = vmatprep.subr.mxu0 0.0
    %943 = vmatpush1.msra.mxu0 %v35
    %944 = vmatprep.subr.mxu0 0.0
    %945 = vmatpush1.msra.mxu0 %v34
    %946 = vmatprep.subr.mxu0 0.0
    %947 = vmatpush2.msra.mxu0 %v65
    %948 = vmatprep.subr.mxu0 0.0
    %949 = vmatpush2.msra.mxu0 %v64
    %950 = vmatprep.subr.mxu0 0.0
    %951 = vmatpush2.msra.mxu0 %v63
    %952 = vmatprep.subr.mxu0 0.0
    %953 = vmatpush2.msra.mxu0 %v62
    %954 = vmatprep.subr.mxu0 0.0
    %955 = vmatpush2.msra.mxu0 %v61
    %956 = vmatprep.subr.mxu0 0.0
    %957 = vmatpush2.msra.mxu0 %v60
    %958 = vmatprep.subr.mxu0 0.0
    %959 = vmatpush2.msra.mxu0 %v59
    %960 = vmatprep.subr.mxu0 0.0
    %961 = vmatpush2.msra.mxu0 %v58
    %962 = vmatprep.subr.mxu0 0.0
    %963 = vmatpush2.msra.mxu0 %v57
    %964 = vmatprep.subr.mxu0 0.0
    %965 = vmatpush2.msra.mxu0 %v56
    %966 = vmatprep.subr.mxu0 0.0
    %967 = vmatpush2.msra.mxu0 %v55
    %968 = vmatprep.subr.mxu0 0.0
    %969 = vmatpush2.msra.mxu0 %v54
    %970 = vmatprep.subr.mxu0 0.0
    %971 = vmatpush2.msra.mxu0 %v53
    %972 = vmatprep.subr.mxu0 0.0
    %973 = vmatpush2.msra.mxu0 %v52
    %974 = vmatprep.subr.mxu0 0.0
    %975 = vmatpush2.msra.mxu0 %v51
    %976 = vmatprep.subr.mxu0 0.0
    %977 = vmatpush2.msra.mxu0 %v50
    %978 = vmatprep.mubr.f32.mxu0 %v907
    %979 = vmatmul.mubr.f32.gmra.mxu0 %v906
    %v980 = vpop.f32.mrf.mxu0
    %v981 = vadd.f32 0.0, %v980
    %v982 = vpop.f32.mrf.mxu0
    %983 = vmatprep.mubr.f32.mxu0 %v909
    %984 = vmatmul.mubr.f32.gmra.mxu0 %v908
    %v985 = vpop.f32.mrf.mxu0
    %v986 = vadd.f32 0.0, %v985
    %v987 = vpop.f32.mrf.mxu0
    %988 = vmatprep.mubr.f32.mxu0 %v911
    %989 = vmatmul.mubr.f32.gmra.mxu0 %v910
    %v990 = vpop.f32.mrf.mxu0
    %v991 = vadd.f32 0.0, %v990
    %v992 = vpop.f32.mrf.mxu0
    %993 = vmatprep.mubr.f32.mxu0 %v913
    %994 = vmatmul.mubr.f32.gmra.mxu0 %v912
    %v995 = vpop.f32.mrf.mxu0
    %v996 = vadd.f32 0.0, %v995
    %v997 = vpop.f32.mrf.mxu0
    %998 = vdwg.mxu0
    %999 = vmatprep.subr.mxu0 0.0
    %1000 = vmatpush1.msra.mxu0 0.0
    %1001 = vmatprep.subr.mxu0 0.0
    %1002 = vmatpush1.msra.mxu0 0.0
    %1003 = vmatprep.subr.mxu0 0.0
    %1004 = vmatpush1.msra.mxu0 0.0
    %1005 = vmatprep.subr.mxu0 0.0
    %1006 = vmatpush1.msra.mxu0 0.0
    %1007 = vmatprep.subr.mxu0 0.0
    %1008 = vmatpush1.msra.mxu0 0.0
    %1009 = vmatprep.subr.mxu0 0.0
    %1010 = vmatpush1.msra.mxu0 0.0
    %1011 = vmatprep.subr.mxu0 0.0
    %1012 = vmatpush1.msra.mxu0 0.0
    %1013 = vmatprep.subr.mxu0 0.0
    %1014 = vmatpush1.msra.mxu0 0.0
    %1015 = vmatprep.subr.mxu0 0.0
    %1016 = vmatpush1.msra.mxu0 0.0
    %1017 = vmatprep.subr.mxu0 0.0
    %1018 = vmatpush1.msra.mxu0 0.0
    %1019 = vmatprep.subr.mxu0 0.0
    %1020 = vmatpush1.msra.mxu0 0.0
    %1021 = vmatprep.subr.mxu0 0.0
    %1022 = vmatpush1.msra.mxu0 0.0
    %1023 = vmatprep.subr.mxu0 0.0
    %1024 = vmatpush1.msra.mxu0 %v996
    %1025 = vmatprep.subr.mxu0 0.0
    %1026 = vmatpush1.msra.mxu0 %v991
    %1027 = vmatprep.subr.mxu0 0.0
    %1028 = vmatpush1.msra.mxu0 %v986
    %1029 = vmatprep.subr.mxu0 0.0
    %1030 = vmatpush1.msra.mxu0 %v981
    %1031 = vmatprep.subr.mxu0 0.0
    %1032 = vmatpush2.msra.mxu0 0.0
    %1033 = vmatprep.subr.mxu0 0.0
    %1034 = vmatpush2.msra.mxu0 0.0
    %1035 = vmatprep.subr.mxu0 0.0
    %1036 = vmatpush2.msra.mxu0 0.0
    %1037 = vmatprep.subr.mxu0 0.0
    %1038 = vmatpush2.msra.mxu0 0.0
    %1039 = vmatprep.subr.mxu0 0.0
    %1040 = vmatpush2.msra.mxu0 0.0
    %1041 = vmatprep.subr.mxu0 0.0
    %1042 = vmatpush2.msra.mxu0 0.0
    %1043 = vmatprep.subr.mxu0 0.0
    %1044 = vmatpush2.msra.mxu0 0.0
    %1045 = vmatprep.subr.mxu0 0.0
    %1046 = vmatpush2.msra.mxu0 0.0
    %1047 = vmatprep.subr.mxu0 0.0
    %1048 = vmatpush2.msra.mxu0 0.0
    %1049 = vmatprep.subr.mxu0 0.0
    %1050 = vmatpush2.msra.mxu0 0.0
    %1051 = vmatprep.subr.mxu0 0.0
    %1052 = vmatpush2.msra.mxu0 0.0
    %1053 = vmatprep.subr.mxu0 0.0
    %1054 = vmatpush2.msra.mxu0 0.0
    %1055 = vmatprep.subr.mxu0 0.0
    %1056 = vmatpush2.msra.mxu0 0.0
    %1057 = vmatprep.subr.mxu0 0.0
    %1058 = vmatpush2.msra.mxu0 0.0
    %1059 = vmatprep.subr.mxu0 0.0
    %1060 = vmatpush2.msra.mxu0 0.0
    %1061 = vmatprep.subr.mxu0 0.0
    %1062 = vmatpush2.msra.mxu0 0.0
    %1063 = vmatprep.mubr.f32.mxu0 0.0
    %1064 = vmatmul.mubr.f32.gmra.mxu0 %v197
    %v1065 = vpop.f32.mrf.mxu0
    %v1066 = vadd.f32 0.0, %v1065
    %v1067 = vpop.f32.mrf.mxu0
    %1068 = vdwg.mxu0
    %1070 = vrot.lane.b32.xlu0 %v1066, 124
    %v1071 = vpop.permute.xlu0 %1070
    %v1073 = vmin.f32 %v872, %v1071
    %1074 = vrot.lane.b32.xlu0 %v26, 33
    %v1075 = vpop.permute.xlu0 %1074
    %1076 = vrot.lane.b32.xlu0 %v28, 33
    %v1077 = vpop.permute.xlu0 %1076
    %1078 = vrot.lane.b32.xlu0 %v30, 33
    %v1079 = vpop.permute.xlu0 %1078
    %1080 = vrot.lane.b32.xlu0 %v32, 33
    %v1081 = vpop.permute.xlu0 %1080
    %1082 = vrot.lane.b32.xlu0 %v27, 33
    %v1083 = vpop.permute.xlu0 %1082
    %1084 = vrot.lane.b32.xlu0 %v29, 33
    %v1085 = vpop.permute.xlu0 %1084
    %1086 = vrot.lane.b32.xlu0 %v31, 33
    %v1087 = vpop.permute.xlu0 %1086
    %1088 = vrot.lane.b32.xlu0 %v33, 33
    %v1089 = vpop.permute.xlu0 %1088
    %vm1090 = vcmp.lt.s32.totalorder %v84, 33
    %v1091 = vsel %vm1090, %v1075, %v1083
    %v1092 = vsel %vm1090, %v1077, %v1085
    %v1093 = vsel %vm1090, %v1079, %v1087
    %v1094 = vsel %vm1090, %v1081, %v1089
    %v1095 = vsel %vm1090, %v1083, %v1075
    %v1096 = vsel %vm1090, %v1085, %v1077
    %v1097 = vsel %vm1090, %v1087, %v1079
    %v1098 = vsel %vm1090, %v1089, %v1081
    %v1099 = vsub.f32 %v18, %v1095
    %v1100 = vsub.f32 %v19, %v1091
    %v1101 = vsub.f32 %v20, %v1096
    %v1102 = vsub.f32 %v21, %v1092
    %v1103 = vsub.f32 %v22, %v1097
    %v1104 = vsub.f32 %v23, %v1093
    %v1105 = vsub.f32 %v24, %v1098
    %v1106 = vsub.f32 %v25, %v1094
    %v1107 = vmul.f32 %v1099, %v1099
    %v1108 = vmul.f32 %v1100, %v1100
    %v1109 = vmul.f32 %v1101, %v1101
    %v1110 = vmul.f32 %v1102, %v1102
    %v1111 = vmul.f32 %v1103, %v1103
    %v1112 = vmul.f32 %v1104, %v1104
    %v1113 = vmul.f32 %v1105, %v1105
    %v1114 = vmul.f32 %v1106, %v1106
    %1115 = vmatprep.subr.mxu0 0.0
    %1116 = vmatpush1.msra.mxu0 %v49
    %1117 = vmatprep.subr.mxu0 0.0
    %1118 = vmatpush1.msra.mxu0 %v48
    %1119 = vmatprep.subr.mxu0 0.0
    %1120 = vmatpush1.msra.mxu0 %v47
    %1121 = vmatprep.subr.mxu0 0.0
    %1122 = vmatpush1.msra.mxu0 %v46
    %1123 = vmatprep.subr.mxu0 0.0
    %1124 = vmatpush1.msra.mxu0 %v45
    %1125 = vmatprep.subr.mxu0 0.0
    %1126 = vmatpush1.msra.mxu0 %v44
    %1127 = vmatprep.subr.mxu0 0.0
    %1128 = vmatpush1.msra.mxu0 %v43
    %1129 = vmatprep.subr.mxu0 0.0
    %1130 = vmatpush1.msra.mxu0 %v42
    %1131 = vmatprep.subr.mxu0 0.0
    %1132 = vmatpush1.msra.mxu0 %v41
    %1133 = vmatprep.subr.mxu0 0.0
    %1134 = vmatpush1.msra.mxu0 %v40
    %1135 = vmatprep.subr.mxu0 0.0
    %1136 = vmatpush1.msra.mxu0 %v39
    %1137 = vmatprep.subr.mxu0 0.0
    %1138 = vmatpush1.msra.mxu0 %v38
    %1139 = vmatprep.subr.mxu0 0.0
    %1140 = vmatpush1.msra.mxu0 %v37
    %1141 = vmatprep.subr.mxu0 0.0
    %1142 = vmatpush1.msra.mxu0 %v36
    %1143 = vmatprep.subr.mxu0 0.0
    %1144 = vmatpush1.msra.mxu0 %v35
    %1145 = vmatprep.subr.mxu0 0.0
    %1146 = vmatpush1.msra.mxu0 %v34
    %1147 = vmatprep.subr.mxu0 0.0
    %1148 = vmatpush2.msra.mxu0 %v65
    %1149 = vmatprep.subr.mxu0 0.0
    %1150 = vmatpush2.msra.mxu0 %v64
    %1151 = vmatprep.subr.mxu0 0.0
    %1152 = vmatpush2.msra.mxu0 %v63
    %1153 = vmatprep.subr.mxu0 0.0
    %1154 = vmatpush2.msra.mxu0 %v62
    %1155 = vmatprep.subr.mxu0 0.0
    %1156 = vmatpush2.msra.mxu0 %v61
    %1157 = vmatprep.subr.mxu0 0.0
    %1158 = vmatpush2.msra.mxu0 %v60
    %1159 = vmatprep.subr.mxu0 0.0
    %1160 = vmatpush2.msra.mxu0 %v59
    %1161 = vmatprep.subr.mxu0 0.0
    %1162 = vmatpush2.msra.mxu0 %v58
    %1163 = vmatprep.subr.mxu0 0.0
    %1164 = vmatpush2.msra.mxu0 %v57
    %1165 = vmatprep.subr.mxu0 0.0
    %1166 = vmatpush2.msra.mxu0 %v56
    %1167 = vmatprep.subr.mxu0 0.0
    %1168 = vmatpush2.msra.mxu0 %v55
    %1169 = vmatprep.subr.mxu0 0.0
    %1170 = vmatpush2.msra.mxu0 %v54
    %1171 = vmatprep.subr.mxu0 0.0
    %1172 = vmatpush2.msra.mxu0 %v53
    %1173 = vmatprep.subr.mxu0 0.0
    %1174 = vmatpush2.msra.mxu0 %v52
    %1175 = vmatprep.subr.mxu0 0.0
    %1176 = vmatpush2.msra.mxu0 %v51
    %1177 = vmatprep.subr.mxu0 0.0
    %1178 = vmatpush2.msra.mxu0 %v50
    %1179 = vmatprep.mubr.f32.mxu0 %v1108
    %1180 = vmatmul.mubr.f32.gmra.mxu0 %v1107
    %v1181 = vpop.f32.mrf.mxu0
    %v1182 = vadd.f32 0.0, %v1181
    %v1183 = vpop.f32.mrf.mxu0
    %1184 = vmatprep.mubr.f32.mxu0 %v1110
    %1185 = vmatmul.mubr.f32.gmra.mxu0 %v1109
    %v1186 = vpop.f32.mrf.mxu0
    %v1187 = vadd.f32 0.0, %v1186
    %v1188 = vpop.f32.mrf.mxu0
    %1189 = vmatprep.mubr.f32.mxu0 %v1112
    %1190 = vmatmul.mubr.f32.gmra.mxu0 %v1111
    %v1191 = vpop.f32.mrf.mxu0
    %v1192 = vadd.f32 0.0, %v1191
    %v1193 = vpop.f32.mrf.mxu0
    %1194 = vmatprep.mubr.f32.mxu0 %v1114
    %1195 = vmatmul.mubr.f32.gmra.mxu0 %v1113
    %v1196 = vpop.f32.mrf.mxu0
    %v1197 = vadd.f32 0.0, %v1196
    %v1198 = vpop.f32.mrf.mxu0
    %1199 = vdwg.mxu0
    %1200 = vmatprep.subr.mxu0 0.0
    %1201 = vmatpush1.msra.mxu0 0.0
    %1202 = vmatprep.subr.mxu0 0.0
    %1203 = vmatpush1.msra.mxu0 0.0
    %1204 = vmatprep.subr.mxu0 0.0
    %1205 = vmatpush1.msra.mxu0 0.0
    %1206 = vmatprep.subr.mxu0 0.0
    %1207 = vmatpush1.msra.mxu0 0.0
    %1208 = vmatprep.subr.mxu0 0.0
    %1209 = vmatpush1.msra.mxu0 0.0
    %1210 = vmatprep.subr.mxu0 0.0
    %1211 = vmatpush1.msra.mxu0 0.0
    %1212 = vmatprep.subr.mxu0 0.0
    %1213 = vmatpush1.msra.mxu0 0.0
    %1214 = vmatprep.subr.mxu0 0.0
    %1215 = vmatpush1.msra.mxu0 0.0
    %1216 = vmatprep.subr.mxu0 0.0
    %1217 = vmatpush1.msra.mxu0 0.0
    %1218 = vmatprep.subr.mxu0 0.0
    %1219 = vmatpush1.msra.mxu0 0.0
    %1220 = vmatprep.subr.mxu0 0.0
    %1221 = vmatpush1.msra.mxu0 0.0
    %1222 = vmatprep.subr.mxu0 0.0
    %1223 = vmatpush1.msra.mxu0 0.0
    %1224 = vmatprep.subr.mxu0 0.0
    %1225 = vmatpush1.msra.mxu0 %v1197
    %1226 = vmatprep.subr.mxu0 0.0
    %1227 = vmatpush1.msra.mxu0 %v1192
    %1228 = vmatprep.subr.mxu0 0.0
    %1229 = vmatpush1.msra.mxu0 %v1187
    %1230 = vmatprep.subr.mxu0 0.0
    %1231 = vmatpush1.msra.mxu0 %v1182
    %1232 = vmatprep.subr.mxu0 0.0
    %1233 = vmatpush2.msra.mxu0 0.0
    %1234 = vmatprep.subr.mxu0 0.0
    %1235 = vmatpush2.msra.mxu0 0.0
    %1236 = vmatprep.subr.mxu0 0.0
    %1237 = vmatpush2.msra.mxu0 0.0
    %1238 = vmatprep.subr.mxu0 0.0
    %1239 = vmatpush2.msra.mxu0 0.0
    %1240 = vmatprep.subr.mxu0 0.0
    %1241 = vmatpush2.msra.mxu0 0.0
    %1242 = vmatprep.subr.mxu0 0.0
    %1243 = vmatpush2.msra.mxu0 0.0
    %1244 = vmatprep.subr.mxu0 0.0
    %1245 = vmatpush2.msra.mxu0 0.0
    %1246 = vmatprep.subr.mxu0 0.0
    %1247 = vmatpush2.msra.mxu0 0.0
    %1248 = vmatprep.subr.mxu0 0.0
    %1249 = vmatpush2.msra.mxu0 0.0
    %1250 = vmatprep.subr.mxu0 0.0
    %1251 = vmatpush2.msra.mxu0 0.0
    %1252 = vmatprep.subr.mxu0 0.0
    %1253 = vmatpush2.msra.mxu0 0.0
    %1254 = vmatprep.subr.mxu0 0.0
    %1255 = vmatpush2.msra.mxu0 0.0
    %1256 = vmatprep.subr.mxu0 0.0
    %1257 = vmatpush2.msra.mxu0 0.0
    %1258 = vmatprep.subr.mxu0 0.0
    %1259 = vmatpush2.msra.mxu0 0.0
    %1260 = vmatprep.subr.mxu0 0.0
    %1261 = vmatpush2.msra.mxu0 0.0
    %1262 = vmatprep.subr.mxu0 0.0
    %1263 = vmatpush2.msra.mxu0 0.0
    %1264 = vmatprep.mubr.f32.mxu0 0.0
    %1265 = vmatmul.mubr.f32.gmra.mxu0 %v197
    %v1266 = vpop.f32.mrf.mxu0
    %v1267 = vadd.f32 0.0, %v1266
    %v1268 = vpop.f32.mrf.mxu0
    %1269 = vdwg.mxu0
    %1271 = vrot.lane.b32.xlu0 %v1267, 123
    %v1272 = vpop.permute.xlu0 %1271
    %v1274 = vmin.f32 %v1073, %v1272
    %1275 = vrot.lane.b32.xlu0 %v26, 17
    %v1276 = vpop.permute.xlu0 %1275
    %1277 = vrot.lane.b32.xlu0 %v28, 17
    %v1278 = vpop.permute.xlu0 %1277
    %1279 = vrot.lane.b32.xlu0 %v30, 17
    %v1280 = vpop.permute.xlu0 %1279
    %1281 = vrot.lane.b32.xlu0 %v32, 17
    %v1282 = vpop.permute.xlu0 %1281
    %1283 = vrot.lane.b32.xlu0 %v27, 17
    %v1284 = vpop.permute.xlu0 %1283
    %1285 = vrot.lane.b32.xlu0 %v29, 17
    %v1286 = vpop.permute.xlu0 %1285
    %1287 = vrot.lane.b32.xlu0 %v31, 17
    %v1288 = vpop.permute.xlu0 %1287
    %1289 = vrot.lane.b32.xlu0 %v33, 17
    %v1290 = vpop.permute.xlu0 %1289
    %vm1291 = vcmp.lt.s32.totalorder %v84, 17
    %v1292 = vsel %vm1291, %v1276, %v1284
    %v1293 = vsel %vm1291, %v1278, %v1286
    %v1294 = vsel %vm1291, %v1280, %v1288
    %v1295 = vsel %vm1291, %v1282, %v1290
    %v1296 = vsel %vm1291, %v1284, %v1276
    %v1297 = vsel %vm1291, %v1286, %v1278
    %v1298 = vsel %vm1291, %v1288, %v1280
    %v1299 = vsel %vm1291, %v1290, %v1282
    %v1300 = vsub.f32 %v18, %v1296
    %v1301 = vsub.f32 %v19, %v1292
    %v1302 = vsub.f32 %v20, %v1297
    %v1303 = vsub.f32 %v21, %v1293
    %v1304 = vsub.f32 %v22, %v1298
    %v1305 = vsub.f32 %v23, %v1294
    %v1306 = vsub.f32 %v24, %v1299
    %v1307 = vsub.f32 %v25, %v1295
    %v1308 = vmul.f32 %v1300, %v1300
    %v1309 = vmul.f32 %v1301, %v1301
    %v1310 = vmul.f32 %v1302, %v1302
    %v1311 = vmul.f32 %v1303, %v1303
    %v1312 = vmul.f32 %v1304, %v1304
    %v1313 = vmul.f32 %v1305, %v1305
    %v1314 = vmul.f32 %v1306, %v1306
    %v1315 = vmul.f32 %v1307, %v1307
    %1316 = vmatprep.subr.mxu0 0.0
    %1317 = vmatpush1.msra.mxu0 %v49
    %1318 = vmatprep.subr.mxu0 0.0
    %1319 = vmatpush1.msra.mxu0 %v48
    %1320 = vmatprep.subr.mxu0 0.0
    %1321 = vmatpush1.msra.mxu0 %v47
    %1322 = vmatprep.subr.mxu0 0.0
    %1323 = vmatpush1.msra.mxu0 %v46
    %1324 = vmatprep.subr.mxu0 0.0
    %1325 = vmatpush1.msra.mxu0 %v45
    %1326 = vmatprep.subr.mxu0 0.0
    %1327 = vmatpush1.msra.mxu0 %v44
    %1328 = vmatprep.subr.mxu0 0.0
    %1329 = vmatpush1.msra.mxu0 %v43
    %1330 = vmatprep.subr.mxu0 0.0
    %1331 = vmatpush1.msra.mxu0 %v42
    %1332 = vmatprep.subr.mxu0 0.0
    %1333 = vmatpush1.msra.mxu0 %v41
    %1334 = vmatprep.subr.mxu0 0.0
    %1335 = vmatpush1.msra.mxu0 %v40
    %1336 = vmatprep.subr.mxu0 0.0
    %1337 = vmatpush1.msra.mxu0 %v39
    %1338 = vmatprep.subr.mxu0 0.0
    %1339 = vmatpush1.msra.mxu0 %v38
    %1340 = vmatprep.subr.mxu0 0.0
    %1341 = vmatpush1.msra.mxu0 %v37
    %1342 = vmatprep.subr.mxu0 0.0
    %1343 = vmatpush1.msra.mxu0 %v36
    %1344 = vmatprep.subr.mxu0 0.0
    %1345 = vmatpush1.msra.mxu0 %v35
    %1346 = vmatprep.subr.mxu0 0.0
    %1347 = vmatpush1.msra.mxu0 %v34
    %1348 = vmatprep.subr.mxu0 0.0
    %1349 = vmatpush2.msra.mxu0 %v65
    %1350 = vmatprep.subr.mxu0 0.0
    %1351 = vmatpush2.msra.mxu0 %v64
    %1352 = vmatprep.subr.mxu0 0.0
    %1353 = vmatpush2.msra.mxu0 %v63
    %1354 = vmatprep.subr.mxu0 0.0
    %1355 = vmatpush2.msra.mxu0 %v62
    %1356 = vmatprep.subr.mxu0 0.0
    %1357 = vmatpush2.msra.mxu0 %v61
    %1358 = vmatprep.subr.mxu0 0.0
    %1359 = vmatpush2.msra.mxu0 %v60
    %1360 = vmatprep.subr.mxu0 0.0
    %1361 = vmatpush2.msra.mxu0 %v59
    %1362 = vmatprep.subr.mxu0 0.0
    %1363 = vmatpush2.msra.mxu0 %v58
    %1364 = vmatprep.subr.mxu0 0.0
    %1365 = vmatpush2.msra.mxu0 %v57
    %1366 = vmatprep.subr.mxu0 0.0
    %1367 = vmatpush2.msra.mxu0 %v56
    %1368 = vmatprep.subr.mxu0 0.0
    %1369 = vmatpush2.msra.mxu0 %v55
    %1370 = vmatprep.subr.mxu0 0.0
    %1371 = vmatpush2.msra.mxu0 %v54
    %1372 = vmatprep.subr.mxu0 0.0
    %1373 = vmatpush2.msra.mxu0 %v53
    %1374 = vmatprep.subr.mxu0 0.0
    %1375 = vmatpush2.msra.mxu0 %v52
    %1376 = vmatprep.subr.mxu0 0.0
    %1377 = vmatpush2.msra.mxu0 %v51
    %1378 = vmatprep.subr.mxu0 0.0
    %1379 = vmatpush2.msra.mxu0 %v50
    %1380 = vmatprep.mubr.f32.mxu0 %v1309
    %1381 = vmatmul.mubr.f32.gmra.mxu0 %v1308
    %v1382 = vpop.f32.mrf.mxu0
    %v1383 = vadd.f32 0.0, %v1382
    %v1384 = vpop.f32.mrf.mxu0
    %1385 = vmatprep.mubr.f32.mxu0 %v1311
    %1386 = vmatmul.mubr.f32.gmra.mxu0 %v1310
    %v1387 = vpop.f32.mrf.mxu0
    %v1388 = vadd.f32 0.0, %v1387
    %v1389 = vpop.f32.mrf.mxu0
    %1390 = vmatprep.mubr.f32.mxu0 %v1313
    %1391 = vmatmul.mubr.f32.gmra.mxu0 %v1312
    %v1392 = vpop.f32.mrf.mxu0
    %v1393 = vadd.f32 0.0, %v1392
    %v1394 = vpop.f32.mrf.mxu0
    %1395 = vmatprep.mubr.f32.mxu0 %v1315
    %1396 = vmatmul.mubr.f32.gmra.mxu0 %v1314
    %v1397 = vpop.f32.mrf.mxu0
    %v1398 = vadd.f32 0.0, %v1397
    %v1399 = vpop.f32.mrf.mxu0
    %1400 = vdwg.mxu0
    %1401 = vmatprep.subr.mxu0 0.0
    %1402 = vmatpush1.msra.mxu0 0.0
    %1403 = vmatprep.subr.mxu0 0.0
    %1404 = vmatpush1.msra.mxu0 0.0
    %1405 = vmatprep.subr.mxu0 0.0
    %1406 = vmatpush1.msra.mxu0 0.0
    %1407 = vmatprep.subr.mxu0 0.0
    %1408 = vmatpush1.msra.mxu0 0.0
    %1409 = vmatprep.subr.mxu0 0.0
    %1410 = vmatpush1.msra.mxu0 0.0
    %1411 = vmatprep.subr.mxu0 0.0
    %1412 = vmatpush1.msra.mxu0 0.0
    %1413 = vmatprep.subr.mxu0 0.0
    %1414 = vmatpush1.msra.mxu0 0.0
    %1415 = vmatprep.subr.mxu0 0.0
    %1416 = vmatpush1.msra.mxu0 0.0
    %1417 = vmatprep.subr.mxu0 0.0
    %1418 = vmatpush1.msra.mxu0 0.0
    %1419 = vmatprep.subr.mxu0 0.0
    %1420 = vmatpush1.msra.mxu0 0.0
    %1421 = vmatprep.subr.mxu0 0.0
    %1422 = vmatpush1.msra.mxu0 0.0
    %1423 = vmatprep.subr.mxu0 0.0
    %1424 = vmatpush1.msra.mxu0 0.0
    %1425 = vmatprep.subr.mxu0 0.0
    %1426 = vmatpush1.msra.mxu0 %v1398
    %1427 = vmatprep.subr.mxu0 0.0
    %1428 = vmatpush1.msra.mxu0 %v1393
    %1429 = vmatprep.subr.mxu0 0.0
    %1430 = vmatpush1.msra.mxu0 %v1388
    %1431 = vmatprep.subr.mxu0 0.0
    %1432 = vmatpush1.msra.mxu0 %v1383
    %1433 = vmatprep.subr.mxu0 0.0
    %1434 = vmatpush2.msra.mxu0 0.0
    %1435 = vmatprep.subr.mxu0 0.0
    %1436 = vmatpush2.msra.mxu0 0.0
    %1437 = vmatprep.subr.mxu0 0.0
    %1438 = vmatpush2.msra.mxu0 0.0
    %1439 = vmatprep.subr.mxu0 0.0
    %1440 = vmatpush2.msra.mxu0 0.0
    %1441 = vmatprep.subr.mxu0 0.0
    %1442 = vmatpush2.msra.mxu0 0.0
    %1443 = vmatprep.subr.mxu0 0.0
    %1444 = vmatpush2.msra.mxu0 0.0
    %1445 = vmatprep.subr.mxu0 0.0
    %1446 = vmatpush2.msra.mxu0 0.0
    %1447 = vmatprep.subr.mxu0 0.0
    %1448 = vmatpush2.msra.mxu0 0.0
    %1449 = vmatprep.subr.mxu0 0.0
    %1450 = vmatpush2.msra.mxu0 0.0
    %1451 = vmatprep.subr.mxu0 0.0
    %1452 = vmatpush2.msra.mxu0 0.0
    %1453 = vmatprep.subr.mxu0 0.0
    %1454 = vmatpush2.msra.mxu0 0.0
    %1455 = vmatprep.subr.mxu0 0.0
    %1456 = vmatpush2.msra.mxu0 0.0
    %1457 = vmatprep.subr.mxu0 0.0
    %1458 = vmatpush2.msra.mxu0 0.0
    %1459 = vmatprep.subr.mxu0 0.0
    %1460 = vmatpush2.msra.mxu0 0.0
    %1461 = vmatprep.subr.mxu0 0.0
    %1462 = vmatpush2.msra.mxu0 0.0
    %1463 = vmatprep.subr.mxu0 0.0
    %1464 = vmatpush2.msra.mxu0 0.0
    %1465 = vmatprep.mubr.f32.mxu0 0.0
    %1466 = vmatmul.mubr.f32.gmra.mxu0 %v197
    %v1467 = vpop.f32.mrf.mxu0
    %v1468 = vadd.f32 0.0, %v1467
    %v1469 = vpop.f32.mrf.mxu0
    %1470 = vdwg.mxu0
    %1472 = vrot.lane.b32.xlu0 %v1468, 122
    %v1473 = vpop.permute.xlu0 %1472
    %v1475 = vmin.f32 %v1274, %v1473
    %1476 = vrot.lane.b32.xlu0 %v26, 1
    %v1477 = vpop.permute.xlu0 %1476
    %1478 = vrot.lane.b32.xlu0 %v28, 1
    %v1479 = vpop.permute.xlu0 %1478
    %1480 = vrot.lane.b32.xlu0 %v30, 1
    %v1481 = vpop.permute.xlu0 %1480
    %1482 = vrot.lane.b32.xlu0 %v32, 1
    %v1483 = vpop.permute.xlu0 %1482
    %1484 = vrot.lane.b32.xlu0 %v27, 1
    %v1485 = vpop.permute.xlu0 %1484
    %1486 = vrot.lane.b32.xlu0 %v29, 1
    %v1487 = vpop.permute.xlu0 %1486
    %1488 = vrot.lane.b32.xlu0 %v31, 1
    %v1489 = vpop.permute.xlu0 %1488
    %1490 = vrot.lane.b32.xlu0 %v33, 1
    %v1491 = vpop.permute.xlu0 %1490
    %vm1492 = vcmp.lt.s32.totalorder %v84, 1
    %v1493 = vsel %vm1492, %v1477, %v1485
    %v1494 = vsel %vm1492, %v1479, %v1487
    %v1495 = vsel %vm1492, %v1481, %v1489
    %v1496 = vsel %vm1492, %v1483, %v1491
    %v1497 = vsel %vm1492, %v1485, %v1477
    %v1498 = vsel %vm1492, %v1487, %v1479
    %v1499 = vsel %vm1492, %v1489, %v1481
    %v1500 = vsel %vm1492, %v1491, %v1483
    %v1501 = vsub.f32 %v18, %v1497
    %v1502 = vsub.f32 %v19, %v1493
    %v1503 = vsub.f32 %v20, %v1498
    %v1504 = vsub.f32 %v21, %v1494
    %v1505 = vsub.f32 %v22, %v1499
    %v1506 = vsub.f32 %v23, %v1495
    %v1507 = vsub.f32 %v24, %v1500
    %v1508 = vsub.f32 %v25, %v1496
    %v1509 = vmul.f32 %v1501, %v1501
    %v1510 = vmul.f32 %v1502, %v1502
    %v1511 = vmul.f32 %v1503, %v1503
    %v1512 = vmul.f32 %v1504, %v1504
    %v1513 = vmul.f32 %v1505, %v1505
    %v1514 = vmul.f32 %v1506, %v1506
    %v1515 = vmul.f32 %v1507, %v1507
    %v1516 = vmul.f32 %v1508, %v1508
    %1517 = vmatprep.subr.mxu0 0.0
    %1518 = vmatpush1.msra.mxu0 %v49
    %1519 = vmatprep.subr.mxu0 0.0
    %1520 = vmatpush1.msra.mxu0 %v48
    %1521 = vmatprep.subr.mxu0 0.0
    %1522 = vmatpush1.msra.mxu0 %v47
    %1523 = vmatprep.subr.mxu0 0.0
    %1524 = vmatpush1.msra.mxu0 %v46
    %1525 = vmatprep.subr.mxu0 0.0
    %1526 = vmatpush1.msra.mxu0 %v45
    %1527 = vmatprep.subr.mxu0 0.0
    %1528 = vmatpush1.msra.mxu0 %v44
    %1529 = vmatprep.subr.mxu0 0.0
    %1530 = vmatpush1.msra.mxu0 %v43
    %1531 = vmatprep.subr.mxu0 0.0
    %1532 = vmatpush1.msra.mxu0 %v42
    %1533 = vmatprep.subr.mxu0 0.0
    %1534 = vmatpush1.msra.mxu0 %v41
    %1535 = vmatprep.subr.mxu0 0.0
    %1536 = vmatpush1.msra.mxu0 %v40
    %1537 = vmatprep.subr.mxu0 0.0
    %1538 = vmatpush1.msra.mxu0 %v39
    %1539 = vmatprep.subr.mxu0 0.0
    %1540 = vmatpush1.msra.mxu0 %v38
    %1541 = vmatprep.subr.mxu0 0.0
    %1542 = vmatpush1.msra.mxu0 %v37
    %1543 = vmatprep.subr.mxu0 0.0
    %1544 = vmatpush1.msra.mxu0 %v36
    %1545 = vmatprep.subr.mxu0 0.0
    %1546 = vmatpush1.msra.mxu0 %v35
    %1547 = vmatprep.subr.mxu0 0.0
    %1548 = vmatpush1.msra.mxu0 %v34
    %1549 = vmatprep.subr.mxu0 0.0
    %1550 = vmatpush2.msra.mxu0 %v65
    %1551 = vmatprep.subr.mxu0 0.0
    %1552 = vmatpush2.msra.mxu0 %v64
    %1553 = vmatprep.subr.mxu0 0.0
    %1554 = vmatpush2.msra.mxu0 %v63
    %1555 = vmatprep.subr.mxu0 0.0
    %1556 = vmatpush2.msra.mxu0 %v62
    %1557 = vmatprep.subr.mxu0 0.0
    %1558 = vmatpush2.msra.mxu0 %v61
    %1559 = vmatprep.subr.mxu0 0.0
    %1560 = vmatpush2.msra.mxu0 %v60
    %1561 = vmatprep.subr.mxu0 0.0
    %1562 = vmatpush2.msra.mxu0 %v59
    %1563 = vmatprep.subr.mxu0 0.0
    %1564 = vmatpush2.msra.mxu0 %v58
    %1565 = vmatprep.subr.mxu0 0.0
    %1566 = vmatpush2.msra.mxu0 %v57
    %1567 = vmatprep.subr.mxu0 0.0
    %1568 = vmatpush2.msra.mxu0 %v56
    %1569 = vmatprep.subr.mxu0 0.0
    %1570 = vmatpush2.msra.mxu0 %v55
    %1571 = vmatprep.subr.mxu0 0.0
    %1572 = vmatpush2.msra.mxu0 %v54
    %1573 = vmatprep.subr.mxu0 0.0
    %1574 = vmatpush2.msra.mxu0 %v53
    %1575 = vmatprep.subr.mxu0 0.0
    %1576 = vmatpush2.msra.mxu0 %v52
    %1577 = vmatprep.subr.mxu0 0.0
    %1578 = vmatpush2.msra.mxu0 %v51
    %1579 = vmatprep.subr.mxu0 0.0
    %1580 = vmatpush2.msra.mxu0 %v50
    %1581 = vmatprep.mubr.f32.mxu0 %v1510
    %1582 = vmatmul.mubr.f32.gmra.mxu0 %v1509
    %v1583 = vpop.f32.mrf.mxu0
    %v1584 = vadd.f32 0.0, %v1583
    %v1585 = vpop.f32.mrf.mxu0
    %1586 = vmatprep.mubr.f32.mxu0 %v1512
    %1587 = vmatmul.mubr.f32.gmra.mxu0 %v1511
    %v1588 = vpop.f32.mrf.mxu0
    %v1589 = vadd.f32 0.0, %v1588
    %v1590 = vpop.f32.mrf.mxu0
    %1591 = vmatprep.mubr.f32.mxu0 %v1514
    %1592 = vmatmul.mubr.f32.gmra.mxu0 %v1513
    %v1593 = vpop.f32.mrf.mxu0
    %v1594 = vadd.f32 0.0, %v1593
    %v1595 = vpop.f32.mrf.mxu0
    %1596 = vmatprep.mubr.f32.mxu0 %v1516
    %1597 = vmatmul.mubr.f32.gmra.mxu0 %v1515
    %v1598 = vpop.f32.mrf.mxu0
    %v1599 = vadd.f32 0.0, %v1598
    %v1600 = vpop.f32.mrf.mxu0
    %1601 = vdwg.mxu0
    %1602 = vmatprep.subr.mxu0 0.0
    %1603 = vmatpush1.msra.mxu0 0.0
    %1604 = vmatprep.subr.mxu0 0.0
    %1605 = vmatpush1.msra.mxu0 0.0
    %1606 = vmatprep.subr.mxu0 0.0
    %1607 = vmatpush1.msra.mxu0 0.0
    %1608 = vmatprep.subr.mxu0 0.0
    %1609 = vmatpush1.msra.mxu0 0.0
    %1610 = vmatprep.subr.mxu0 0.0
    %1611 = vmatpush1.msra.mxu0 0.0
    %1612 = vmatprep.subr.mxu0 0.0
    %1613 = vmatpush1.msra.mxu0 0.0
    %1614 = vmatprep.subr.mxu0 0.0
    %1615 = vmatpush1.msra.mxu0 0.0
    %1616 = vmatprep.subr.mxu0 0.0
    %1617 = vmatpush1.msra.mxu0 0.0
    %1618 = vmatprep.subr.mxu0 0.0
    %1619 = vmatpush1.msra.mxu0 0.0
    %1620 = vmatprep.subr.mxu0 0.0
    %1621 = vmatpush1.msra.mxu0 0.0
    %1622 = vmatprep.subr.mxu0 0.0
    %1623 = vmatpush1.msra.mxu0 0.0
    %1624 = vmatprep.subr.mxu0 0.0
    %1625 = vmatpush1.msra.mxu0 0.0
    %1626 = vmatprep.subr.mxu0 0.0
    %1627 = vmatpush1.msra.mxu0 %v1599
    %1628 = vmatprep.subr.mxu0 0.0
    %1629 = vmatpush1.msra.mxu0 %v1594
    %1630 = vmatprep.subr.mxu0 0.0
    %1631 = vmatpush1.msra.mxu0 %v1589
    %1632 = vmatprep.subr.mxu0 0.0
    %1633 = vmatpush1.msra.mxu0 %v1584
    %1634 = vmatprep.subr.mxu0 0.0
    %1635 = vmatpush2.msra.mxu0 0.0
    %1636 = vmatprep.subr.mxu0 0.0
    %1637 = vmatpush2.msra.mxu0 0.0
    %1638 = vmatprep.subr.mxu0 0.0
    %1639 = vmatpush2.msra.mxu0 0.0
    %1640 = vmatprep.subr.mxu0 0.0
    %1641 = vmatpush2.msra.mxu0 0.0
    %1642 = vmatprep.subr.mxu0 0.0
    %1643 = vmatpush2.msra.mxu0 0.0
    %1644 = vmatprep.subr.mxu0 0.0
    %1645 = vmatpush2.msra.mxu0 0.0
    %1646 = vmatprep.subr.mxu0 0.0
    %1647 = vmatpush2.msra.mxu0 0.0
    %1648 = vmatprep.subr.mxu0 0.0
    %1649 = vmatpush2.msra.mxu0 0.0
    %1650 = vmatprep.subr.mxu0 0.0
    %1651 = vmatpush2.msra.mxu0 0.0
    %1652 = vmatprep.subr.mxu0 0.0
    %1653 = vmatpush2.msra.mxu0 0.0
    %1654 = vmatprep.subr.mxu0 0.0
    %1655 = vmatpush2.msra.mxu0 0.0
    %1656 = vmatprep.subr.mxu0 0.0
    %1657 = vmatpush2.msra.mxu0 0.0
    %1658 = vmatprep.subr.mxu0 0.0
    %1659 = vmatpush2.msra.mxu0 0.0
    %1660 = vmatprep.subr.mxu0 0.0
    %1661 = vmatpush2.msra.mxu0 0.0
    %1662 = vmatprep.subr.mxu0 0.0
    %1663 = vmatpush2.msra.mxu0 0.0
    %1664 = vmatprep.subr.mxu0 0.0
    %1665 = vmatpush2.msra.mxu0 0.0
    %1666 = vmatprep.mubr.f32.mxu0 0.0
    %1667 = vmatmul.mubr.f32.gmra.mxu0 %v197
    %v1668 = vpop.f32.mrf.mxu0
    %v1669 = vadd.f32 0.0, %v1668
    %v1670 = vpop.f32.mrf.mxu0
    %1671 = vdwg.mxu0
    %1673 = vrot.lane.b32.xlu0 %v1669, 121
    %v1674 = vpop.permute.xlu0 %1673
    %v1676 = vmin.f32 %v1475, %v1674
    %1677 = vrot.lane.b32.xlu0 %v26, 113
    %v1678 = vpop.permute.xlu0 %1677
    %1679 = vrot.lane.b32.xlu0 %v28, 113
    %v1680 = vpop.permute.xlu0 %1679
    %1681 = vrot.lane.b32.xlu0 %v30, 113
    %v1682 = vpop.permute.xlu0 %1681
    %1683 = vrot.lane.b32.xlu0 %v32, 113
    %v1684 = vpop.permute.xlu0 %1683
    %1685 = vrot.lane.b32.xlu0 %v27, 113
    %v1686 = vpop.permute.xlu0 %1685
    %1687 = vrot.lane.b32.xlu0 %v29, 113
    %v1688 = vpop.permute.xlu0 %1687
    %1689 = vrot.lane.b32.xlu0 %v31, 113
    %v1690 = vpop.permute.xlu0 %1689
    %1691 = vrot.lane.b32.xlu0 %v33, 113
    %v1692 = vpop.permute.xlu0 %1691
    %vm1693 = vcmp.lt.s32.totalorder %v84, 113
    %v1694 = vsel %vm1693, %v1678, %v1686
    %v1695 = vsel %vm1693, %v1680, %v1688
    %v1696 = vsel %vm1693, %v1682, %v1690
    %v1697 = vsel %vm1693, %v1684, %v1692
    %v1698 = vsel %vm1693, %v1686, %v1678
    %v1699 = vsel %vm1693, %v1688, %v1680
    %v1700 = vsel %vm1693, %v1690, %v1682
    %v1701 = vsel %vm1693, %v1692, %v1684
    %v1702 = vsub.f32 %v18, %v1694
    %v1703 = vsub.f32 %v19, %v1698
    %v1704 = vsub.f32 %v20, %v1695
    %v1705 = vsub.f32 %v21, %v1699
    %v1706 = vsub.f32 %v22, %v1696
    %v1707 = vsub.f32 %v23, %v1700
    %v1708 = vsub.f32 %v24, %v1697
    %v1709 = vsub.f32 %v25, %v1701
    %v1710 = vmul.f32 %v1702, %v1702
    %v1711 = vmul.f32 %v1703, %v1703
    %v1712 = vmul.f32 %v1704, %v1704
    %v1713 = vmul.f32 %v1705, %v1705
    %v1714 = vmul.f32 %v1706, %v1706
    %v1715 = vmul.f32 %v1707, %v1707
    %v1716 = vmul.f32 %v1708, %v1708
    %v1717 = vmul.f32 %v1709, %v1709
    %1718 = vmatprep.subr.mxu0 0.0
    %1719 = vmatpush1.msra.mxu0 %v49
    %1720 = vmatprep.subr.mxu0 0.0
    %1721 = vmatpush1.msra.mxu0 %v48
    %1722 = vmatprep.subr.mxu0 0.0
    %1723 = vmatpush1.msra.mxu0 %v47
    %1724 = vmatprep.subr.mxu0 0.0
    %1725 = vmatpush1.msra.mxu0 %v46
    %1726 = vmatprep.subr.mxu0 0.0
    %1727 = vmatpush1.msra.mxu0 %v45
    %1728 = vmatprep.subr.mxu0 0.0
    %1729 = vmatpush1.msra.mxu0 %v44
    %1730 = vmatprep.subr.mxu0 0.0
    %1731 = vmatpush1.msra.mxu0 %v43
    %1732 = vmatprep.subr.mxu0 0.0
    %1733 = vmatpush1.msra.mxu0 %v42
    %1734 = vmatprep.subr.mxu0 0.0
    %1735 = vmatpush1.msra.mxu0 %v41
    %1736 = vmatprep.subr.mxu0 0.0
    %1737 = vmatpush1.msra.mxu0 %v40
    %1738 = vmatprep.subr.mxu0 0.0
    %1739 = vmatpush1.msra.mxu0 %v39
    %1740 = vmatprep.subr.mxu0 0.0
    %1741 = vmatpush1.msra.mxu0 %v38
    %1742 = vmatprep.subr.mxu0 0.0
    %1743 = vmatpush1.msra.mxu0 %v37
    %1744 = vmatprep.subr.mxu0 0.0
    %1745 = vmatpush1.msra.mxu0 %v36
    %1746 = vmatprep.subr.mxu0 0.0
    %1747 = vmatpush1.msra.mxu0 %v35
    %1748 = vmatprep.subr.mxu0 0.0
    %1749 = vmatpush1.msra.mxu0 %v34
    %1750 = vmatprep.subr.mxu0 0.0
    %1751 = vmatpush2.msra.mxu0 %v65
    %1752 = vmatprep.subr.mxu0 0.0
    %1753 = vmatpush2.msra.mxu0 %v64
    %1754 = vmatprep.subr.mxu0 0.0
    %1755 = vmatpush2.msra.mxu0 %v63
    %1756 = vmatprep.subr.mxu0 0.0
    %1757 = vmatpush2.msra.mxu0 %v62
    %1758 = vmatprep.subr.mxu0 0.0
    %1759 = vmatpush2.msra.mxu0 %v61
    %1760 = vmatprep.subr.mxu0 0.0
    %1761 = vmatpush2.msra.mxu0 %v60
    %1762 = vmatprep.subr.mxu0 0.0
    %1763 = vmatpush2.msra.mxu0 %v59
    %1764 = vmatprep.subr.mxu0 0.0
    %1765 = vmatpush2.msra.mxu0 %v58
    %1766 = vmatprep.subr.mxu0 0.0
    %1767 = vmatpush2.msra.mxu0 %v57
    %1768 = vmatprep.subr.mxu0 0.0
    %1769 = vmatpush2.msra.mxu0 %v56
    %1770 = vmatprep.subr.mxu0 0.0
    %1771 = vmatpush2.msra.mxu0 %v55
    %1772 = vmatprep.subr.mxu0 0.0
    %1773 = vmatpush2.msra.mxu0 %v54
    %1774 = vmatprep.subr.mxu0 0.0
    %1775 = vmatpush2.msra.mxu0 %v53
    %1776 = vmatprep.subr.mxu0 0.0
    %1777 = vmatpush2.msra.mxu0 %v52
    %1778 = vmatprep.subr.mxu0 0.0
    %1779 = vmatpush2.msra.mxu0 %v51
    %1780 = vmatprep.subr.mxu0 0.0
    %1781 = vmatpush2.msra.mxu0 %v50
    %1782 = vmatprep.mubr.f32.mxu0 %v1711
    %1783 = vmatmul.mubr.f32.gmra.mxu0 %v1710
    %v1784 = vpop.f32.mrf.mxu0
    %v1785 = vadd.f32 0.0, %v1784
    %v1786 = vpop.f32.mrf.mxu0
    %1787 = vmatprep.mubr.f32.mxu0 %v1713
    %1788 = vmatmul.mubr.f32.gmra.mxu0 %v1712
    %v1789 = vpop.f32.mrf.mxu0
    %v1790 = vadd.f32 0.0, %v1789
    %v1791 = vpop.f32.mrf.mxu0
    %1792 = vmatprep.mubr.f32.mxu0 %v1715
    %1793 = vmatmul.mubr.f32.gmra.mxu0 %v1714
    %v1794 = vpop.f32.mrf.mxu0
    %v1795 = vadd.f32 0.0, %v1794
    %v1796 = vpop.f32.mrf.mxu0
    %1797 = vmatprep.mubr.f32.mxu0 %v1717
    %1798 = vmatmul.mubr.f32.gmra.mxu0 %v1716
    %v1799 = vpop.f32.mrf.mxu0
    %v1800 = vadd.f32 0.0, %v1799
    %v1801 = vpop.f32.mrf.mxu0
    %1802 = vdwg.mxu0
    %1803 = vmatprep.subr.mxu0 0.0
    %1804 = vmatpush1.msra.mxu0 0.0
    %1805 = vmatprep.subr.mxu0 0.0
    %1806 = vmatpush1.msra.mxu0 0.0
    %1807 = vmatprep.subr.mxu0 0.0
    %1808 = vmatpush1.msra.mxu0 0.0
    %1809 = vmatprep.subr.mxu0 0.0
    %1810 = vmatpush1.msra.mxu0 0.0
    %1811 = vmatprep.subr.mxu0 0.0
    %1812 = vmatpush1.msra.mxu0 0.0
    %1813 = vmatprep.subr.mxu0 0.0
    %1814 = vmatpush1.msra.mxu0 0.0
    %1815 = vmatprep.subr.mxu0 0.0
    %1816 = vmatpush1.msra.mxu0 0.0
    %1817 = vmatprep.subr.mxu0 0.0
    %1818 = vmatpush1.msra.mxu0 0.0
    %1819 = vmatprep.subr.mxu0 0.0
    %1820 = vmatpush1.msra.mxu0 0.0
    %1821 = vmatprep.subr.mxu0 0.0
    %1822 = vmatpush1.msra.mxu0 0.0
    %1823 = vmatprep.subr.mxu0 0.0
    %1824 = vmatpush1.msra.mxu0 0.0
    %1825 = vmatprep.subr.mxu0 0.0
    %1826 = vmatpush1.msra.mxu0 0.0
    %1827 = vmatprep.subr.mxu0 0.0
    %1828 = vmatpush1.msra.mxu0 %v1800
    %1829 = vmatprep.subr.mxu0 0.0
    %1830 = vmatpush1.msra.mxu0 %v1795
    %1831 = vmatprep.subr.mxu0 0.0
    %1832 = vmatpush1.msra.mxu0 %v1790
    %1833 = vmatprep.subr.mxu0 0.0
    %1834 = vmatpush1.msra.mxu0 %v1785
    %1835 = vmatprep.subr.mxu0 0.0
    %1836 = vmatpush2.msra.mxu0 0.0
    %1837 = vmatprep.subr.mxu0 0.0
    %1838 = vmatpush2.msra.mxu0 0.0
    %1839 = vmatprep.subr.mxu0 0.0
    %1840 = vmatpush2.msra.mxu0 0.0
    %1841 = vmatprep.subr.mxu0 0.0
    %1842 = vmatpush2.msra.mxu0 0.0
    %1843 = vmatprep.subr.mxu0 0.0
    %1844 = vmatpush2.msra.mxu0 0.0
    %1845 = vmatprep.subr.mxu0 0.0
    %1846 = vmatpush2.msra.mxu0 0.0
    %1847 = vmatprep.subr.mxu0 0.0
    %1848 = vmatpush2.msra.mxu0 0.0
    %1849 = vmatprep.subr.mxu0 0.0
    %1850 = vmatpush2.msra.mxu0 0.0
    %1851 = vmatprep.subr.mxu0 0.0
    %1852 = vmatpush2.msra.mxu0 0.0
    %1853 = vmatprep.subr.mxu0 0.0
    %1854 = vmatpush2.msra.mxu0 0.0
    %1855 = vmatprep.subr.mxu0 0.0
    %1856 = vmatpush2.msra.mxu0 0.0
    %1857 = vmatprep.subr.mxu0 0.0
    %1858 = vmatpush2.msra.mxu0 0.0
    %1859 = vmatprep.subr.mxu0 0.0
    %1860 = vmatpush2.msra.mxu0 0.0
    %1861 = vmatprep.subr.mxu0 0.0
    %1862 = vmatpush2.msra.mxu0 0.0
    %1863 = vmatprep.subr.mxu0 0.0
    %1864 = vmatpush2.msra.mxu0 0.0
    %1865 = vmatprep.subr.mxu0 0.0
    %1866 = vmatpush2.msra.mxu0 0.0
    %1867 = vmatprep.mubr.f32.mxu0 0.0
    %1868 = vmatmul.mubr.f32.gmra.mxu0 %v197
    %v1869 = vpop.f32.mrf.mxu0
    %v1870 = vadd.f32 0.0, %v1869
    %v1871 = vpop.f32.mrf.mxu0
    %1872 = vdwg.mxu0
    %1874 = vrot.lane.b32.xlu0 %v1870, 120
    %v1875 = vpop.permute.xlu0 %1874
    %v1877 = vmin.f32 %v1676, %v1875
    %1878 = vrot.lane.b32.xlu0 %v26, 97
    %v1879 = vpop.permute.xlu0 %1878
    %1880 = vrot.lane.b32.xlu0 %v28, 97
    %v1881 = vpop.permute.xlu0 %1880
    %1882 = vrot.lane.b32.xlu0 %v30, 97
    %v1883 = vpop.permute.xlu0 %1882
    %1884 = vrot.lane.b32.xlu0 %v32, 97
    %v1885 = vpop.permute.xlu0 %1884
    %1886 = vrot.lane.b32.xlu0 %v27, 97
    %v1887 = vpop.permute.xlu0 %1886
    %1888 = vrot.lane.b32.xlu0 %v29, 97
    %v1889 = vpop.permute.xlu0 %1888
    %1890 = vrot.lane.b32.xlu0 %v31, 97
    %v1891 = vpop.permute.xlu0 %1890
    %1892 = vrot.lane.b32.xlu0 %v33, 97
    %v1893 = vpop.permute.xlu0 %1892
    %vm1894 = vcmp.lt.s32.totalorder %v84, 97
    %v1895 = vsel %vm1894, %v1879, %v1887
    %v1896 = vsel %vm1894, %v1881, %v1889
    %v1897 = vsel %vm1894, %v1883, %v1891
    %v1898 = vsel %vm1894, %v1885, %v1893
    %v1899 = vsel %vm1894, %v1887, %v1879
    %v1900 = vsel %vm1894, %v1889, %v1881
    %v1901 = vsel %vm1894, %v1891, %v1883
    %v1902 = vsel %vm1894, %v1893, %v1885
    %v1903 = vsub.f32 %v18, %v1895
    %v1904 = vsub.f32 %v19, %v1899
    %v1905 = vsub.f32 %v20, %v1896
    %v1906 = vsub.f32 %v21, %v1900
    %v1907 = vsub.f32 %v22, %v1897
    %v1908 = vsub.f32 %v23, %v1901
    %v1909 = vsub.f32 %v24, %v1898
    %v1910 = vsub.f32 %v25, %v1902
    %v1911 = vmul.f32 %v1903, %v1903
    %v1912 = vmul.f32 %v1904, %v1904
    %v1913 = vmul.f32 %v1905, %v1905
    %v1914 = vmul.f32 %v1906, %v1906
    %v1915 = vmul.f32 %v1907, %v1907
    %v1916 = vmul.f32 %v1908, %v1908
    %v1917 = vmul.f32 %v1909, %v1909
    %v1918 = vmul.f32 %v1910, %v1910
    %1919 = vmatprep.subr.mxu0 0.0
    %1920 = vmatpush1.msra.mxu0 %v49
    %1921 = vmatprep.subr.mxu0 0.0
    %1922 = vmatpush1.msra.mxu0 %v48
    %1923 = vmatprep.subr.mxu0 0.0
    %1924 = vmatpush1.msra.mxu0 %v47
    %1925 = vmatprep.subr.mxu0 0.0
    %1926 = vmatpush1.msra.mxu0 %v46
    %1927 = vmatprep.subr.mxu0 0.0
    %1928 = vmatpush1.msra.mxu0 %v45
    %1929 = vmatprep.subr.mxu0 0.0
    %1930 = vmatpush1.msra.mxu0 %v44
    %1931 = vmatprep.subr.mxu0 0.0
    %1932 = vmatpush1.msra.mxu0 %v43
    %1933 = vmatprep.subr.mxu0 0.0
    %1934 = vmatpush1.msra.mxu0 %v42
    %1935 = vmatprep.subr.mxu0 0.0
    %1936 = vmatpush1.msra.mxu0 %v41
    %1937 = vmatprep.subr.mxu0 0.0
    %1938 = vmatpush1.msra.mxu0 %v40
    %1939 = vmatprep.subr.mxu0 0.0
    %1940 = vmatpush1.msra.mxu0 %v39
    %1941 = vmatprep.subr.mxu0 0.0
    %1942 = vmatpush1.msra.mxu0 %v38
    %1943 = vmatprep.subr.mxu0 0.0
    %1944 = vmatpush1.msra.mxu0 %v37
    %1945 = vmatprep.subr.mxu0 0.0
    %1946 = vmatpush1.msra.mxu0 %v36
    %1947 = vmatprep.subr.mxu0 0.0
    %1948 = vmatpush1.msra.mxu0 %v35
    %1949 = vmatprep.subr.mxu0 0.0
    %1950 = vmatpush1.msra.mxu0 %v34
    %1951 = vmatprep.subr.mxu0 0.0
    %1952 = vmatpush2.msra.mxu0 %v65
    %1953 = vmatprep.subr.mxu0 0.0
    %1954 = vmatpush2.msra.mxu0 %v64
    %1955 = vmatprep.subr.mxu0 0.0
    %1956 = vmatpush2.msra.mxu0 %v63
    %1957 = vmatprep.subr.mxu0 0.0
    %1958 = vmatpush2.msra.mxu0 %v62
    %1959 = vmatprep.subr.mxu0 0.0
    %1960 = vmatpush2.msra.mxu0 %v61
    %1961 = vmatprep.subr.mxu0 0.0
    %1962 = vmatpush2.msra.mxu0 %v60
    %1963 = vmatprep.subr.mxu0 0.0
    %1964 = vmatpush2.msra.mxu0 %v59
    %1965 = vmatprep.subr.mxu0 0.0
    %1966 = vmatpush2.msra.mxu0 %v58
    %1967 = vmatprep.subr.mxu0 0.0
    %1968 = vmatpush2.msra.mxu0 %v57
    %1969 = vmatprep.subr.mxu0 0.0
    %1970 = vmatpush2.msra.mxu0 %v56
    %1971 = vmatprep.subr.mxu0 0.0
    %1972 = vmatpush2.msra.mxu0 %v55
    %1973 = vmatprep.subr.mxu0 0.0
    %1974 = vmatpush2.msra.mxu0 %v54
    %1975 = vmatprep.subr.mxu0 0.0
    %1976 = vmatpush2.msra.mxu0 %v53
    %1977 = vmatprep.subr.mxu0 0.0
    %1978 = vmatpush2.msra.mxu0 %v52
    %1979 = vmatprep.subr.mxu0 0.0
    %1980 = vmatpush2.msra.mxu0 %v51
    %1981 = vmatprep.subr.mxu0 0.0
    %1982 = vmatpush2.msra.mxu0 %v50
    %1983 = vmatprep.mubr.f32.mxu0 %v1912
    %1984 = vmatmul.mubr.f32.gmra.mxu0 %v1911
    %v1985 = vpop.f32.mrf.mxu0
    %v1986 = vadd.f32 0.0, %v1985
    %v1987 = vpop.f32.mrf.mxu0
    %1988 = vmatprep.mubr.f32.mxu0 %v1914
    %1989 = vmatmul.mubr.f32.gmra.mxu0 %v1913
    %v1990 = vpop.f32.mrf.mxu0
    %v1991 = vadd.f32 0.0, %v1990
    %v1992 = vpop.f32.mrf.mxu0
    %1993 = vmatprep.mubr.f32.mxu0 %v1916
    %1994 = vmatmul.mubr.f32.gmra.mxu0 %v1915
    %v1995 = vpop.f32.mrf.mxu0
    %v1996 = vadd.f32 0.0, %v1995
    %v1997 = vpop.f32.mrf.mxu0
    %1998 = vmatprep.mubr.f32.mxu0 %v1918
    %1999 = vmatmul.mubr.f32.gmra.mxu0 %v1917
    %v2000 = vpop.f32.mrf.mxu0
    %v2001 = vadd.f32 0.0, %v2000
    %v2002 = vpop.f32.mrf.mxu0
    %2003 = vdwg.mxu0
    %2004 = vmatprep.subr.mxu0 0.0
    %2005 = vmatpush1.msra.mxu0 0.0
    %2006 = vmatprep.subr.mxu0 0.0
    %2007 = vmatpush1.msra.mxu0 0.0
    %2008 = vmatprep.subr.mxu0 0.0
    %2009 = vmatpush1.msra.mxu0 0.0
    %2010 = vmatprep.subr.mxu0 0.0
    %2011 = vmatpush1.msra.mxu0 0.0
    %2012 = vmatprep.subr.mxu0 0.0
    %2013 = vmatpush1.msra.mxu0 0.0
    %2014 = vmatprep.subr.mxu0 0.0
    %2015 = vmatpush1.msra.mxu0 0.0
    %2016 = vmatprep.subr.mxu0 0.0
    %2017 = vmatpush1.msra.mxu0 0.0
    %2018 = vmatprep.subr.mxu0 0.0
    %2019 = vmatpush1.msra.mxu0 0.0
    %2020 = vmatprep.subr.mxu0 0.0
    %2021 = vmatpush1.msra.mxu0 0.0
    %2022 = vmatprep.subr.mxu0 0.0
    %2023 = vmatpush1.msra.mxu0 0.0
    %2024 = vmatprep.subr.mxu0 0.0
    %2025 = vmatpush1.msra.mxu0 0.0
    %2026 = vmatprep.subr.mxu0 0.0
    %2027 = vmatpush1.msra.mxu0 0.0
    %2028 = vmatprep.subr.mxu0 0.0
    %2029 = vmatpush1.msra.mxu0 %v2001
    %2030 = vmatprep.subr.mxu0 0.0
    %2031 = vmatpush1.msra.mxu0 %v1996
    %2032 = vmatprep.subr.mxu0 0.0
    %2033 = vmatpush1.msra.mxu0 %v1991
    %2034 = vmatprep.subr.mxu0 0.0
    %2035 = vmatpush1.msra.mxu0 %v1986
    %2036 = vmatprep.subr.mxu0 0.0
    %2037 = vmatpush2.msra.mxu0 0.0
    %2038 = vmatprep.subr.mxu0 0.0
    %2039 = vmatpush2.msra.mxu0 0.0
    %2040 = vmatprep.subr.mxu0 0.0
    %2041 = vmatpush2.msra.mxu0 0.0
    %2042 = vmatprep.subr.mxu0 0.0
    %2043 = vmatpush2.msra.mxu0 0.0
    %2044 = vmatprep.subr.mxu0 0.0
    %2045 = vmatpush2.msra.mxu0 0.0
    %2046 = vmatprep.subr.mxu0 0.0
    %2047 = vmatpush2.msra.mxu0 0.0
    %2048 = vmatprep.subr.mxu0 0.0
    %2049 = vmatpush2.msra.mxu0 0.0
    %2050 = vmatprep.subr.mxu0 0.0
    %2051 = vmatpush2.msra.mxu0 0.0
    %2052 = vmatprep.subr.mxu0 0.0
    %2053 = vmatpush2.msra.mxu0 0.0
    %2054 = vmatprep.subr.mxu0 0.0
    %2055 = vmatpush2.msra.mxu0 0.0
    %2056 = vmatprep.subr.mxu0 0.0
    %2057 = vmatpush2.msra.mxu0 0.0
    %2058 = vmatprep.subr.mxu0 0.0
    %2059 = vmatpush2.msra.mxu0 0.0
    %2060 = vmatprep.subr.mxu0 0.0
    %2061 = vmatpush2.msra.mxu0 0.0
    %2062 = vmatprep.subr.mxu0 0.0
    %2063 = vmatpush2.msra.mxu0 0.0
    %2064 = vmatprep.subr.mxu0 0.0
    %2065 = vmatpush2.msra.mxu0 0.0
    %2066 = vmatprep.subr.mxu0 0.0
    %2067 = vmatpush2.msra.mxu0 0.0
    %2068 = vmatprep.mubr.f32.mxu0 0.0
    %2069 = vmatmul.mubr.f32.gmra.mxu0 %v197
    %v2070 = vpop.f32.mrf.mxu0
    %v2071 = vadd.f32 0.0, %v2070
    %v2072 = vpop.f32.mrf.mxu0
    %2073 = vdwg.mxu0
    %2075 = vrot.lane.b32.xlu0 %v2071, 119
    %v2076 = vpop.permute.xlu0 %2075
    %v2078 = vmin.f32 %v1877, %v2076
    %2079 = vrot.lane.b32.xlu0 %v26, 32
    %v2080 = vpop.permute.xlu0 %2079
    %2081 = vrot.lane.b32.xlu0 %v28, 32
    %v2082 = vpop.permute.xlu0 %2081
    %2083 = vrot.lane.b32.xlu0 %v30, 32
    %v2084 = vpop.permute.xlu0 %2083
    %2085 = vrot.lane.b32.xlu0 %v32, 32
    %v2086 = vpop.permute.xlu0 %2085
    %2087 = vrot.lane.b32.xlu0 %v27, 32
    %v2088 = vpop.permute.xlu0 %2087
    %2089 = vrot.lane.b32.xlu0 %v29, 32
    %v2090 = vpop.permute.xlu0 %2089
    %2091 = vrot.lane.b32.xlu0 %v31, 32
    %v2092 = vpop.permute.xlu0 %2091
    %2093 = vrot.lane.b32.xlu0 %v33, 32
    %v2094 = vpop.permute.xlu0 %2093
    %vm2095 = vcmp.lt.s32.totalorder %v84, 32
    %v2096 = vsel %vm2095, %v2080, %v2088
    %v2097 = vsel %vm2095, %v2082, %v2090
    %v2098 = vsel %vm2095, %v2084, %v2092
    %v2099 = vsel %vm2095, %v2086, %v2094
    %v2100 = vsel %vm2095, %v2088, %v2080
    %v2101 = vsel %vm2095, %v2090, %v2082
    %v2102 = vsel %vm2095, %v2092, %v2084
    %v2103 = vsel %vm2095, %v2094, %v2086
    %v2104 = vsub.f32 %v18, %v2100
    %v2105 = vsub.f32 %v19, %v2096
    %v2106 = vsub.f32 %v20, %v2101
    %v2107 = vsub.f32 %v21, %v2097
    %v2108 = vsub.f32 %v22, %v2102
    %v2109 = vsub.f32 %v23, %v2098
    %v2110 = vsub.f32 %v24, %v2103
    %v2111 = vsub.f32 %v25, %v2099
    %v2112 = vmul.f32 %v2104, %v2104
    %v2113 = vmul.f32 %v2105, %v2105
    %v2114 = vmul.f32 %v2106, %v2106
    %v2115 = vmul.f32 %v2107, %v2107
    %v2116 = vmul.f32 %v2108, %v2108
    %v2117 = vmul.f32 %v2109, %v2109
    %v2118 = vmul.f32 %v2110, %v2110
    %v2119 = vmul.f32 %v2111, %v2111
    %2120 = vmatprep.subr.mxu0 0.0
    %2121 = vmatpush1.msra.mxu0 %v49
    %2122 = vmatprep.subr.mxu0 0.0
    %2123 = vmatpush1.msra.mxu0 %v48
    %2124 = vmatprep.subr.mxu0 0.0
    %2125 = vmatpush1.msra.mxu0 %v47
    %2126 = vmatprep.subr.mxu0 0.0
    %2127 = vmatpush1.msra.mxu0 %v46
    %2128 = vmatprep.subr.mxu0 0.0
    %2129 = vmatpush1.msra.mxu0 %v45
    %2130 = vmatprep.subr.mxu0 0.0
    %2131 = vmatpush1.msra.mxu0 %v44
    %2132 = vmatprep.subr.mxu0 0.0
    %2133 = vmatpush1.msra.mxu0 %v43
    %2134 = vmatprep.subr.mxu0 0.0
    %2135 = vmatpush1.msra.mxu0 %v42
    %2136 = vmatprep.subr.mxu0 0.0
    %2137 = vmatpush1.msra.mxu0 %v41
    %2138 = vmatprep.subr.mxu0 0.0
    %2139 = vmatpush1.msra.mxu0 %v40
    %2140 = vmatprep.subr.mxu0 0.0
    %2141 = vmatpush1.msra.mxu0 %v39
    %2142 = vmatprep.subr.mxu0 0.0
    %2143 = vmatpush1.msra.mxu0 %v38
    %2144 = vmatprep.subr.mxu0 0.0
    %2145 = vmatpush1.msra.mxu0 %v37
    %2146 = vmatprep.subr.mxu0 0.0
    %2147 = vmatpush1.msra.mxu0 %v36
    %2148 = vmatprep.subr.mxu0 0.0
    %2149 = vmatpush1.msra.mxu0 %v35
    %2150 = vmatprep.subr.mxu0 0.0
    %2151 = vmatpush1.msra.mxu0 %v34
    %2152 = vmatprep.subr.mxu0 0.0
    %2153 = vmatpush2.msra.mxu0 %v65
    %2154 = vmatprep.subr.mxu0 0.0
    %2155 = vmatpush2.msra.mxu0 %v64
    %2156 = vmatprep.subr.mxu0 0.0
    %2157 = vmatpush2.msra.mxu0 %v63
    %2158 = vmatprep.subr.mxu0 0.0
    %2159 = vmatpush2.msra.mxu0 %v62
    %2160 = vmatprep.subr.mxu0 0.0
    %2161 = vmatpush2.msra.mxu0 %v61
    %2162 = vmatprep.subr.mxu0 0.0
    %2163 = vmatpush2.msra.mxu0 %v60
    %2164 = vmatprep.subr.mxu0 0.0
    %2165 = vmatpush2.msra.mxu0 %v59
    %2166 = vmatprep.subr.mxu0 0.0
    %2167 = vmatpush2.msra.mxu0 %v58
    %2168 = vmatprep.subr.mxu0 0.0
    %2169 = vmatpush2.msra.mxu0 %v57
    %2170 = vmatprep.subr.mxu0 0.0
    %2171 = vmatpush2.msra.mxu0 %v56
    %2172 = vmatprep.subr.mxu0 0.0
    %2173 = vmatpush2.msra.mxu0 %v55
    %2174 = vmatprep.subr.mxu0 0.0
    %2175 = vmatpush2.msra.mxu0 %v54
    %2176 = vmatprep.subr.mxu0 0.0
    %2177 = vmatpush2.msra.mxu0 %v53
    %2178 = vmatprep.subr.mxu0 0.0
    %2179 = vmatpush2.msra.mxu0 %v52
    %2180 = vmatprep.subr.mxu0 0.0
    %2181 = vmatpush2.msra.mxu0 %v51
    %2182 = vmatprep.subr.mxu0 0.0
    %2183 = vmatpush2.msra.mxu0 %v50
    %2184 = vmatprep.mubr.f32.mxu0 %v2113
    %2185 = vmatmul.mubr.f32.gmra.mxu0 %v2112
    %v2186 = vpop.f32.mrf.mxu0
    %v2187 = vadd.f32 0.0, %v2186
    %v2188 = vpop.f32.mrf.mxu0
    %2189 = vmatprep.mubr.f32.mxu0 %v2115
    %2190 = vmatmul.mubr.f32.gmra.mxu0 %v2114
    %v2191 = vpop.f32.mrf.mxu0
    %v2192 = vadd.f32 0.0, %v2191
    %v2193 = vpop.f32.mrf.mxu0
    %2194 = vmatprep.mubr.f32.mxu0 %v2117
    %2195 = vmatmul.mubr.f32.gmra.mxu0 %v2116
    %v2196 = vpop.f32.mrf.mxu0
    %v2197 = vadd.f32 0.0, %v2196
    %v2198 = vpop.f32.mrf.mxu0
    %2199 = vmatprep.mubr.f32.mxu0 %v2119
    %2200 = vmatmul.mubr.f32.gmra.mxu0 %v2118
    %v2201 = vpop.f32.mrf.mxu0
    %v2202 = vadd.f32 0.0, %v2201
    %v2203 = vpop.f32.mrf.mxu0
    %2204 = vdwg.mxu0
    %2205 = vmatprep.subr.mxu0 0.0
    %2206 = vmatpush1.msra.mxu0 0.0
    %2207 = vmatprep.subr.mxu0 0.0
    %2208 = vmatpush1.msra.mxu0 0.0
    %2209 = vmatprep.subr.mxu0 0.0
    %2210 = vmatpush1.msra.mxu0 0.0
    %2211 = vmatprep.subr.mxu0 0.0
    %2212 = vmatpush1.msra.mxu0 0.0
    %2213 = vmatprep.subr.mxu0 0.0
    %2214 = vmatpush1.msra.mxu0 0.0
    %2215 = vmatprep.subr.mxu0 0.0
    %2216 = vmatpush1.msra.mxu0 0.0
    %2217 = vmatprep.subr.mxu0 0.0
    %2218 = vmatpush1.msra.mxu0 0.0
    %2219 = vmatprep.subr.mxu0 0.0
    %2220 = vmatpush1.msra.mxu0 0.0
    %2221 = vmatprep.subr.mxu0 0.0
    %2222 = vmatpush1.msra.mxu0 0.0
    %2223 = vmatprep.subr.mxu0 0.0
    %2224 = vmatpush1.msra.mxu0 0.0
    %2225 = vmatprep.subr.mxu0 0.0
    %2226 = vmatpush1.msra.mxu0 0.0
    %2227 = vmatprep.subr.mxu0 0.0
    %2228 = vmatpush1.msra.mxu0 0.0
    %2229 = vmatprep.subr.mxu0 0.0
    %2230 = vmatpush1.msra.mxu0 %v2202
    %2231 = vmatprep.subr.mxu0 0.0
    %2232 = vmatpush1.msra.mxu0 %v2197
    %2233 = vmatprep.subr.mxu0 0.0
    %2234 = vmatpush1.msra.mxu0 %v2192
    %2235 = vmatprep.subr.mxu0 0.0
    %2236 = vmatpush1.msra.mxu0 %v2187
    %2237 = vmatprep.subr.mxu0 0.0
    %2238 = vmatpush2.msra.mxu0 0.0
    %2239 = vmatprep.subr.mxu0 0.0
    %2240 = vmatpush2.msra.mxu0 0.0
    %2241 = vmatprep.subr.mxu0 0.0
    %2242 = vmatpush2.msra.mxu0 0.0
    %2243 = vmatprep.subr.mxu0 0.0
    %2244 = vmatpush2.msra.mxu0 0.0
    %2245 = vmatprep.subr.mxu0 0.0
    %2246 = vmatpush2.msra.mxu0 0.0
    %2247 = vmatprep.subr.mxu0 0.0
    %2248 = vmatpush2.msra.mxu0 0.0
    %2249 = vmatprep.subr.mxu0 0.0
    %2250 = vmatpush2.msra.mxu0 0.0
    %2251 = vmatprep.subr.mxu0 0.0
    %2252 = vmatpush2.msra.mxu0 0.0
    %2253 = vmatprep.subr.mxu0 0.0
    %2254 = vmatpush2.msra.mxu0 0.0
    %2255 = vmatprep.subr.mxu0 0.0
    %2256 = vmatpush2.msra.mxu0 0.0
    %2257 = vmatprep.subr.mxu0 0.0
    %2258 = vmatpush2.msra.mxu0 0.0
    %2259 = vmatprep.subr.mxu0 0.0
    %2260 = vmatpush2.msra.mxu0 0.0
    %2261 = vmatprep.subr.mxu0 0.0
    %2262 = vmatpush2.msra.mxu0 0.0
    %2263 = vmatprep.subr.mxu0 0.0
    %2264 = vmatpush2.msra.mxu0 0.0
    %2265 = vmatprep.subr.mxu0 0.0
    %2266 = vmatpush2.msra.mxu0 0.0
    %2267 = vmatprep.subr.mxu0 0.0
    %2268 = vmatpush2.msra.mxu0 0.0
    %2269 = vmatprep.mubr.f32.mxu0 0.0
    %2270 = vmatmul.mubr.f32.gmra.mxu0 %v197
    %v2271 = vpop.f32.mrf.mxu0
    %v2272 = vadd.f32 0.0, %v2271
    %v2273 = vpop.f32.mrf.mxu0
    %2274 = vdwg.mxu0
    %2276 = vrot.lane.b32.xlu0 %v2272, 118
    %v2277 = vpop.permute.xlu0 %2276
    %v2279 = vmin.f32 %v2078, %v2277
    %2280 = vrot.lane.b32.xlu0 %v26, 16
    %v2281 = vpop.permute.xlu0 %2280
    %2282 = vrot.lane.b32.xlu0 %v28, 16
    %v2283 = vpop.permute.xlu0 %2282
    %2284 = vrot.lane.b32.xlu0 %v30, 16
    %v2285 = vpop.permute.xlu0 %2284
    %2286 = vrot.lane.b32.xlu0 %v32, 16
    %v2287 = vpop.permute.xlu0 %2286
    %2288 = vrot.lane.b32.xlu0 %v27, 16
    %v2289 = vpop.permute.xlu0 %2288
    %2290 = vrot.lane.b32.xlu0 %v29, 16
    %v2291 = vpop.permute.xlu0 %2290
    %2292 = vrot.lane.b32.xlu0 %v31, 16
    %v2293 = vpop.permute.xlu0 %2292
    %2294 = vrot.lane.b32.xlu0 %v33, 16
    %v2295 = vpop.permute.xlu0 %2294
    %vm2296 = vcmp.lt.s32.totalorder %v84, 16
    %v2297 = vsel %vm2296, %v2281, %v2289
    %v2298 = vsel %vm2296, %v2283, %v2291
    %v2299 = vsel %vm2296, %v2285, %v2293
    %v2300 = vsel %vm2296, %v2287, %v2295
    %v2301 = vsel %vm2296, %v2289, %v2281
    %v2302 = vsel %vm2296, %v2291, %v2283
    %v2303 = vsel %vm2296, %v2293, %v2285
    %v2304 = vsel %vm2296, %v2295, %v2287
    %v2305 = vsub.f32 %v18, %v2301
    %v2306 = vsub.f32 %v19, %v2297
    %v2307 = vsub.f32 %v20, %v2302
    %v2308 = vsub.f32 %v21, %v2298
    %v2309 = vsub.f32 %v22, %v2303
    %v2310 = vsub.f32 %v23, %v2299
    %v2311 = vsub.f32 %v24, %v2304
    %v2312 = vsub.f32 %v25, %v2300
    %v2313 = vmul.f32 %v2305, %v2305
    %v2314 = vmul.f32 %v2306, %v2306
    %v2315 = vmul.f32 %v2307, %v2307
    %v2316 = vmul.f32 %v2308, %v2308
    %v2317 = vmul.f32 %v2309, %v2309
    %v2318 = vmul.f32 %v2310, %v2310
    %v2319 = vmul.f32 %v2311, %v2311
    %v2320 = vmul.f32 %v2312, %v2312
    %2321 = vmatprep.subr.mxu0 0.0
    %2322 = vmatpush1.msra.mxu0 %v49
    %2323 = vmatprep.subr.mxu0 0.0
    %2324 = vmatpush1.msra.mxu0 %v48
    %2325 = vmatprep.subr.mxu0 0.0
    %2326 = vmatpush1.msra.mxu0 %v47
    %2327 = vmatprep.subr.mxu0 0.0
    %2328 = vmatpush1.msra.mxu0 %v46
    %2329 = vmatprep.subr.mxu0 0.0
    %2330 = vmatpush1.msra.mxu0 %v45
    %2331 = vmatprep.subr.mxu0 0.0
    %2332 = vmatpush1.msra.mxu0 %v44
    %2333 = vmatprep.subr.mxu0 0.0
    %2334 = vmatpush1.msra.mxu0 %v43
    %2335 = vmatprep.subr.mxu0 0.0
    %2336 = vmatpush1.msra.mxu0 %v42
    %2337 = vmatprep.subr.mxu0 0.0
    %2338 = vmatpush1.msra.mxu0 %v41
    %2339 = vmatprep.subr.mxu0 0.0
    %2340 = vmatpush1.msra.mxu0 %v40
    %2341 = vmatprep.subr.mxu0 0.0
    %2342 = vmatpush1.msra.mxu0 %v39
    %2343 = vmatprep.subr.mxu0 0.0
    %2344 = vmatpush1.msra.mxu0 %v38
    %2345 = vmatprep.subr.mxu0 0.0
    %2346 = vmatpush1.msra.mxu0 %v37
    %2347 = vmatprep.subr.mxu0 0.0
    %2348 = vmatpush1.msra.mxu0 %v36
    %2349 = vmatprep.subr.mxu0 0.0
    %2350 = vmatpush1.msra.mxu0 %v35
    %2351 = vmatprep.subr.mxu0 0.0
    %2352 = vmatpush1.msra.mxu0 %v34
    %2353 = vmatprep.subr.mxu0 0.0
    %2354 = vmatpush2.msra.mxu0 %v65
    %2355 = vmatprep.subr.mxu0 0.0
    %2356 = vmatpush2.msra.mxu0 %v64
    %2357 = vmatprep.subr.mxu0 0.0
    %2358 = vmatpush2.msra.mxu0 %v63
    %2359 = vmatprep.subr.mxu0 0.0
    %2360 = vmatpush2.msra.mxu0 %v62
    %2361 = vmatprep.subr.mxu0 0.0
    %2362 = vmatpush2.msra.mxu0 %v61
    %2363 = vmatprep.subr.mxu0 0.0
    %2364 = vmatpush2.msra.mxu0 %v60
    %2365 = vmatprep.subr.mxu0 0.0
    %2366 = vmatpush2.msra.mxu0 %v59
    %2367 = vmatprep.subr.mxu0 0.0
    %2368 = vmatpush2.msra.mxu0 %v58
    %2369 = vmatprep.subr.mxu0 0.0
    %2370 = vmatpush2.msra.mxu0 %v57
    %2371 = vmatprep.subr.mxu0 0.0
    %2372 = vmatpush2.msra.mxu0 %v56
    %2373 = vmatprep.subr.mxu0 0.0
    %2374 = vmatpush2.msra.mxu0 %v55
    %2375 = vmatprep.subr.mxu0 0.0
    %2376 = vmatpush2.msra.mxu0 %v54
    %2377 = vmatprep.subr.mxu0 0.0
    %2378 = vmatpush2.msra.mxu0 %v53
    %2379 = vmatprep.subr.mxu0 0.0
    %2380 = vmatpush2.msra.mxu0 %v52
    %2381 = vmatprep.subr.mxu0 0.0
    %2382 = vmatpush2.msra.mxu0 %v51
    %2383 = vmatprep.subr.mxu0 0.0
    %2384 = vmatpush2.msra.mxu0 %v50
    %2385 = vmatprep.mubr.f32.mxu0 %v2314
    %2386 = vmatmul.mubr.f32.gmra.mxu0 %v2313
    %v2387 = vpop.f32.mrf.mxu0
    %v2388 = vadd.f32 0.0, %v2387
    %v2389 = vpop.f32.mrf.mxu0
    %2390 = vmatprep.mubr.f32.mxu0 %v2316
    %2391 = vmatmul.mubr.f32.gmra.mxu0 %v2315
    %v2392 = vpop.f32.mrf.mxu0
    %v2393 = vadd.f32 0.0, %v2392
    %v2394 = vpop.f32.mrf.mxu0
    %2395 = vmatprep.mubr.f32.mxu0 %v2318
    %2396 = vmatmul.mubr.f32.gmra.mxu0 %v2317
    %v2397 = vpop.f32.mrf.mxu0
    %v2398 = vadd.f32 0.0, %v2397
    %v2399 = vpop.f32.mrf.mxu0
    %2400 = vmatprep.mubr.f32.mxu0 %v2320
    %2401 = vmatmul.mubr.f32.gmra.mxu0 %v2319
    %v2402 = vpop.f32.mrf.mxu0
    %v2403 = vadd.f32 0.0, %v2402
    %v2404 = vpop.f32.mrf.mxu0
    %2405 = vdwg.mxu0
    %2406 = vmatprep.subr.mxu0 0.0
    %2407 = vmatpush1.msra.mxu0 0.0
    %2408 = vmatprep.subr.mxu0 0.0
    %2409 = vmatpush1.msra.mxu0 0.0
    %2410 = vmatprep.subr.mxu0 0.0
    %2411 = vmatpush1.msra.mxu0 0.0
    %2412 = vmatprep.subr.mxu0 0.0
    %2413 = vmatpush1.msra.mxu0 0.0
    %2414 = vmatprep.subr.mxu0 0.0
    %2415 = vmatpush1.msra.mxu0 0.0
    %2416 = vmatprep.subr.mxu0 0.0
    %2417 = vmatpush1.msra.mxu0 0.0
    %2418 = vmatprep.subr.mxu0 0.0
    %2419 = vmatpush1.msra.mxu0 0.0
    %2420 = vmatprep.subr.mxu0 0.0
    %2421 = vmatpush1.msra.mxu0 0.0
    %2422 = vmatprep.subr.mxu0 0.0
    %2423 = vmatpush1.msra.mxu0 0.0
    %2424 = vmatprep.subr.mxu0 0.0
    %2425 = vmatpush1.msra.mxu0 0.0
    %2426 = vmatprep.subr.mxu0 0.0
    %2427 = vmatpush1.msra.mxu0 0.0
    %2428 = vmatprep.subr.mxu0 0.0
    %2429 = vmatpush1.msra.mxu0 0.0
    %2430 = vmatprep.subr.mxu0 0.0
    %2431 = vmatpush1.msra.mxu0 %v2403
    %2432 = vmatprep.subr.mxu0 0.0
    %2433 = vmatpush1.msra.mxu0 %v2398
    %2434 = vmatprep.subr.mxu0 0.0
    %2435 = vmatpush1.msra.mxu0 %v2393
    %2436 = vmatprep.subr.mxu0 0.0
    %2437 = vmatpush1.msra.mxu0 %v2388
    %2438 = vmatprep.subr.mxu0 0.0
    %2439 = vmatpush2.msra.mxu0 0.0
    %2440 = vmatprep.subr.mxu0 0.0
    %2441 = vmatpush2.msra.mxu0 0.0
    %2442 = vmatprep.subr.mxu0 0.0
    %2443 = vmatpush2.msra.mxu0 0.0
    %2444 = vmatprep.subr.mxu0 0.0
    %2445 = vmatpush2.msra.mxu0 0.0
    %2446 = vmatprep.subr.mxu0 0.0
    %2447 = vmatpush2.msra.mxu0 0.0
    %2448 = vmatprep.subr.mxu0 0.0
    %2449 = vmatpush2.msra.mxu0 0.0
    %2450 = vmatprep.subr.mxu0 0.0
    %2451 = vmatpush2.msra.mxu0 0.0
    %2452 = vmatprep.subr.mxu0 0.0
    %2453 = vmatpush2.msra.mxu0 0.0
    %2454 = vmatprep.subr.mxu0 0.0
    %2455 = vmatpush2.msra.mxu0 0.0
    %2456 = vmatprep.subr.mxu0 0.0
    %2457 = vmatpush2.msra.mxu0 0.0
    %2458 = vmatprep.subr.mxu0 0.0
    %2459 = vmatpush2.msra.mxu0 0.0
    %2460 = vmatprep.subr.mxu0 0.0
    %2461 = vmatpush2.msra.mxu0 0.0
    %2462 = vmatprep.subr.mxu0 0.0
    %2463 = vmatpush2.msra.mxu0 0.0
    %2464 = vmatprep.subr.mxu0 0.0
    %2465 = vmatpush2.msra.mxu0 0.0
    %2466 = vmatprep.subr.mxu0 0.0
    %2467 = vmatpush2.msra.mxu0 0.0
    %2468 = vmatprep.subr.mxu0 0.0
    %2469 = vmatpush2.msra.mxu0 0.0
    %2470 = vmatprep.mubr.f32.mxu0 0.0
    %2471 = vmatmul.mubr.f32.gmra.mxu0 %v197
    %v2472 = vpop.f32.mrf.mxu0
    %v2473 = vadd.f32 0.0, %v2472
    %v2474 = vpop.f32.mrf.mxu0
    %2475 = vdwg.mxu0
    %2477 = vrot.lane.b32.xlu0 %v2473, 117
    %v2478 = vpop.permute.xlu0 %2477
    %v2480 = vmin.f32 %v2279, %v2478
    %v2481 = vsub.f32 %v18, %v26
    %v2482 = vsub.f32 %v19, %v27
    %v2483 = vsub.f32 %v20, %v28
    %v2484 = vsub.f32 %v21, %v29
    %v2485 = vsub.f32 %v22, %v30
    %v2486 = vsub.f32 %v23, %v31
    %v2487 = vsub.f32 %v24, %v32
    %v2488 = vsub.f32 %v25, %v33
    %v2489 = vmul.f32 %v2481, %v2481
    %v2490 = vmul.f32 %v2482, %v2482
    %v2491 = vmul.f32 %v2483, %v2483
    %v2492 = vmul.f32 %v2484, %v2484
    %v2493 = vmul.f32 %v2485, %v2485
    %v2494 = vmul.f32 %v2486, %v2486
    %v2495 = vmul.f32 %v2487, %v2487
    %v2496 = vmul.f32 %v2488, %v2488
    %2497 = vmatprep.subr.mxu0 0.0
    %2498 = vmatpush1.msra.mxu0 %v49
    %2499 = vmatprep.subr.mxu0 0.0
    %2500 = vmatpush1.msra.mxu0 %v48
    %2501 = vmatprep.subr.mxu0 0.0
    %2502 = vmatpush1.msra.mxu0 %v47
    %2503 = vmatprep.subr.mxu0 0.0
    %2504 = vmatpush1.msra.mxu0 %v46
    %2505 = vmatprep.subr.mxu0 0.0
    %2506 = vmatpush1.msra.mxu0 %v45
    %2507 = vmatprep.subr.mxu0 0.0
    %2508 = vmatpush1.msra.mxu0 %v44
    %2509 = vmatprep.subr.mxu0 0.0
    %2510 = vmatpush1.msra.mxu0 %v43
    %2511 = vmatprep.subr.mxu0 0.0
    %2512 = vmatpush1.msra.mxu0 %v42
    %2513 = vmatprep.subr.mxu0 0.0
    %2514 = vmatpush1.msra.mxu0 %v41
    %2515 = vmatprep.subr.mxu0 0.0
    %2516 = vmatpush1.msra.mxu0 %v40
    %2517 = vmatprep.subr.mxu0 0.0
    %2518 = vmatpush1.msra.mxu0 %v39
    %2519 = vmatprep.subr.mxu0 0.0
    %2520 = vmatpush1.msra.mxu0 %v38
    %2521 = vmatprep.subr.mxu0 0.0
    %2522 = vmatpush1.msra.mxu0 %v37
    %2523 = vmatprep.subr.mxu0 0.0
    %2524 = vmatpush1.msra.mxu0 %v36
    %2525 = vmatprep.subr.mxu0 0.0
    %2526 = vmatpush1.msra.mxu0 %v35
    %2527 = vmatprep.subr.mxu0 0.0
    %2528 = vmatpush1.msra.mxu0 %v34
    %2529 = vmatprep.subr.mxu0 0.0
    %2530 = vmatpush2.msra.mxu0 %v65
    %2531 = vmatprep.subr.mxu0 0.0
    %2532 = vmatpush2.msra.mxu0 %v64
    %2533 = vmatprep.subr.mxu0 0.0
    %2534 = vmatpush2.msra.mxu0 %v63
    %2535 = vmatprep.subr.mxu0 0.0
    %2536 = vmatpush2.msra.mxu0 %v62
    %2537 = vmatprep.subr.mxu0 0.0
    %2538 = vmatpush2.msra.mxu0 %v61
    %2539 = vmatprep.subr.mxu0 0.0
    %2540 = vmatpush2.msra.mxu0 %v60
    %2541 = vmatprep.subr.mxu0 0.0
    %2542 = vmatpush2.msra.mxu0 %v59
    %2543 = vmatprep.subr.mxu0 0.0
    %2544 = vmatpush2.msra.mxu0 %v58
    %2545 = vmatprep.subr.mxu0 0.0
    %2546 = vmatpush2.msra.mxu0 %v57
    %2547 = vmatprep.subr.mxu0 0.0
    %2548 = vmatpush2.msra.mxu0 %v56
    %2549 = vmatprep.subr.mxu0 0.0
    %2550 = vmatpush2.msra.mxu0 %v55
    %2551 = vmatprep.subr.mxu0 0.0
    %2552 = vmatpush2.msra.mxu0 %v54
    %2553 = vmatprep.subr.mxu0 0.0
    %2554 = vmatpush2.msra.mxu0 %v53
    %2555 = vmatprep.subr.mxu0 0.0
    %2556 = vmatpush2.msra.mxu0 %v52
    %2557 = vmatprep.subr.mxu0 0.0
    %2558 = vmatpush2.msra.mxu0 %v51
    %2559 = vmatprep.subr.mxu0 0.0
    %2560 = vmatpush2.msra.mxu0 %v50
    %2561 = vmatprep.mubr.f32.mxu0 %v2490
    %2562 = vmatmul.mubr.f32.gmra.mxu0 %v2489
    %v2563 = vpop.f32.mrf.mxu0
    %v2564 = vadd.f32 0.0, %v2563
    %v2565 = vpop.f32.mrf.mxu0
    %2566 = vmatprep.mubr.f32.mxu0 %v2492
    %2567 = vmatmul.mubr.f32.gmra.mxu0 %v2491
    %v2568 = vpop.f32.mrf.mxu0
    %v2569 = vadd.f32 0.0, %v2568
    %v2570 = vpop.f32.mrf.mxu0
    %2571 = vmatprep.mubr.f32.mxu0 %v2494
    %2572 = vmatmul.mubr.f32.gmra.mxu0 %v2493
    %v2573 = vpop.f32.mrf.mxu0
    %v2574 = vadd.f32 0.0, %v2573
    %v2575 = vpop.f32.mrf.mxu0
    %2576 = vmatprep.mubr.f32.mxu0 %v2496
    %2577 = vmatmul.mubr.f32.gmra.mxu0 %v2495
    %v2578 = vpop.f32.mrf.mxu0
    %v2579 = vadd.f32 0.0, %v2578
    %v2580 = vpop.f32.mrf.mxu0
    %2581 = vdwg.mxu0
    %2582 = vmatprep.subr.mxu0 0.0
    %2583 = vmatpush1.msra.mxu0 0.0
    %2584 = vmatprep.subr.mxu0 0.0
    %2585 = vmatpush1.msra.mxu0 0.0
    %2586 = vmatprep.subr.mxu0 0.0
    %2587 = vmatpush1.msra.mxu0 0.0
    %2588 = vmatprep.subr.mxu0 0.0
    %2589 = vmatpush1.msra.mxu0 0.0
    %2590 = vmatprep.subr.mxu0 0.0
    %2591 = vmatpush1.msra.mxu0 0.0
    %2592 = vmatprep.subr.mxu0 0.0
    %2593 = vmatpush1.msra.mxu0 0.0
    %2594 = vmatprep.subr.mxu0 0.0
    %2595 = vmatpush1.msra.mxu0 0.0
    %2596 = vmatprep.subr.mxu0 0.0
    %2597 = vmatpush1.msra.mxu0 0.0
    %2598 = vmatprep.subr.mxu0 0.0
    %2599 = vmatpush1.msra.mxu0 0.0
    %2600 = vmatprep.subr.mxu0 0.0
    %2601 = vmatpush1.msra.mxu0 0.0
    %2602 = vmatprep.subr.mxu0 0.0
    %2603 = vmatpush1.msra.mxu0 0.0
    %2604 = vmatprep.subr.mxu0 0.0
    %2605 = vmatpush1.msra.mxu0 0.0
    %2606 = vmatprep.subr.mxu0 0.0
    %2607 = vmatpush1.msra.mxu0 %v2579
    %2608 = vmatprep.subr.mxu0 0.0
    %2609 = vmatpush1.msra.mxu0 %v2574
    %2610 = vmatprep.subr.mxu0 0.0
    %2611 = vmatpush1.msra.mxu0 %v2569
    %2612 = vmatprep.subr.mxu0 0.0
    %2613 = vmatpush1.msra.mxu0 %v2564
    %2614 = vmatprep.subr.mxu0 0.0
    %2615 = vmatpush2.msra.mxu0 0.0
    %2616 = vmatprep.subr.mxu0 0.0
    %2617 = vmatpush2.msra.mxu0 0.0
    %2618 = vmatprep.subr.mxu0 0.0
    %2619 = vmatpush2.msra.mxu0 0.0
    %2620 = vmatprep.subr.mxu0 0.0
    %2621 = vmatpush2.msra.mxu0 0.0
    %2622 = vmatprep.subr.mxu0 0.0
    %2623 = vmatpush2.msra.mxu0 0.0
    %2624 = vmatprep.subr.mxu0 0.0
    %2625 = vmatpush2.msra.mxu0 0.0
    %2626 = vmatprep.subr.mxu0 0.0
    %2627 = vmatpush2.msra.mxu0 0.0
    %2628 = vmatprep.subr.mxu0 0.0
    %2629 = vmatpush2.msra.mxu0 0.0
    %2630 = vmatprep.subr.mxu0 0.0
    %2631 = vmatpush2.msra.mxu0 0.0
    %2632 = vmatprep.subr.mxu0 0.0
    %2633 = vmatpush2.msra.mxu0 0.0
    %2634 = vmatprep.subr.mxu0 0.0
    %2635 = vmatpush2.msra.mxu0 0.0
    %2636 = vmatprep.subr.mxu0 0.0
    %2637 = vmatpush2.msra.mxu0 0.0
    %2638 = vmatprep.subr.mxu0 0.0
    %2639 = vmatpush2.msra.mxu0 0.0
    %2640 = vmatprep.subr.mxu0 0.0
    %2641 = vmatpush2.msra.mxu0 0.0
    %2642 = vmatprep.subr.mxu0 0.0
    %2643 = vmatpush2.msra.mxu0 0.0
    %2644 = vmatprep.subr.mxu0 0.0
    %2645 = vmatpush2.msra.mxu0 0.0
    %2646 = vmatprep.mubr.f32.mxu0 0.0
    %2647 = vmatmul.mubr.f32.gmra.mxu0 %v197
    %v2648 = vpop.f32.mrf.mxu0
    %v2649 = vadd.f32 0.0, %v2648
    %v2650 = vpop.f32.mrf.mxu0
    %2651 = vdwg.mxu0
    %2653 = vrot.lane.b32.xlu0 %v2649, 116
    %v2654 = vpop.permute.xlu0 %2653
    %v2656 = vmin.f32 %v2480, %v2654
    %2657 = vrot.lane.b32.xlu0 %v26, 112
    %v2658 = vpop.permute.xlu0 %2657
    %2659 = vrot.lane.b32.xlu0 %v28, 112
    %v2660 = vpop.permute.xlu0 %2659
    %2661 = vrot.lane.b32.xlu0 %v30, 112
    %v2662 = vpop.permute.xlu0 %2661
    %2663 = vrot.lane.b32.xlu0 %v32, 112
    %v2664 = vpop.permute.xlu0 %2663
    %2665 = vrot.lane.b32.xlu0 %v27, 112
    %v2666 = vpop.permute.xlu0 %2665
    %2667 = vrot.lane.b32.xlu0 %v29, 112
    %v2668 = vpop.permute.xlu0 %2667
    %2669 = vrot.lane.b32.xlu0 %v31, 112
    %v2670 = vpop.permute.xlu0 %2669
    %2671 = vrot.lane.b32.xlu0 %v33, 112
    %v2672 = vpop.permute.xlu0 %2671
    %vm2673 = vcmp.lt.s32.totalorder %v84, 112
    %v2674 = vsel %vm2673, %v2658, %v2666
    %v2675 = vsel %vm2673, %v2660, %v2668
    %v2676 = vsel %vm2673, %v2662, %v2670
    %v2677 = vsel %vm2673, %v2664, %v2672
    %v2678 = vsel %vm2673, %v2666, %v2658
    %v2679 = vsel %vm2673, %v2668, %v2660
    %v2680 = vsel %vm2673, %v2670, %v2662
    %v2681 = vsel %vm2673, %v2672, %v2664
    %v2682 = vsub.f32 %v18, %v2674
    %v2683 = vsub.f32 %v19, %v2678
    %v2684 = vsub.f32 %v20, %v2675
    %v2685 = vsub.f32 %v21, %v2679
    %v2686 = vsub.f32 %v22, %v2676
    %v2687 = vsub.f32 %v23, %v2680
    %v2688 = vsub.f32 %v24, %v2677
    %v2689 = vsub.f32 %v25, %v2681
    %v2690 = vmul.f32 %v2682, %v2682
    %v2691 = vmul.f32 %v2683, %v2683
    %v2692 = vmul.f32 %v2684, %v2684
    %v2693 = vmul.f32 %v2685, %v2685
    %v2694 = vmul.f32 %v2686, %v2686
    %v2695 = vmul.f32 %v2687, %v2687
    %v2696 = vmul.f32 %v2688, %v2688
    %v2697 = vmul.f32 %v2689, %v2689
    %2698 = vmatprep.subr.mxu0 0.0
    %2699 = vmatpush1.msra.mxu0 %v49
    %2700 = vmatprep.subr.mxu0 0.0
    %2701 = vmatpush1.msra.mxu0 %v48
    %2702 = vmatprep.subr.mxu0 0.0
    %2703 = vmatpush1.msra.mxu0 %v47
    %2704 = vmatprep.subr.mxu0 0.0
    %2705 = vmatpush1.msra.mxu0 %v46
    %2706 = vmatprep.subr.mxu0 0.0
    %2707 = vmatpush1.msra.mxu0 %v45
    %2708 = vmatprep.subr.mxu0 0.0
    %2709 = vmatpush1.msra.mxu0 %v44
    %2710 = vmatprep.subr.mxu0 0.0
    %2711 = vmatpush1.msra.mxu0 %v43
    %2712 = vmatprep.subr.mxu0 0.0
    %2713 = vmatpush1.msra.mxu0 %v42
    %2714 = vmatprep.subr.mxu0 0.0
    %2715 = vmatpush1.msra.mxu0 %v41
    %2716 = vmatprep.subr.mxu0 0.0
    %2717 = vmatpush1.msra.mxu0 %v40
    %2718 = vmatprep.subr.mxu0 0.0
    %2719 = vmatpush1.msra.mxu0 %v39
    %2720 = vmatprep.subr.mxu0 0.0
    %2721 = vmatpush1.msra.mxu0 %v38
    %2722 = vmatprep.subr.mxu0 0.0
    %2723 = vmatpush1.msra.mxu0 %v37
    %2724 = vmatprep.subr.mxu0 0.0
    %2725 = vmatpush1.msra.mxu0 %v36
    %2726 = vmatprep.subr.mxu0 0.0
    %2727 = vmatpush1.msra.mxu0 %v35
    %2728 = vmatprep.subr.mxu0 0.0
    %2729 = vmatpush1.msra.mxu0 %v34
    %2730 = vmatprep.subr.mxu0 0.0
    %2731 = vmatpush2.msra.mxu0 %v65
    %2732 = vmatprep.subr.mxu0 0.0
    %2733 = vmatpush2.msra.mxu0 %v64
    %2734 = vmatprep.subr.mxu0 0.0
    %2735 = vmatpush2.msra.mxu0 %v63
    %2736 = vmatprep.subr.mxu0 0.0
    %2737 = vmatpush2.msra.mxu0 %v62
    %2738 = vmatprep.subr.mxu0 0.0
    %2739 = vmatpush2.msra.mxu0 %v61
    %2740 = vmatprep.subr.mxu0 0.0
    %2741 = vmatpush2.msra.mxu0 %v60
    %2742 = vmatprep.subr.mxu0 0.0
    %2743 = vmatpush2.msra.mxu0 %v59
    %2744 = vmatprep.subr.mxu0 0.0
    %2745 = vmatpush2.msra.mxu0 %v58
    %2746 = vmatprep.subr.mxu0 0.0
    %2747 = vmatpush2.msra.mxu0 %v57
    %2748 = vmatprep.subr.mxu0 0.0
    %2749 = vmatpush2.msra.mxu0 %v56
    %2750 = vmatprep.subr.mxu0 0.0
    %2751 = vmatpush2.msra.mxu0 %v55
    %2752 = vmatprep.subr.mxu0 0.0
    %2753 = vmatpush2.msra.mxu0 %v54
    %2754 = vmatprep.subr.mxu0 0.0
    %2755 = vmatpush2.msra.mxu0 %v53
    %2756 = vmatprep.subr.mxu0 0.0
    %2757 = vmatpush2.msra.mxu0 %v52
    %2758 = vmatprep.subr.mxu0 0.0
    %2759 = vmatpush2.msra.mxu0 %v51
    %2760 = vmatprep.subr.mxu0 0.0
    %2761 = vmatpush2.msra.mxu0 %v50
    %2762 = vmatprep.mubr.f32.mxu0 %v2691
    %2763 = vmatmul.mubr.f32.gmra.mxu0 %v2690
    %v2764 = vpop.f32.mrf.mxu0
    %v2765 = vadd.f32 0.0, %v2764
    %v2766 = vpop.f32.mrf.mxu0
    %2767 = vmatprep.mubr.f32.mxu0 %v2693
    %2768 = vmatmul.mubr.f32.gmra.mxu0 %v2692
    %v2769 = vpop.f32.mrf.mxu0
    %v2770 = vadd.f32 0.0, %v2769
    %v2771 = vpop.f32.mrf.mxu0
    %2772 = vmatprep.mubr.f32.mxu0 %v2695
    %2773 = vmatmul.mubr.f32.gmra.mxu0 %v2694
    %v2774 = vpop.f32.mrf.mxu0
    %v2775 = vadd.f32 0.0, %v2774
    %v2776 = vpop.f32.mrf.mxu0
    %2777 = vmatprep.mubr.f32.mxu0 %v2697
    %2778 = vmatmul.mubr.f32.gmra.mxu0 %v2696
    %v2779 = vpop.f32.mrf.mxu0
    %v2780 = vadd.f32 0.0, %v2779
    %v2781 = vpop.f32.mrf.mxu0
    %2782 = vdwg.mxu0
    %2783 = vmatprep.subr.mxu0 0.0
    %2784 = vmatpush1.msra.mxu0 0.0
    %2785 = vmatprep.subr.mxu0 0.0
    %2786 = vmatpush1.msra.mxu0 0.0
    %2787 = vmatprep.subr.mxu0 0.0
    %2788 = vmatpush1.msra.mxu0 0.0
    %2789 = vmatprep.subr.mxu0 0.0
    %2790 = vmatpush1.msra.mxu0 0.0
    %2791 = vmatprep.subr.mxu0 0.0
    %2792 = vmatpush1.msra.mxu0 0.0
    %2793 = vmatprep.subr.mxu0 0.0
    %2794 = vmatpush1.msra.mxu0 0.0
    %2795 = vmatprep.subr.mxu0 0.0
    %2796 = vmatpush1.msra.mxu0 0.0
    %2797 = vmatprep.subr.mxu0 0.0
    %2798 = vmatpush1.msra.mxu0 0.0
    %2799 = vmatprep.subr.mxu0 0.0
    %2800 = vmatpush1.msra.mxu0 0.0
    %2801 = vmatprep.subr.mxu0 0.0
    %2802 = vmatpush1.msra.mxu0 0.0
    %2803 = vmatprep.subr.mxu0 0.0
    %2804 = vmatpush1.msra.mxu0 0.0
    %2805 = vmatprep.subr.mxu0 0.0
    %2806 = vmatpush1.msra.mxu0 0.0
    %2807 = vmatprep.subr.mxu0 0.0
    %2808 = vmatpush1.msra.mxu0 %v2780
    %2809 = vmatprep.subr.mxu0 0.0
    %2810 = vmatpush1.msra.mxu0 %v2775
    %2811 = vmatprep.subr.mxu0 0.0
    %2812 = vmatpush1.msra.mxu0 %v2770
    %2813 = vmatprep.subr.mxu0 0.0
    %2814 = vmatpush1.msra.mxu0 %v2765
    %2815 = vmatprep.subr.mxu0 0.0
    %2816 = vmatpush2.msra.mxu0 0.0
    %2817 = vmatprep.subr.mxu0 0.0
    %2818 = vmatpush2.msra.mxu0 0.0
    %2819 = vmatprep.subr.mxu0 0.0
    %2820 = vmatpush2.msra.mxu0 0.0
    %2821 = vmatprep.subr.mxu0 0.0
    %2822 = vmatpush2.msra.mxu0 0.0
    %2823 = vmatprep.subr.mxu0 0.0
    %2824 = vmatpush2.msra.mxu0 0.0
    %2825 = vmatprep.subr.mxu0 0.0
    %2826 = vmatpush2.msra.mxu0 0.0
    %2827 = vmatprep.subr.mxu0 0.0
    %2828 = vmatpush2.msra.mxu0 0.0
    %2829 = vmatprep.subr.mxu0 0.0
    %2830 = vmatpush2.msra.mxu0 0.0
    %2831 = vmatprep.subr.mxu0 0.0
    %2832 = vmatpush2.msra.mxu0 0.0
    %2833 = vmatprep.subr.mxu0 0.0
    %2834 = vmatpush2.msra.mxu0 0.0
    %2835 = vmatprep.subr.mxu0 0.0
    %2836 = vmatpush2.msra.mxu0 0.0
    %2837 = vmatprep.subr.mxu0 0.0
    %2838 = vmatpush2.msra.mxu0 0.0
    %2839 = vmatprep.subr.mxu0 0.0
    %2840 = vmatpush2.msra.mxu0 0.0
    %2841 = vmatprep.subr.mxu0 0.0
    %2842 = vmatpush2.msra.mxu0 0.0
    %2843 = vmatprep.subr.mxu0 0.0
    %2844 = vmatpush2.msra.mxu0 0.0
    %2845 = vmatprep.subr.mxu0 0.0
    %2846 = vmatpush2.msra.mxu0 0.0
    %2847 = vmatprep.mubr.f32.mxu0 0.0
    %2848 = vmatmul.mubr.f32.gmra.mxu0 %v197
    %v2849 = vpop.f32.mrf.mxu0
    %v2850 = vadd.f32 0.0, %v2849
    %v2851 = vpop.f32.mrf.mxu0
    %2852 = vdwg.mxu0
    %2854 = vrot.lane.b32.xlu0 %v2850, 115
    %v2855 = vpop.permute.xlu0 %2854
    %v2857 = vmin.f32 %v2656, %v2855
    %2858 = vrot.lane.b32.xlu0 %v26, 96
    %v2859 = vpop.permute.xlu0 %2858
    %2860 = vrot.lane.b32.xlu0 %v28, 96
    %v2861 = vpop.permute.xlu0 %2860
    %2862 = vrot.lane.b32.xlu0 %v30, 96
    %v2863 = vpop.permute.xlu0 %2862
    %2864 = vrot.lane.b32.xlu0 %v32, 96
    %v2865 = vpop.permute.xlu0 %2864
    %2866 = vrot.lane.b32.xlu0 %v27, 96
    %v2867 = vpop.permute.xlu0 %2866
    %2868 = vrot.lane.b32.xlu0 %v29, 96
    %v2869 = vpop.permute.xlu0 %2868
    %2870 = vrot.lane.b32.xlu0 %v31, 96
    %v2871 = vpop.permute.xlu0 %2870
    %2872 = vrot.lane.b32.xlu0 %v33, 96
    %v2873 = vpop.permute.xlu0 %2872
    %vm2874 = vcmp.lt.s32.totalorder %v84, 96
    %v2875 = vsel %vm2874, %v2859, %v2867
    %v2876 = vsel %vm2874, %v2861, %v2869
    %v2877 = vsel %vm2874, %v2863, %v2871
    %v2878 = vsel %vm2874, %v2865, %v2873
    %v2879 = vsel %vm2874, %v2867, %v2859
    %v2880 = vsel %vm2874, %v2869, %v2861
    %v2881 = vsel %vm2874, %v2871, %v2863
    %v2882 = vsel %vm2874, %v2873, %v2865
    %v2883 = vsub.f32 %v18, %v2875
    %v2884 = vsub.f32 %v19, %v2879
    %v2885 = vsub.f32 %v20, %v2876
    %v2886 = vsub.f32 %v21, %v2880
    %v2887 = vsub.f32 %v22, %v2877
    %v2888 = vsub.f32 %v23, %v2881
    %v2889 = vsub.f32 %v24, %v2878
    %v2890 = vsub.f32 %v25, %v2882
    %v2891 = vmul.f32 %v2883, %v2883
    %v2892 = vmul.f32 %v2884, %v2884
    %v2893 = vmul.f32 %v2885, %v2885
    %v2894 = vmul.f32 %v2886, %v2886
    %v2895 = vmul.f32 %v2887, %v2887
    %v2896 = vmul.f32 %v2888, %v2888
    %v2897 = vmul.f32 %v2889, %v2889
    %v2898 = vmul.f32 %v2890, %v2890
    %2899 = vmatprep.subr.mxu0 0.0
    %2900 = vmatpush1.msra.mxu0 %v49
    %2901 = vmatprep.subr.mxu0 0.0
    %2902 = vmatpush1.msra.mxu0 %v48
    %2903 = vmatprep.subr.mxu0 0.0
    %2904 = vmatpush1.msra.mxu0 %v47
    %2905 = vmatprep.subr.mxu0 0.0
    %2906 = vmatpush1.msra.mxu0 %v46
    %2907 = vmatprep.subr.mxu0 0.0
    %2908 = vmatpush1.msra.mxu0 %v45
    %2909 = vmatprep.subr.mxu0 0.0
    %2910 = vmatpush1.msra.mxu0 %v44
    %2911 = vmatprep.subr.mxu0 0.0
    %2912 = vmatpush1.msra.mxu0 %v43
    %2913 = vmatprep.subr.mxu0 0.0
    %2914 = vmatpush1.msra.mxu0 %v42
    %2915 = vmatprep.subr.mxu0 0.0
    %2916 = vmatpush1.msra.mxu0 %v41
    %2917 = vmatprep.subr.mxu0 0.0
    %2918 = vmatpush1.msra.mxu0 %v40
    %2919 = vmatprep.subr.mxu0 0.0
    %2920 = vmatpush1.msra.mxu0 %v39
    %2921 = vmatprep.subr.mxu0 0.0
    %2922 = vmatpush1.msra.mxu0 %v38
    %2923 = vmatprep.subr.mxu0 0.0
    %2924 = vmatpush1.msra.mxu0 %v37
    %2925 = vmatprep.subr.mxu0 0.0
    %2926 = vmatpush1.msra.mxu0 %v36
    %2927 = vmatprep.subr.mxu0 0.0
    %2928 = vmatpush1.msra.mxu0 %v35
    %2929 = vmatprep.subr.mxu0 0.0
    %2930 = vmatpush1.msra.mxu0 %v34
    %2931 = vmatprep.subr.mxu0 0.0
    %2932 = vmatpush2.msra.mxu0 %v65
    %2933 = vmatprep.subr.mxu0 0.0
    %2934 = vmatpush2.msra.mxu0 %v64
    %2935 = vmatprep.subr.mxu0 0.0
    %2936 = vmatpush2.msra.mxu0 %v63
    %2937 = vmatprep.subr.mxu0 0.0
    %2938 = vmatpush2.msra.mxu0 %v62
    %2939 = vmatprep.subr.mxu0 0.0
    %2940 = vmatpush2.msra.mxu0 %v61
    %2941 = vmatprep.subr.mxu0 0.0
    %2942 = vmatpush2.msra.mxu0 %v60
    %2943 = vmatprep.subr.mxu0 0.0
    %2944 = vmatpush2.msra.mxu0 %v59
    %2945 = vmatprep.subr.mxu0 0.0
    %2946 = vmatpush2.msra.mxu0 %v58
    %2947 = vmatprep.subr.mxu0 0.0
    %2948 = vmatpush2.msra.mxu0 %v57
    %2949 = vmatprep.subr.mxu0 0.0
    %2950 = vmatpush2.msra.mxu0 %v56
    %2951 = vmatprep.subr.mxu0 0.0
    %2952 = vmatpush2.msra.mxu0 %v55
    %2953 = vmatprep.subr.mxu0 0.0
    %2954 = vmatpush2.msra.mxu0 %v54
    %2955 = vmatprep.subr.mxu0 0.0
    %2956 = vmatpush2.msra.mxu0 %v53
    %2957 = vmatprep.subr.mxu0 0.0
    %2958 = vmatpush2.msra.mxu0 %v52
    %2959 = vmatprep.subr.mxu0 0.0
    %2960 = vmatpush2.msra.mxu0 %v51
    %2961 = vmatprep.subr.mxu0 0.0
    %2962 = vmatpush2.msra.mxu0 %v50
    %2963 = vmatprep.mubr.f32.mxu0 %v2892
    %2964 = vmatmul.mubr.f32.gmra.mxu0 %v2891
    %v2965 = vpop.f32.mrf.mxu0
    %v2966 = vadd.f32 0.0, %v2965
    %v2967 = vpop.f32.mrf.mxu0
    %2968 = vmatprep.mubr.f32.mxu0 %v2894
    %2969 = vmatmul.mubr.f32.gmra.mxu0 %v2893
    %v2970 = vpop.f32.mrf.mxu0
    %v2971 = vadd.f32 0.0, %v2970
    %v2972 = vpop.f32.mrf.mxu0
    %2973 = vmatprep.mubr.f32.mxu0 %v2896
    %2974 = vmatmul.mubr.f32.gmra.mxu0 %v2895
    %v2975 = vpop.f32.mrf.mxu0
    %v2976 = vadd.f32 0.0, %v2975
    %v2977 = vpop.f32.mrf.mxu0
    %2978 = vmatprep.mubr.f32.mxu0 %v2898
    %2979 = vmatmul.mubr.f32.gmra.mxu0 %v2897
    %v2980 = vpop.f32.mrf.mxu0
    %v2981 = vadd.f32 0.0, %v2980
    %v2982 = vpop.f32.mrf.mxu0
    %2983 = vdwg.mxu0
    %2984 = vmatprep.subr.mxu0 0.0
    %2985 = vmatpush1.msra.mxu0 0.0
    %2986 = vmatprep.subr.mxu0 0.0
    %2987 = vmatpush1.msra.mxu0 0.0
    %2988 = vmatprep.subr.mxu0 0.0
    %2989 = vmatpush1.msra.mxu0 0.0
    %2990 = vmatprep.subr.mxu0 0.0
    %2991 = vmatpush1.msra.mxu0 0.0
    %2992 = vmatprep.subr.mxu0 0.0
    %2993 = vmatpush1.msra.mxu0 0.0
    %2994 = vmatprep.subr.mxu0 0.0
    %2995 = vmatpush1.msra.mxu0 0.0
    %2996 = vmatprep.subr.mxu0 0.0
    %2997 = vmatpush1.msra.mxu0 0.0
    %2998 = vmatprep.subr.mxu0 0.0
    %2999 = vmatpush1.msra.mxu0 0.0
    %3000 = vmatprep.subr.mxu0 0.0
    %3001 = vmatpush1.msra.mxu0 0.0
    %3002 = vmatprep.subr.mxu0 0.0
    %3003 = vmatpush1.msra.mxu0 0.0
    %3004 = vmatprep.subr.mxu0 0.0
    %3005 = vmatpush1.msra.mxu0 0.0
    %3006 = vmatprep.subr.mxu0 0.0
    %3007 = vmatpush1.msra.mxu0 0.0
    %3008 = vmatprep.subr.mxu0 0.0
    %3009 = vmatpush1.msra.mxu0 %v2981
    %3010 = vmatprep.subr.mxu0 0.0
    %3011 = vmatpush1.msra.mxu0 %v2976
    %3012 = vmatprep.subr.mxu0 0.0
    %3013 = vmatpush1.msra.mxu0 %v2971
    %3014 = vmatprep.subr.mxu0 0.0
    %3015 = vmatpush1.msra.mxu0 %v2966
    %3016 = vmatprep.subr.mxu0 0.0
    %3017 = vmatpush2.msra.mxu0 0.0
    %3018 = vmatprep.subr.mxu0 0.0
    %3019 = vmatpush2.msra.mxu0 0.0
    %3020 = vmatprep.subr.mxu0 0.0
    %3021 = vmatpush2.msra.mxu0 0.0
    %3022 = vmatprep.subr.mxu0 0.0
    %3023 = vmatpush2.msra.mxu0 0.0
    %3024 = vmatprep.subr.mxu0 0.0
    %3025 = vmatpush2.msra.mxu0 0.0
    %3026 = vmatprep.subr.mxu0 0.0
    %3027 = vmatpush2.msra.mxu0 0.0
    %3028 = vmatprep.subr.mxu0 0.0
    %3029 = vmatpush2.msra.mxu0 0.0
    %3030 = vmatprep.subr.mxu0 0.0
    %3031 = vmatpush2.msra.mxu0 0.0
    %3032 = vmatprep.subr.mxu0 0.0
    %3033 = vmatpush2.msra.mxu0 0.0
    %3034 = vmatprep.subr.mxu0 0.0
    %3035 = vmatpush2.msra.mxu0 0.0
    %3036 = vmatprep.subr.mxu0 0.0
    %3037 = vmatpush2.msra.mxu0 0.0
    %3038 = vmatprep.subr.mxu0 0.0
    %3039 = vmatpush2.msra.mxu0 0.0
    %3040 = vmatprep.subr.mxu0 0.0
    %3041 = vmatpush2.msra.mxu0 0.0
    %3042 = vmatprep.subr.mxu0 0.0
    %3043 = vmatpush2.msra.mxu0 0.0
    %3044 = vmatprep.subr.mxu0 0.0
    %3045 = vmatpush2.msra.mxu0 0.0
    %3046 = vmatprep.subr.mxu0 0.0
    %3047 = vmatpush2.msra.mxu0 0.0
    %3048 = vmatprep.mubr.f32.mxu0 0.0
    %3049 = vmatmul.mubr.f32.gmra.mxu0 %v197
    %v3050 = vpop.f32.mrf.mxu0
    %v3051 = vadd.f32 0.0, %v3050
    %v3052 = vpop.f32.mrf.mxu0
    %3053 = vdwg.mxu0
    %3055 = vrot.lane.b32.xlu0 %v3051, 114
    %v3056 = vpop.permute.xlu0 %3055
    %v3058 = vmin.f32 %v2857, %v3056
    %3059 = vrot.lane.b32.xlu0 %v26, 31
    %v3060 = vpop.permute.xlu0 %3059
    %3061 = vrot.lane.b32.xlu0 %v28, 31
    %v3062 = vpop.permute.xlu0 %3061
    %3063 = vrot.lane.b32.xlu0 %v30, 31
    %v3064 = vpop.permute.xlu0 %3063
    %3065 = vrot.lane.b32.xlu0 %v32, 31
    %v3066 = vpop.permute.xlu0 %3065
    %3067 = vrot.lane.b32.xlu0 %v27, 31
    %v3068 = vpop.permute.xlu0 %3067
    %3069 = vrot.lane.b32.xlu0 %v29, 31
    %v3070 = vpop.permute.xlu0 %3069
    %3071 = vrot.lane.b32.xlu0 %v31, 31
    %v3072 = vpop.permute.xlu0 %3071
    %3073 = vrot.lane.b32.xlu0 %v33, 31
    %v3074 = vpop.permute.xlu0 %3073
    %vm3075 = vcmp.lt.s32.totalorder %v84, 31
    %v3076 = vsel %vm3075, %v3060, %v3068
    %v3077 = vsel %vm3075, %v3062, %v3070
    %v3078 = vsel %vm3075, %v3064, %v3072
    %v3079 = vsel %vm3075, %v3066, %v3074
    %v3080 = vsel %vm3075, %v3068, %v3060
    %v3081 = vsel %vm3075, %v3070, %v3062
    %v3082 = vsel %vm3075, %v3072, %v3064
    %v3083 = vsel %vm3075, %v3074, %v3066
    %v3084 = vsub.f32 %v18, %v3080
    %v3085 = vsub.f32 %v19, %v3076
    %v3086 = vsub.f32 %v20, %v3081
    %v3087 = vsub.f32 %v21, %v3077
    %v3088 = vsub.f32 %v22, %v3082
    %v3089 = vsub.f32 %v23, %v3078
    %v3090 = vsub.f32 %v24, %v3083
    %v3091 = vsub.f32 %v25, %v3079
    %v3092 = vmul.f32 %v3084, %v3084
    %v3093 = vmul.f32 %v3085, %v3085
    %v3094 = vmul.f32 %v3086, %v3086
    %v3095 = vmul.f32 %v3087, %v3087
    %v3096 = vmul.f32 %v3088, %v3088
    %v3097 = vmul.f32 %v3089, %v3089
    %v3098 = vmul.f32 %v3090, %v3090
    %v3099 = vmul.f32 %v3091, %v3091
    %3100 = vmatprep.subr.mxu0 0.0
    %3101 = vmatpush1.msra.mxu0 %v49
    %3102 = vmatprep.subr.mxu0 0.0
    %3103 = vmatpush1.msra.mxu0 %v48
    %3104 = vmatprep.subr.mxu0 0.0
    %3105 = vmatpush1.msra.mxu0 %v47
    %3106 = vmatprep.subr.mxu0 0.0
    %3107 = vmatpush1.msra.mxu0 %v46
    %3108 = vmatprep.subr.mxu0 0.0
    %3109 = vmatpush1.msra.mxu0 %v45
    %3110 = vmatprep.subr.mxu0 0.0
    %3111 = vmatpush1.msra.mxu0 %v44
    %3112 = vmatprep.subr.mxu0 0.0
    %3113 = vmatpush1.msra.mxu0 %v43
    %3114 = vmatprep.subr.mxu0 0.0
    %3115 = vmatpush1.msra.mxu0 %v42
    %3116 = vmatprep.subr.mxu0 0.0
    %3117 = vmatpush1.msra.mxu0 %v41
    %3118 = vmatprep.subr.mxu0 0.0
    %3119 = vmatpush1.msra.mxu0 %v40
    %3120 = vmatprep.subr.mxu0 0.0
    %3121 = vmatpush1.msra.mxu0 %v39
    %3122 = vmatprep.subr.mxu0 0.0
    %3123 = vmatpush1.msra.mxu0 %v38
    %3124 = vmatprep.subr.mxu0 0.0
    %3125 = vmatpush1.msra.mxu0 %v37
    %3126 = vmatprep.subr.mxu0 0.0
    %3127 = vmatpush1.msra.mxu0 %v36
    %3128 = vmatprep.subr.mxu0 0.0
    %3129 = vmatpush1.msra.mxu0 %v35
    %3130 = vmatprep.subr.mxu0 0.0
    %3131 = vmatpush1.msra.mxu0 %v34
    %3132 = vmatprep.subr.mxu0 0.0
    %3133 = vmatpush2.msra.mxu0 %v65
    %3134 = vmatprep.subr.mxu0 0.0
    %3135 = vmatpush2.msra.mxu0 %v64
    %3136 = vmatprep.subr.mxu0 0.0
    %3137 = vmatpush2.msra.mxu0 %v63
    %3138 = vmatprep.subr.mxu0 0.0
    %3139 = vmatpush2.msra.mxu0 %v62
    %3140 = vmatprep.subr.mxu0 0.0
    %3141 = vmatpush2.msra.mxu0 %v61
    %3142 = vmatprep.subr.mxu0 0.0
    %3143 = vmatpush2.msra.mxu0 %v60
    %3144 = vmatprep.subr.mxu0 0.0
    %3145 = vmatpush2.msra.mxu0 %v59
    %3146 = vmatprep.subr.mxu0 0.0
    %3147 = vmatpush2.msra.mxu0 %v58
    %3148 = vmatprep.subr.mxu0 0.0
    %3149 = vmatpush2.msra.mxu0 %v57
    %3150 = vmatprep.subr.mxu0 0.0
    %3151 = vmatpush2.msra.mxu0 %v56
    %3152 = vmatprep.subr.mxu0 0.0
    %3153 = vmatpush2.msra.mxu0 %v55
    %3154 = vmatprep.subr.mxu0 0.0
    %3155 = vmatpush2.msra.mxu0 %v54
    %3156 = vmatprep.subr.mxu0 0.0
    %3157 = vmatpush2.msra.mxu0 %v53
    %3158 = vmatprep.subr.mxu0 0.0
    %3159 = vmatpush2.msra.mxu0 %v52
    %3160 = vmatprep.subr.mxu0 0.0
    %3161 = vmatpush2.msra.mxu0 %v51
    %3162 = vmatprep.subr.mxu0 0.0
    %3163 = vmatpush2.msra.mxu0 %v50
    %3164 = vmatprep.mubr.f32.mxu0 %v3093
    %3165 = vmatmul.mubr.f32.gmra.mxu0 %v3092
    %v3166 = vpop.f32.mrf.mxu0
    %v3167 = vadd.f32 0.0, %v3166
    %v3168 = vpop.f32.mrf.mxu0
    %3169 = vmatprep.mubr.f32.mxu0 %v3095
    %3170 = vmatmul.mubr.f32.gmra.mxu0 %v3094
    %v3171 = vpop.f32.mrf.mxu0
    %v3172 = vadd.f32 0.0, %v3171
    %v3173 = vpop.f32.mrf.mxu0
    %3174 = vmatprep.mubr.f32.mxu0 %v3097
    %3175 = vmatmul.mubr.f32.gmra.mxu0 %v3096
    %v3176 = vpop.f32.mrf.mxu0
    %v3177 = vadd.f32 0.0, %v3176
    %v3178 = vpop.f32.mrf.mxu0
    %3179 = vmatprep.mubr.f32.mxu0 %v3099
    %3180 = vmatmul.mubr.f32.gmra.mxu0 %v3098
    %v3181 = vpop.f32.mrf.mxu0
    %v3182 = vadd.f32 0.0, %v3181
    %v3183 = vpop.f32.mrf.mxu0
    %3184 = vdwg.mxu0
    %3185 = vmatprep.subr.mxu0 0.0
    %3186 = vmatpush1.msra.mxu0 0.0
    %3187 = vmatprep.subr.mxu0 0.0
    %3188 = vmatpush1.msra.mxu0 0.0
    %3189 = vmatprep.subr.mxu0 0.0
    %3190 = vmatpush1.msra.mxu0 0.0
    %3191 = vmatprep.subr.mxu0 0.0
    %3192 = vmatpush1.msra.mxu0 0.0
    %3193 = vmatprep.subr.mxu0 0.0
    %3194 = vmatpush1.msra.mxu0 0.0
    %3195 = vmatprep.subr.mxu0 0.0
    %3196 = vmatpush1.msra.mxu0 0.0
    %3197 = vmatprep.subr.mxu0 0.0
    %3198 = vmatpush1.msra.mxu0 0.0
    %3199 = vmatprep.subr.mxu0 0.0
    %3200 = vmatpush1.msra.mxu0 0.0
    %3201 = vmatprep.subr.mxu0 0.0
    %3202 = vmatpush1.msra.mxu0 0.0
    %3203 = vmatprep.subr.mxu0 0.0
    %3204 = vmatpush1.msra.mxu0 0.0
    %3205 = vmatprep.subr.mxu0 0.0
    %3206 = vmatpush1.msra.mxu0 0.0
    %3207 = vmatprep.subr.mxu0 0.0
    %3208 = vmatpush1.msra.mxu0 0.0
    %3209 = vmatprep.subr.mxu0 0.0
    %3210 = vmatpush1.msra.mxu0 %v3182
    %3211 = vmatprep.subr.mxu0 0.0
    %3212 = vmatpush1.msra.mxu0 %v3177
    %3213 = vmatprep.subr.mxu0 0.0
    %3214 = vmatpush1.msra.mxu0 %v3172
    %3215 = vmatprep.subr.mxu0 0.0
    %3216 = vmatpush1.msra.mxu0 %v3167
    %3217 = vmatprep.subr.mxu0 0.0
    %3218 = vmatpush2.msra.mxu0 0.0
    %3219 = vmatprep.subr.mxu0 0.0
    %3220 = vmatpush2.msra.mxu0 0.0
    %3221 = vmatprep.subr.mxu0 0.0
    %3222 = vmatpush2.msra.mxu0 0.0
    %3223 = vmatprep.subr.mxu0 0.0
    %3224 = vmatpush2.msra.mxu0 0.0
    %3225 = vmatprep.subr.mxu0 0.0
    %3226 = vmatpush2.msra.mxu0 0.0
    %3227 = vmatprep.subr.mxu0 0.0
    %3228 = vmatpush2.msra.mxu0 0.0
    %3229 = vmatprep.subr.mxu0 0.0
    %3230 = vmatpush2.msra.mxu0 0.0
    %3231 = vmatprep.subr.mxu0 0.0
    %3232 = vmatpush2.msra.mxu0 0.0
    %3233 = vmatprep.subr.mxu0 0.0
    %3234 = vmatpush2.msra.mxu0 0.0
    %3235 = vmatprep.subr.mxu0 0.0
    %3236 = vmatpush2.msra.mxu0 0.0
    %3237 = vmatprep.subr.mxu0 0.0
    %3238 = vmatpush2.msra.mxu0 0.0
    %3239 = vmatprep.subr.mxu0 0.0
    %3240 = vmatpush2.msra.mxu0 0.0
    %3241 = vmatprep.subr.mxu0 0.0
    %3242 = vmatpush2.msra.mxu0 0.0
    %3243 = vmatprep.subr.mxu0 0.0
    %3244 = vmatpush2.msra.mxu0 0.0
    %3245 = vmatprep.subr.mxu0 0.0
    %3246 = vmatpush2.msra.mxu0 0.0
    %3247 = vmatprep.subr.mxu0 0.0
    %3248 = vmatpush2.msra.mxu0 0.0
    %3249 = vmatprep.mubr.f32.mxu0 0.0
    %3250 = vmatmul.mubr.f32.gmra.mxu0 %v197
    %v3251 = vpop.f32.mrf.mxu0
    %v3252 = vadd.f32 0.0, %v3251
    %v3253 = vpop.f32.mrf.mxu0
    %3254 = vdwg.mxu0
    %3256 = vrot.lane.b32.xlu0 %v3252, 113
    %v3257 = vpop.permute.xlu0 %3256
    %v3259 = vmin.f32 %v3058, %v3257
    %3260 = vrot.lane.b32.xlu0 %v26, 15
    %v3261 = vpop.permute.xlu0 %3260
    %3262 = vrot.lane.b32.xlu0 %v28, 15
    %v3263 = vpop.permute.xlu0 %3262
    %3264 = vrot.lane.b32.xlu0 %v30, 15
    %v3265 = vpop.permute.xlu0 %3264
    %3266 = vrot.lane.b32.xlu0 %v32, 15
    %v3267 = vpop.permute.xlu0 %3266
    %3268 = vrot.lane.b32.xlu0 %v27, 15
    %v3269 = vpop.permute.xlu0 %3268
    %3270 = vrot.lane.b32.xlu0 %v29, 15
    %v3271 = vpop.permute.xlu0 %3270
    %3272 = vrot.lane.b32.xlu0 %v31, 15
    %v3273 = vpop.permute.xlu0 %3272
    %3274 = vrot.lane.b32.xlu0 %v33, 15
    %v3275 = vpop.permute.xlu0 %3274
    %vm3276 = vcmp.lt.s32.totalorder %v84, 15
    %v3277 = vsel %vm3276, %v3261, %v3269
    %v3278 = vsel %vm3276, %v3263, %v3271
    %v3279 = vsel %vm3276, %v3265, %v3273
    %v3280 = vsel %vm3276, %v3267, %v3275
    %v3281 = vsel %vm3276, %v3269, %v3261
    %v3282 = vsel %vm3276, %v3271, %v3263
    %v3283 = vsel %vm3276, %v3273, %v3265
    %v3284 = vsel %vm3276, %v3275, %v3267
    %v3285 = vsub.f32 %v18, %v3281
    %v3286 = vsub.f32 %v19, %v3277
    %v3287 = vsub.f32 %v20, %v3282
    %v3288 = vsub.f32 %v21, %v3278
    %v3289 = vsub.f32 %v22, %v3283
    %v3290 = vsub.f32 %v23, %v3279
    %v3291 = vsub.f32 %v24, %v3284
    %v3292 = vsub.f32 %v25, %v3280
    %v3293 = vmul.f32 %v3285, %v3285
    %v3294 = vmul.f32 %v3286, %v3286
    %v3295 = vmul.f32 %v3287, %v3287
    %v3296 = vmul.f32 %v3288, %v3288
    %v3297 = vmul.f32 %v3289, %v3289
    %v3298 = vmul.f32 %v3290, %v3290
    %v3299 = vmul.f32 %v3291, %v3291
    %v3300 = vmul.f32 %v3292, %v3292
    %3301 = vmatprep.subr.mxu0 0.0
    %3302 = vmatpush1.msra.mxu0 %v49
    %3303 = vmatprep.subr.mxu0 0.0
    %3304 = vmatpush1.msra.mxu0 %v48
    %3305 = vmatprep.subr.mxu0 0.0
    %3306 = vmatpush1.msra.mxu0 %v47
    %3307 = vmatprep.subr.mxu0 0.0
    %3308 = vmatpush1.msra.mxu0 %v46
    %3309 = vmatprep.subr.mxu0 0.0
    %3310 = vmatpush1.msra.mxu0 %v45
    %3311 = vmatprep.subr.mxu0 0.0
    %3312 = vmatpush1.msra.mxu0 %v44
    %3313 = vmatprep.subr.mxu0 0.0
    %3314 = vmatpush1.msra.mxu0 %v43
    %3315 = vmatprep.subr.mxu0 0.0
    %3316 = vmatpush1.msra.mxu0 %v42
    %3317 = vmatprep.subr.mxu0 0.0
    %3318 = vmatpush1.msra.mxu0 %v41
    %3319 = vmatprep.subr.mxu0 0.0
    %3320 = vmatpush1.msra.mxu0 %v40
    %3321 = vmatprep.subr.mxu0 0.0
    %3322 = vmatpush1.msra.mxu0 %v39
    %3323 = vmatprep.subr.mxu0 0.0
    %3324 = vmatpush1.msra.mxu0 %v38
    %3325 = vmatprep.subr.mxu0 0.0
    %3326 = vmatpush1.msra.mxu0 %v37
    %3327 = vmatprep.subr.mxu0 0.0
    %3328 = vmatpush1.msra.mxu0 %v36
    %3329 = vmatprep.subr.mxu0 0.0
    %3330 = vmatpush1.msra.mxu0 %v35
    %3331 = vmatprep.subr.mxu0 0.0
    %3332 = vmatpush1.msra.mxu0 %v34
    %3333 = vmatprep.subr.mxu0 0.0
    %3334 = vmatpush2.msra.mxu0 %v65
    %3335 = vmatprep.subr.mxu0 0.0
    %3336 = vmatpush2.msra.mxu0 %v64
    %3337 = vmatprep.subr.mxu0 0.0
    %3338 = vmatpush2.msra.mxu0 %v63
    %3339 = vmatprep.subr.mxu0 0.0
    %3340 = vmatpush2.msra.mxu0 %v62
    %3341 = vmatprep.subr.mxu0 0.0
    %3342 = vmatpush2.msra.mxu0 %v61
    %3343 = vmatprep.subr.mxu0 0.0
    %3344 = vmatpush2.msra.mxu0 %v60
    %3345 = vmatprep.subr.mxu0 0.0
    %3346 = vmatpush2.msra.mxu0 %v59
    %3347 = vmatprep.subr.mxu0 0.0
    %3348 = vmatpush2.msra.mxu0 %v58
    %3349 = vmatprep.subr.mxu0 0.0
    %3350 = vmatpush2.msra.mxu0 %v57
    %3351 = vmatprep.subr.mxu0 0.0
    %3352 = vmatpush2.msra.mxu0 %v56
    %3353 = vmatprep.subr.mxu0 0.0
    %3354 = vmatpush2.msra.mxu0 %v55
    %3355 = vmatprep.subr.mxu0 0.0
    %3356 = vmatpush2.msra.mxu0 %v54
    %3357 = vmatprep.subr.mxu0 0.0
    %3358 = vmatpush2.msra.mxu0 %v53
    %3359 = vmatprep.subr.mxu0 0.0
    %3360 = vmatpush2.msra.mxu0 %v52
    %3361 = vmatprep.subr.mxu0 0.0
    %3362 = vmatpush2.msra.mxu0 %v51
    %3363 = vmatprep.subr.mxu0 0.0
    %3364 = vmatpush2.msra.mxu0 %v50
    %3365 = vmatprep.mubr.f32.mxu0 %v3294
    %3366 = vmatmul.mubr.f32.gmra.mxu0 %v3293
    %v3367 = vpop.f32.mrf.mxu0
    %v3368 = vadd.f32 0.0, %v3367
    %v3369 = vpop.f32.mrf.mxu0
    %3370 = vmatprep.mubr.f32.mxu0 %v3296
    %3371 = vmatmul.mubr.f32.gmra.mxu0 %v3295
    %v3372 = vpop.f32.mrf.mxu0
    %v3373 = vadd.f32 0.0, %v3372
    %v3374 = vpop.f32.mrf.mxu0
    %3375 = vmatprep.mubr.f32.mxu0 %v3298
    %3376 = vmatmul.mubr.f32.gmra.mxu0 %v3297
    %v3377 = vpop.f32.mrf.mxu0
    %v3378 = vadd.f32 0.0, %v3377
    %v3379 = vpop.f32.mrf.mxu0
    %3380 = vmatprep.mubr.f32.mxu0 %v3300
    %3381 = vmatmul.mubr.f32.gmra.mxu0 %v3299
    %v3382 = vpop.f32.mrf.mxu0
    %v3383 = vadd.f32 0.0, %v3382
    %v3384 = vpop.f32.mrf.mxu0
    %3385 = vdwg.mxu0
    %3386 = vmatprep.subr.mxu0 0.0
    %3387 = vmatpush1.msra.mxu0 0.0
    %3388 = vmatprep.subr.mxu0 0.0
    %3389 = vmatpush1.msra.mxu0 0.0
    %3390 = vmatprep.subr.mxu0 0.0
    %3391 = vmatpush1.msra.mxu0 0.0
    %3392 = vmatprep.subr.mxu0 0.0
    %3393 = vmatpush1.msra.mxu0 0.0
    %3394 = vmatprep.subr.mxu0 0.0
    %3395 = vmatpush1.msra.mxu0 0.0
    %3396 = vmatprep.subr.mxu0 0.0
    %3397 = vmatpush1.msra.mxu0 0.0
    %3398 = vmatprep.subr.mxu0 0.0
    %3399 = vmatpush1.msra.mxu0 0.0
    %3400 = vmatprep.subr.mxu0 0.0
    %3401 = vmatpush1.msra.mxu0 0.0
    %3402 = vmatprep.subr.mxu0 0.0
    %3403 = vmatpush1.msra.mxu0 0.0
    %3404 = vmatprep.subr.mxu0 0.0
    %3405 = vmatpush1.msra.mxu0 0.0
    %3406 = vmatprep.subr.mxu0 0.0
    %3407 = vmatpush1.msra.mxu0 0.0
    %3408 = vmatprep.subr.mxu0 0.0
    %3409 = vmatpush1.msra.mxu0 0.0
    %3410 = vmatprep.subr.mxu0 0.0
    %3411 = vmatpush1.msra.mxu0 %v3383
    %3412 = vmatprep.subr.mxu0 0.0
    %3413 = vmatpush1.msra.mxu0 %v3378
    %3414 = vmatprep.subr.mxu0 0.0
    %3415 = vmatpush1.msra.mxu0 %v3373
    %3416 = vmatprep.subr.mxu0 0.0
    %3417 = vmatpush1.msra.mxu0 %v3368
    %3418 = vmatprep.subr.mxu0 0.0
    %3419 = vmatpush2.msra.mxu0 0.0
    %3420 = vmatprep.subr.mxu0 0.0
    %3421 = vmatpush2.msra.mxu0 0.0
    %3422 = vmatprep.subr.mxu0 0.0
    %3423 = vmatpush2.msra.mxu0 0.0
    %3424 = vmatprep.subr.mxu0 0.0
    %3425 = vmatpush2.msra.mxu0 0.0
    %3426 = vmatprep.subr.mxu0 0.0
    %3427 = vmatpush2.msra.mxu0 0.0
    %3428 = vmatprep.subr.mxu0 0.0
    %3429 = vmatpush2.msra.mxu0 0.0
    %3430 = vmatprep.subr.mxu0 0.0
    %3431 = vmatpush2.msra.mxu0 0.0
    %3432 = vmatprep.subr.mxu0 0.0
    %3433 = vmatpush2.msra.mxu0 0.0
    %3434 = vmatprep.subr.mxu0 0.0
    %3435 = vmatpush2.msra.mxu0 0.0
    %3436 = vmatprep.subr.mxu0 0.0
    %3437 = vmatpush2.msra.mxu0 0.0
    %3438 = vmatprep.subr.mxu0 0.0
    %3439 = vmatpush2.msra.mxu0 0.0
    %3440 = vmatprep.subr.mxu0 0.0
    %3441 = vmatpush2.msra.mxu0 0.0
    %3442 = vmatprep.subr.mxu0 0.0
    %3443 = vmatpush2.msra.mxu0 0.0
    %3444 = vmatprep.subr.mxu0 0.0
    %3445 = vmatpush2.msra.mxu0 0.0
    %3446 = vmatprep.subr.mxu0 0.0
    %3447 = vmatpush2.msra.mxu0 0.0
    %3448 = vmatprep.subr.mxu0 0.0
    %3449 = vmatpush2.msra.mxu0 0.0
    %3450 = vmatprep.mubr.f32.mxu0 0.0
    %3451 = vmatmul.mubr.f32.gmra.mxu0 %v197
    %v3452 = vpop.f32.mrf.mxu0
    %v3453 = vadd.f32 0.0, %v3452
    %v3454 = vpop.f32.mrf.mxu0
    %3455 = vdwg.mxu0
    %3457 = vrot.lane.b32.xlu0 %v3453, 112
    %v3458 = vpop.permute.xlu0 %3457
    %v3460 = vmin.f32 %v3259, %v3458
    %3461 = vrot.lane.b32.xlu0 %v26, 127
    %v3462 = vpop.permute.xlu0 %3461
    %3463 = vrot.lane.b32.xlu0 %v28, 127
    %v3464 = vpop.permute.xlu0 %3463
    %3465 = vrot.lane.b32.xlu0 %v30, 127
    %v3466 = vpop.permute.xlu0 %3465
    %3467 = vrot.lane.b32.xlu0 %v32, 127
    %v3468 = vpop.permute.xlu0 %3467
    %3469 = vrot.lane.b32.xlu0 %v27, 127
    %v3470 = vpop.permute.xlu0 %3469
    %3471 = vrot.lane.b32.xlu0 %v29, 127
    %v3472 = vpop.permute.xlu0 %3471
    %3473 = vrot.lane.b32.xlu0 %v31, 127
    %v3474 = vpop.permute.xlu0 %3473
    %3475 = vrot.lane.b32.xlu0 %v33, 127
    %v3476 = vpop.permute.xlu0 %3475
    %vm3477 = vcmp.lt.s32.totalorder %v84, 127
    %v3478 = vsel %vm3477, %v3462, %v3470
    %v3479 = vsel %vm3477, %v3464, %v3472
    %v3480 = vsel %vm3477, %v3466, %v3474
    %v3481 = vsel %vm3477, %v3468, %v3476
    %v3482 = vsel %vm3477, %v3470, %v3462
    %v3483 = vsel %vm3477, %v3472, %v3464
    %v3484 = vsel %vm3477, %v3474, %v3466
    %v3485 = vsel %vm3477, %v3476, %v3468
    %v3486 = vsub.f32 %v18, %v3478
    %v3487 = vsub.f32 %v19, %v3482
    %v3488 = vsub.f32 %v20, %v3479
    %v3489 = vsub.f32 %v21, %v3483
    %v3490 = vsub.f32 %v22, %v3480
    %v3491 = vsub.f32 %v23, %v3484
    %v3492 = vsub.f32 %v24, %v3481
    %v3493 = vsub.f32 %v25, %v3485
    %v3494 = vmul.f32 %v3486, %v3486
    %v3495 = vmul.f32 %v3487, %v3487
    %v3496 = vmul.f32 %v3488, %v3488
    %v3497 = vmul.f32 %v3489, %v3489
    %v3498 = vmul.f32 %v3490, %v3490
    %v3499 = vmul.f32 %v3491, %v3491
    %v3500 = vmul.f32 %v3492, %v3492
    %v3501 = vmul.f32 %v3493, %v3493
    %3502 = vmatprep.subr.mxu0 0.0
    %3503 = vmatpush1.msra.mxu0 %v49
    %3504 = vmatprep.subr.mxu0 0.0
    %3505 = vmatpush1.msra.mxu0 %v48
    %3506 = vmatprep.subr.mxu0 0.0
    %3507 = vmatpush1.msra.mxu0 %v47
    %3508 = vmatprep.subr.mxu0 0.0
    %3509 = vmatpush1.msra.mxu0 %v46
    %3510 = vmatprep.subr.mxu0 0.0
    %3511 = vmatpush1.msra.mxu0 %v45
    %3512 = vmatprep.subr.mxu0 0.0
    %3513 = vmatpush1.msra.mxu0 %v44
    %3514 = vmatprep.subr.mxu0 0.0
    %3515 = vmatpush1.msra.mxu0 %v43
    %3516 = vmatprep.subr.mxu0 0.0
    %3517 = vmatpush1.msra.mxu0 %v42
    %3518 = vmatprep.subr.mxu0 0.0
    %3519 = vmatpush1.msra.mxu0 %v41
    %3520 = vmatprep.subr.mxu0 0.0
    %3521 = vmatpush1.msra.mxu0 %v40
    %3522 = vmatprep.subr.mxu0 0.0
    %3523 = vmatpush1.msra.mxu0 %v39
    %3524 = vmatprep.subr.mxu0 0.0
    %3525 = vmatpush1.msra.mxu0 %v38
    %3526 = vmatprep.subr.mxu0 0.0
    %3527 = vmatpush1.msra.mxu0 %v37
    %3528 = vmatprep.subr.mxu0 0.0
    %3529 = vmatpush1.msra.mxu0 %v36
    %3530 = vmatprep.subr.mxu0 0.0
    %3531 = vmatpush1.msra.mxu0 %v35
    %3532 = vmatprep.subr.mxu0 0.0
    %3533 = vmatpush1.msra.mxu0 %v34
    %3534 = vmatprep.subr.mxu0 0.0
    %3535 = vmatpush2.msra.mxu0 %v65
    %3536 = vmatprep.subr.mxu0 0.0
    %3537 = vmatpush2.msra.mxu0 %v64
    %3538 = vmatprep.subr.mxu0 0.0
    %3539 = vmatpush2.msra.mxu0 %v63
    %3540 = vmatprep.subr.mxu0 0.0
    %3541 = vmatpush2.msra.mxu0 %v62
    %3542 = vmatprep.subr.mxu0 0.0
    %3543 = vmatpush2.msra.mxu0 %v61
    %3544 = vmatprep.subr.mxu0 0.0
    %3545 = vmatpush2.msra.mxu0 %v60
    %3546 = vmatprep.subr.mxu0 0.0
    %3547 = vmatpush2.msra.mxu0 %v59
    %3548 = vmatprep.subr.mxu0 0.0
    %3549 = vmatpush2.msra.mxu0 %v58
    %3550 = vmatprep.subr.mxu0 0.0
    %3551 = vmatpush2.msra.mxu0 %v57
    %3552 = vmatprep.subr.mxu0 0.0
    %3553 = vmatpush2.msra.mxu0 %v56
    %3554 = vmatprep.subr.mxu0 0.0
    %3555 = vmatpush2.msra.mxu0 %v55
    %3556 = vmatprep.subr.mxu0 0.0
    %3557 = vmatpush2.msra.mxu0 %v54
    %3558 = vmatprep.subr.mxu0 0.0
    %3559 = vmatpush2.msra.mxu0 %v53
    %3560 = vmatprep.subr.mxu0 0.0
    %3561 = vmatpush2.msra.mxu0 %v52
    %3562 = vmatprep.subr.mxu0 0.0
    %3563 = vmatpush2.msra.mxu0 %v51
    %3564 = vmatprep.subr.mxu0 0.0
    %3565 = vmatpush2.msra.mxu0 %v50
    %3566 = vmatprep.mubr.f32.mxu0 %v3495
    %3567 = vmatmul.mubr.f32.gmra.mxu0 %v3494
    %v3568 = vpop.f32.mrf.mxu0
    %v3569 = vadd.f32 0.0, %v3568
    %v3570 = vpop.f32.mrf.mxu0
    %3571 = vmatprep.mubr.f32.mxu0 %v3497
    %3572 = vmatmul.mubr.f32.gmra.mxu0 %v3496
    %v3573 = vpop.f32.mrf.mxu0
    %v3574 = vadd.f32 0.0, %v3573
    %v3575 = vpop.f32.mrf.mxu0
    %3576 = vmatprep.mubr.f32.mxu0 %v3499
    %3577 = vmatmul.mubr.f32.gmra.mxu0 %v3498
    %v3578 = vpop.f32.mrf.mxu0
    %v3579 = vadd.f32 0.0, %v3578
    %v3580 = vpop.f32.mrf.mxu0
    %3581 = vmatprep.mubr.f32.mxu0 %v3501
    %3582 = vmatmul.mubr.f32.gmra.mxu0 %v3500
    %v3583 = vpop.f32.mrf.mxu0
    %v3584 = vadd.f32 0.0, %v3583
    %v3585 = vpop.f32.mrf.mxu0
    %3586 = vdwg.mxu0
    %3587 = vmatprep.subr.mxu0 0.0
    %3588 = vmatpush1.msra.mxu0 0.0
    %3589 = vmatprep.subr.mxu0 0.0
    %3590 = vmatpush1.msra.mxu0 0.0
    %3591 = vmatprep.subr.mxu0 0.0
    %3592 = vmatpush1.msra.mxu0 0.0
    %3593 = vmatprep.subr.mxu0 0.0
    %3594 = vmatpush1.msra.mxu0 0.0
    %3595 = vmatprep.subr.mxu0 0.0
    %3596 = vmatpush1.msra.mxu0 0.0
    %3597 = vmatprep.subr.mxu0 0.0
    %3598 = vmatpush1.msra.mxu0 0.0
    %3599 = vmatprep.subr.mxu0 0.0
    %3600 = vmatpush1.msra.mxu0 0.0
    %3601 = vmatprep.subr.mxu0 0.0
    %3602 = vmatpush1.msra.mxu0 0.0
    %3603 = vmatprep.subr.mxu0 0.0
    %3604 = vmatpush1.msra.mxu0 0.0
    %3605 = vmatprep.subr.mxu0 0.0
    %3606 = vmatpush1.msra.mxu0 0.0
    %3607 = vmatprep.subr.mxu0 0.0
    %3608 = vmatpush1.msra.mxu0 0.0
    %3609 = vmatprep.subr.mxu0 0.0
    %3610 = vmatpush1.msra.mxu0 0.0
    %3611 = vmatprep.subr.mxu0 0.0
    %3612 = vmatpush1.msra.mxu0 %v3584
    %3613 = vmatprep.subr.mxu0 0.0
    %3614 = vmatpush1.msra.mxu0 %v3579
    %3615 = vmatprep.subr.mxu0 0.0
    %3616 = vmatpush1.msra.mxu0 %v3574
    %3617 = vmatprep.subr.mxu0 0.0
    %3618 = vmatpush1.msra.mxu0 %v3569
    %3619 = vmatprep.subr.mxu0 0.0
    %3620 = vmatpush2.msra.mxu0 0.0
    %3621 = vmatprep.subr.mxu0 0.0
    %3622 = vmatpush2.msra.mxu0 0.0
    %3623 = vmatprep.subr.mxu0 0.0
    %3624 = vmatpush2.msra.mxu0 0.0
    %3625 = vmatprep.subr.mxu0 0.0
    %3626 = vmatpush2.msra.mxu0 0.0
    %3627 = vmatprep.subr.mxu0 0.0
    %3628 = vmatpush2.msra.mxu0 0.0
    %3629 = vmatprep.subr.mxu0 0.0
    %3630 = vmatpush2.msra.mxu0 0.0
    %3631 = vmatprep.subr.mxu0 0.0
    %3632 = vmatpush2.msra.mxu0 0.0
    %3633 = vmatprep.subr.mxu0 0.0
    %3634 = vmatpush2.msra.mxu0 0.0
    %3635 = vmatprep.subr.mxu0 0.0
    %3636 = vmatpush2.msra.mxu0 0.0
    %3637 = vmatprep.subr.mxu0 0.0
    %3638 = vmatpush2.msra.mxu0 0.0
    %3639 = vmatprep.subr.mxu0 0.0
    %3640 = vmatpush2.msra.mxu0 0.0
    %3641 = vmatprep.subr.mxu0 0.0
    %3642 = vmatpush2.msra.mxu0 0.0
    %3643 = vmatprep.subr.mxu0 0.0
    %3644 = vmatpush2.msra.mxu0 0.0
    %3645 = vmatprep.subr.mxu0 0.0
    %3646 = vmatpush2.msra.mxu0 0.0
    %3647 = vmatprep.subr.mxu0 0.0
    %3648 = vmatpush2.msra.mxu0 0.0
    %3649 = vmatprep.subr.mxu0 0.0
    %3650 = vmatpush2.msra.mxu0 0.0
    %3651 = vmatprep.mubr.f32.mxu0 0.0
    %3652 = vmatmul.mubr.f32.gmra.mxu0 %v197
    %v3653 = vpop.f32.mrf.mxu0
    %v3654 = vadd.f32 0.0, %v3653
    %v3655 = vpop.f32.mrf.mxu0
    %3656 = vdwg.mxu0
    %3658 = vrot.lane.b32.xlu0 %v3654, 111
    %v3659 = vpop.permute.xlu0 %3658
    %v3661 = vmin.f32 %v3460, %v3659
    %3662 = vrot.lane.b32.xlu0 %v26, 111
    %v3663 = vpop.permute.xlu0 %3662
    %3664 = vrot.lane.b32.xlu0 %v28, 111
    %v3665 = vpop.permute.xlu0 %3664
    %3666 = vrot.lane.b32.xlu0 %v30, 111
    %v3667 = vpop.permute.xlu0 %3666
    %3668 = vrot.lane.b32.xlu0 %v32, 111
    %v3669 = vpop.permute.xlu0 %3668
    %3670 = vrot.lane.b32.xlu0 %v27, 111
    %v3671 = vpop.permute.xlu0 %3670
    %3672 = vrot.lane.b32.xlu0 %v29, 111
    %v3673 = vpop.permute.xlu0 %3672
    %3674 = vrot.lane.b32.xlu0 %v31, 111
    %v3675 = vpop.permute.xlu0 %3674
    %3676 = vrot.lane.b32.xlu0 %v33, 111
    %v3677 = vpop.permute.xlu0 %3676
    %vm3678 = vcmp.lt.s32.totalorder %v84, 111
    %v3679 = vsel %vm3678, %v3663, %v3671
    %v3680 = vsel %vm3678, %v3665, %v3673
    %v3681 = vsel %vm3678, %v3667, %v3675
    %v3682 = vsel %vm3678, %v3669, %v3677
    %v3683 = vsel %vm3678, %v3671, %v3663
    %v3684 = vsel %vm3678, %v3673, %v3665
    %v3685 = vsel %vm3678, %v3675, %v3667
    %v3686 = vsel %vm3678, %v3677, %v3669
    %v3687 = vsub.f32 %v18, %v3679
    %v3688 = vsub.f32 %v19, %v3683
    %v3689 = vsub.f32 %v20, %v3680
    %v3690 = vsub.f32 %v21, %v3684
    %v3691 = vsub.f32 %v22, %v3681
    %v3692 = vsub.f32 %v23, %v3685
    %v3693 = vsub.f32 %v24, %v3682
    %v3694 = vsub.f32 %v25, %v3686
    %v3695 = vmul.f32 %v3687, %v3687
    %v3696 = vmul.f32 %v3688, %v3688
    %v3697 = vmul.f32 %v3689, %v3689
    %v3698 = vmul.f32 %v3690, %v3690
    %v3699 = vmul.f32 %v3691, %v3691
    %v3700 = vmul.f32 %v3692, %v3692
    %v3701 = vmul.f32 %v3693, %v3693
    %v3702 = vmul.f32 %v3694, %v3694
    %3703 = vmatprep.subr.mxu0 0.0
    %3704 = vmatpush1.msra.mxu0 %v49
    %3705 = vmatprep.subr.mxu0 0.0
    %3706 = vmatpush1.msra.mxu0 %v48
    %3707 = vmatprep.subr.mxu0 0.0
    %3708 = vmatpush1.msra.mxu0 %v47
    %3709 = vmatprep.subr.mxu0 0.0
    %3710 = vmatpush1.msra.mxu0 %v46
    %3711 = vmatprep.subr.mxu0 0.0
    %3712 = vmatpush1.msra.mxu0 %v45
    %3713 = vmatprep.subr.mxu0 0.0
    %3714 = vmatpush1.msra.mxu0 %v44
    %3715 = vmatprep.subr.mxu0 0.0
    %3716 = vmatpush1.msra.mxu0 %v43
    %3717 = vmatprep.subr.mxu0 0.0
    %3718 = vmatpush1.msra.mxu0 %v42
    %3719 = vmatprep.subr.mxu0 0.0
    %3720 = vmatpush1.msra.mxu0 %v41
    %3721 = vmatprep.subr.mxu0 0.0
    %3722 = vmatpush1.msra.mxu0 %v40
    %3723 = vmatprep.subr.mxu0 0.0
    %3724 = vmatpush1.msra.mxu0 %v39
    %3725 = vmatprep.subr.mxu0 0.0
    %3726 = vmatpush1.msra.mxu0 %v38
    %3727 = vmatprep.subr.mxu0 0.0
    %3728 = vmatpush1.msra.mxu0 %v37
    %3729 = vmatprep.subr.mxu0 0.0
    %3730 = vmatpush1.msra.mxu0 %v36
    %3731 = vmatprep.subr.mxu0 0.0
    %3732 = vmatpush1.msra.mxu0 %v35
    %3733 = vmatprep.subr.mxu0 0.0
    %3734 = vmatpush1.msra.mxu0 %v34
    %3735 = vmatprep.subr.mxu0 0.0
    %3736 = vmatpush2.msra.mxu0 %v65
    %3737 = vmatprep.subr.mxu0 0.0
    %3738 = vmatpush2.msra.mxu0 %v64
    %3739 = vmatprep.subr.mxu0 0.0
    %3740 = vmatpush2.msra.mxu0 %v63
    %3741 = vmatprep.subr.mxu0 0.0
    %3742 = vmatpush2.msra.mxu0 %v62
    %3743 = vmatprep.subr.mxu0 0.0
    %3744 = vmatpush2.msra.mxu0 %v61
    %3745 = vmatprep.subr.mxu0 0.0
    %3746 = vmatpush2.msra.mxu0 %v60
    %3747 = vmatprep.subr.mxu0 0.0
    %3748 = vmatpush2.msra.mxu0 %v59
    %3749 = vmatprep.subr.mxu0 0.0
    %3750 = vmatpush2.msra.mxu0 %v58
    %3751 = vmatprep.subr.mxu0 0.0
    %3752 = vmatpush2.msra.mxu0 %v57
    %3753 = vmatprep.subr.mxu0 0.0
    %3754 = vmatpush2.msra.mxu0 %v56
    %3755 = vmatprep.subr.mxu0 0.0
    %3756 = vmatpush2.msra.mxu0 %v55
    %3757 = vmatprep.subr.mxu0 0.0
    %3758 = vmatpush2.msra.mxu0 %v54
    %3759 = vmatprep.subr.mxu0 0.0
    %3760 = vmatpush2.msra.mxu0 %v53
    %3761 = vmatprep.subr.mxu0 0.0
    %3762 = vmatpush2.msra.mxu0 %v52
    %3763 = vmatprep.subr.mxu0 0.0
    %3764 = vmatpush2.msra.mxu0 %v51
    %3765 = vmatprep.subr.mxu0 0.0
    %3766 = vmatpush2.msra.mxu0 %v50
    %3767 = vmatprep.mubr.f32.mxu0 %v3696
    %3768 = vmatmul.mubr.f32.gmra.mxu0 %v3695
    %v3769 = vpop.f32.mrf.mxu0
    %v3770 = vadd.f32 0.0, %v3769
    %v3771 = vpop.f32.mrf.mxu0
    %3772 = vmatprep.mubr.f32.mxu0 %v3698
    %3773 = vmatmul.mubr.f32.gmra.mxu0 %v3697
    %v3774 = vpop.f32.mrf.mxu0
    %v3775 = vadd.f32 0.0, %v3774
    %v3776 = vpop.f32.mrf.mxu0
    %3777 = vmatprep.mubr.f32.mxu0 %v3700
    %3778 = vmatmul.mubr.f32.gmra.mxu0 %v3699
    %v3779 = vpop.f32.mrf.mxu0
    %v3780 = vadd.f32 0.0, %v3779
    %v3781 = vpop.f32.mrf.mxu0
    %3782 = vmatprep.mubr.f32.mxu0 %v3702
    %3783 = vmatmul.mubr.f32.gmra.mxu0 %v3701
    %v3784 = vpop.f32.mrf.mxu0
    %v3785 = vadd.f32 0.0, %v3784
    %v3786 = vpop.f32.mrf.mxu0
    %3787 = vdwg.mxu0
    %3788 = vmatprep.subr.mxu0 0.0
    %3789 = vmatpush1.msra.mxu0 0.0
    %3790 = vmatprep.subr.mxu0 0.0
    %3791 = vmatpush1.msra.mxu0 0.0
    %3792 = vmatprep.subr.mxu0 0.0
    %3793 = vmatpush1.msra.mxu0 0.0
    %3794 = vmatprep.subr.mxu0 0.0
    %3795 = vmatpush1.msra.mxu0 0.0
    %3796 = vmatprep.subr.mxu0 0.0
    %3797 = vmatpush1.msra.mxu0 0.0
    %3798 = vmatprep.subr.mxu0 0.0
    %3799 = vmatpush1.msra.mxu0 0.0
    %3800 = vmatprep.subr.mxu0 0.0
    %3801 = vmatpush1.msra.mxu0 0.0
    %3802 = vmatprep.subr.mxu0 0.0
    %3803 = vmatpush1.msra.mxu0 0.0
    %3804 = vmatprep.subr.mxu0 0.0
    %3805 = vmatpush1.msra.mxu0 0.0
    %3806 = vmatprep.subr.mxu0 0.0
    %3807 = vmatpush1.msra.mxu0 0.0
    %3808 = vmatprep.subr.mxu0 0.0
    %3809 = vmatpush1.msra.mxu0 0.0
    %3810 = vmatprep.subr.mxu0 0.0
    %3811 = vmatpush1.msra.mxu0 0.0
    %3812 = vmatprep.subr.mxu0 0.0
    %3813 = vmatpush1.msra.mxu0 %v3785
    %3814 = vmatprep.subr.mxu0 0.0
    %3815 = vmatpush1.msra.mxu0 %v3780
    %3816 = vmatprep.subr.mxu0 0.0
    %3817 = vmatpush1.msra.mxu0 %v3775
    %3818 = vmatprep.subr.mxu0 0.0
    %3819 = vmatpush1.msra.mxu0 %v3770
    %3820 = vmatprep.subr.mxu0 0.0
    %3821 = vmatpush2.msra.mxu0 0.0
    %3822 = vmatprep.subr.mxu0 0.0
    %3823 = vmatpush2.msra.mxu0 0.0
    %3824 = vmatprep.subr.mxu0 0.0
    %3825 = vmatpush2.msra.mxu0 0.0
    %3826 = vmatprep.subr.mxu0 0.0
    %3827 = vmatpush2.msra.mxu0 0.0
    %3828 = vmatprep.subr.mxu0 0.0
    %3829 = vmatpush2.msra.mxu0 0.0
    %3830 = vmatprep.subr.mxu0 0.0
    %3831 = vmatpush2.msra.mxu0 0.0
    %3832 = vmatprep.subr.mxu0 0.0
    %3833 = vmatpush2.msra.mxu0 0.0
    %3834 = vmatprep.subr.mxu0 0.0
    %3835 = vmatpush2.msra.mxu0 0.0
    %3836 = vmatprep.subr.mxu0 0.0
    %3837 = vmatpush2.msra.mxu0 0.0
    %3838 = vmatprep.subr.mxu0 0.0
    %3839 = vmatpush2.msra.mxu0 0.0
    %3840 = vmatprep.subr.mxu0 0.0
    %3841 = vmatpush2.msra.mxu0 0.0
    %3842 = vmatprep.subr.mxu0 0.0
    %3843 = vmatpush2.msra.mxu0 0.0
    %3844 = vmatprep.subr.mxu0 0.0
    %3845 = vmatpush2.msra.mxu0 0.0
    %3846 = vmatprep.subr.mxu0 0.0
    %3847 = vmatpush2.msra.mxu0 0.0
    %3848 = vmatprep.subr.mxu0 0.0
    %3849 = vmatpush2.msra.mxu0 0.0
    %3850 = vmatprep.subr.mxu0 0.0
    %3851 = vmatpush2.msra.mxu0 0.0
    %3852 = vmatprep.mubr.f32.mxu0 0.0
    %3853 = vmatmul.mubr.f32.gmra.mxu0 %v197
    %v3854 = vpop.f32.mrf.mxu0
    %v3855 = vadd.f32 0.0, %v3854
    %v3856 = vpop.f32.mrf.mxu0
    %3857 = vdwg.mxu0
    %3859 = vrot.lane.b32.xlu0 %v3855, 110
    %v3860 = vpop.permute.xlu0 %3859
    %v3862 = vmin.f32 %v3661, %v3860
    %3863 = vrot.lane.b32.xlu0 %v26, 95
    %v3864 = vpop.permute.xlu0 %3863
    %3865 = vrot.lane.b32.xlu0 %v28, 95
    %v3866 = vpop.permute.xlu0 %3865
    %3867 = vrot.lane.b32.xlu0 %v30, 95
    %v3868 = vpop.permute.xlu0 %3867
    %3869 = vrot.lane.b32.xlu0 %v32, 95
    %v3870 = vpop.permute.xlu0 %3869
    %3871 = vrot.lane.b32.xlu0 %v27, 95
    %v3872 = vpop.permute.xlu0 %3871
    %3873 = vrot.lane.b32.xlu0 %v29, 95
    %v3874 = vpop.permute.xlu0 %3873
    %3875 = vrot.lane.b32.xlu0 %v31, 95
    %v3876 = vpop.permute.xlu0 %3875
    %3877 = vrot.lane.b32.xlu0 %v33, 95
    %v3878 = vpop.permute.xlu0 %3877
    %vm3879 = vcmp.lt.s32.totalorder %v84, 95
    %v3880 = vsel %vm3879, %v3864, %v3872
    %v3881 = vsel %vm3879, %v3866, %v3874
    %v3882 = vsel %vm3879, %v3868, %v3876
    %v3883 = vsel %vm3879, %v3870, %v3878
    %v3884 = vsel %vm3879, %v3872, %v3864
    %v3885 = vsel %vm3879, %v3874, %v3866
    %v3886 = vsel %vm3879, %v3876, %v3868
    %v3887 = vsel %vm3879, %v3878, %v3870
    %v3888 = vsub.f32 %v18, %v3880
    %v3889 = vsub.f32 %v19, %v3884
    %v3890 = vsub.f32 %v20, %v3881
    %v3891 = vsub.f32 %v21, %v3885
    %v3892 = vsub.f32 %v22, %v3882
    %v3893 = vsub.f32 %v23, %v3886
    %v3894 = vsub.f32 %v24, %v3883
    %v3895 = vsub.f32 %v25, %v3887
    %v3896 = vmul.f32 %v3888, %v3888
    %v3897 = vmul.f32 %v3889, %v3889
    %v3898 = vmul.f32 %v3890, %v3890
    %v3899 = vmul.f32 %v3891, %v3891
    %v3900 = vmul.f32 %v3892, %v3892
    %v3901 = vmul.f32 %v3893, %v3893
    %v3902 = vmul.f32 %v3894, %v3894
    %v3903 = vmul.f32 %v3895, %v3895
    %3904 = vmatprep.subr.mxu0 0.0
    %3905 = vmatpush1.msra.mxu0 %v49
    %3906 = vmatprep.subr.mxu0 0.0
    %3907 = vmatpush1.msra.mxu0 %v48
    %3908 = vmatprep.subr.mxu0 0.0
    %3909 = vmatpush1.msra.mxu0 %v47
    %3910 = vmatprep.subr.mxu0 0.0
    %3911 = vmatpush1.msra.mxu0 %v46
    %3912 = vmatprep.subr.mxu0 0.0
    %3913 = vmatpush1.msra.mxu0 %v45
    %3914 = vmatprep.subr.mxu0 0.0
    %3915 = vmatpush1.msra.mxu0 %v44
    %3916 = vmatprep.subr.mxu0 0.0
    %3917 = vmatpush1.msra.mxu0 %v43
    %3918 = vmatprep.subr.mxu0 0.0
    %3919 = vmatpush1.msra.mxu0 %v42
    %3920 = vmatprep.subr.mxu0 0.0
    %3921 = vmatpush1.msra.mxu0 %v41
    %3922 = vmatprep.subr.mxu0 0.0
    %3923 = vmatpush1.msra.mxu0 %v40
    %3924 = vmatprep.subr.mxu0 0.0
    %3925 = vmatpush1.msra.mxu0 %v39
    %3926 = vmatprep.subr.mxu0 0.0
    %3927 = vmatpush1.msra.mxu0 %v38
    %3928 = vmatprep.subr.mxu0 0.0
    %3929 = vmatpush1.msra.mxu0 %v37
    %3930 = vmatprep.subr.mxu0 0.0
    %3931 = vmatpush1.msra.mxu0 %v36
    %3932 = vmatprep.subr.mxu0 0.0
    %3933 = vmatpush1.msra.mxu0 %v35
    %3934 = vmatprep.subr.mxu0 0.0
    %3935 = vmatpush1.msra.mxu0 %v34
    %3936 = vmatprep.subr.mxu0 0.0
    %3937 = vmatpush2.msra.mxu0 %v65
    %3938 = vmatprep.subr.mxu0 0.0
    %3939 = vmatpush2.msra.mxu0 %v64
    %3940 = vmatprep.subr.mxu0 0.0
    %3941 = vmatpush2.msra.mxu0 %v63
    %3942 = vmatprep.subr.mxu0 0.0
    %3943 = vmatpush2.msra.mxu0 %v62
    %3944 = vmatprep.subr.mxu0 0.0
    %3945 = vmatpush2.msra.mxu0 %v61
    %3946 = vmatprep.subr.mxu0 0.0
    %3947 = vmatpush2.msra.mxu0 %v60
    %3948 = vmatprep.subr.mxu0 0.0
    %3949 = vmatpush2.msra.mxu0 %v59
    %3950 = vmatprep.subr.mxu0 0.0
    %3951 = vmatpush2.msra.mxu0 %v58
    %3952 = vmatprep.subr.mxu0 0.0
    %3953 = vmatpush2.msra.mxu0 %v57
    %3954 = vmatprep.subr.mxu0 0.0
    %3955 = vmatpush2.msra.mxu0 %v56
    %3956 = vmatprep.subr.mxu0 0.0
    %3957 = vmatpush2.msra.mxu0 %v55
    %3958 = vmatprep.subr.mxu0 0.0
    %3959 = vmatpush2.msra.mxu0 %v54
    %3960 = vmatprep.subr.mxu0 0.0
    %3961 = vmatpush2.msra.mxu0 %v53
    %3962 = vmatprep.subr.mxu0 0.0
    %3963 = vmatpush2.msra.mxu0 %v52
    %3964 = vmatprep.subr.mxu0 0.0
    %3965 = vmatpush2.msra.mxu0 %v51
    %3966 = vmatprep.subr.mxu0 0.0
    %3967 = vmatpush2.msra.mxu0 %v50
    %3968 = vmatprep.mubr.f32.mxu0 %v3897
    %3969 = vmatmul.mubr.f32.gmra.mxu0 %v3896
    %v3970 = vpop.f32.mrf.mxu0
    %v3971 = vadd.f32 0.0, %v3970
    %v3972 = vpop.f32.mrf.mxu0
    %3973 = vmatprep.mubr.f32.mxu0 %v3899
    %3974 = vmatmul.mubr.f32.gmra.mxu0 %v3898
    %v3975 = vpop.f32.mrf.mxu0
    %v3976 = vadd.f32 0.0, %v3975
    %v3977 = vpop.f32.mrf.mxu0
    %3978 = vmatprep.mubr.f32.mxu0 %v3901
    %3979 = vmatmul.mubr.f32.gmra.mxu0 %v3900
    %v3980 = vpop.f32.mrf.mxu0
    %v3981 = vadd.f32 0.0, %v3980
    %v3982 = vpop.f32.mrf.mxu0
    %3983 = vmatprep.mubr.f32.mxu0 %v3903
    %3984 = vmatmul.mubr.f32.gmra.mxu0 %v3902
    %v3985 = vpop.f32.mrf.mxu0
    %v3986 = vadd.f32 0.0, %v3985
    %v3987 = vpop.f32.mrf.mxu0
    %3988 = vdwg.mxu0
    %3989 = vmatprep.subr.mxu0 0.0
    %3990 = vmatpush1.msra.mxu0 0.0
    %3991 = vmatprep.subr.mxu0 0.0
    %3992 = vmatpush1.msra.mxu0 0.0
    %3993 = vmatprep.subr.mxu0 0.0
    %3994 = vmatpush1.msra.mxu0 0.0
    %3995 = vmatprep.subr.mxu0 0.0
    %3996 = vmatpush1.msra.mxu0 0.0
    %3997 = vmatprep.subr.mxu0 0.0
    %3998 = vmatpush1.msra.mxu0 0.0
    %3999 = vmatprep.subr.mxu0 0.0
    %4000 = vmatpush1.msra.mxu0 0.0
    %4001 = vmatprep.subr.mxu0 0.0
    %4002 = vmatpush1.msra.mxu0 0.0
    %4003 = vmatprep.subr.mxu0 0.0
    %4004 = vmatpush1.msra.mxu0 0.0
    %4005 = vmatprep.subr.mxu0 0.0
    %4006 = vmatpush1.msra.mxu0 0.0
    %4007 = vmatprep.subr.mxu0 0.0
    %4008 = vmatpush1.msra.mxu0 0.0
    %4009 = vmatprep.subr.mxu0 0.0
    %4010 = vmatpush1.msra.mxu0 0.0
    %4011 = vmatprep.subr.mxu0 0.0
    %4012 = vmatpush1.msra.mxu0 0.0
    %4013 = vmatprep.subr.mxu0 0.0
    %4014 = vmatpush1.msra.mxu0 %v3986
    %4015 = vmatprep.subr.mxu0 0.0
    %4016 = vmatpush1.msra.mxu0 %v3981
    %4017 = vmatprep.subr.mxu0 0.0
    %4018 = vmatpush1.msra.mxu0 %v3976
    %4019 = vmatprep.subr.mxu0 0.0
    %4020 = vmatpush1.msra.mxu0 %v3971
    %4021 = vmatprep.subr.mxu0 0.0
    %4022 = vmatpush2.msra.mxu0 0.0
    %4023 = vmatprep.subr.mxu0 0.0
    %4024 = vmatpush2.msra.mxu0 0.0
    %4025 = vmatprep.subr.mxu0 0.0
    %4026 = vmatpush2.msra.mxu0 0.0
    %4027 = vmatprep.subr.mxu0 0.0
    %4028 = vmatpush2.msra.mxu0 0.0
    %4029 = vmatprep.subr.mxu0 0.0
    %4030 = vmatpush2.msra.mxu0 0.0
    %4031 = vmatprep.subr.mxu0 0.0
    %4032 = vmatpush2.msra.mxu0 0.0
    %4033 = vmatprep.subr.mxu0 0.0
    %4034 = vmatpush2.msra.mxu0 0.0
    %4035 = vmatprep.subr.mxu0 0.0
    %4036 = vmatpush2.msra.mxu0 0.0
    %4037 = vmatprep.subr.mxu0 0.0
    %4038 = vmatpush2.msra.mxu0 0.0
    %4039 = vmatprep.subr.mxu0 0.0
    %4040 = vmatpush2.msra.mxu0 0.0
    %4041 = vmatprep.subr.mxu0 0.0
    %4042 = vmatpush2.msra.mxu0 0.0
    %4043 = vmatprep.subr.mxu0 0.0
    %4044 = vmatpush2.msra.mxu0 0.0
    %4045 = vmatprep.subr.mxu0 0.0
    %4046 = vmatpush2.msra.mxu0 0.0
    %4047 = vmatprep.subr.mxu0 0.0
    %4048 = vmatpush2.msra.mxu0 0.0
    %4049 = vmatprep.subr.mxu0 0.0
    %4050 = vmatpush2.msra.mxu0 0.0
    %4051 = vmatprep.subr.mxu0 0.0
    %4052 = vmatpush2.msra.mxu0 0.0
    %4053 = vmatprep.mubr.f32.mxu0 0.0
    %4054 = vmatmul.mubr.f32.gmra.mxu0 %v197
    %v4055 = vpop.f32.mrf.mxu0
    %v4056 = vadd.f32 0.0, %v4055
    %v4057 = vpop.f32.mrf.mxu0
    %4058 = vdwg.mxu0
    %4060 = vrot.lane.b32.xlu0 %v4056, 109
    %v4061 = vpop.permute.xlu0 %4060
    %v4063 = vmin.f32 %v3862, %v4061
    %4064 = vrot.lane.b32.xlu0 %v26, 30
    %v4065 = vpop.permute.xlu0 %4064
    %4066 = vrot.lane.b32.xlu0 %v28, 30
    %v4067 = vpop.permute.xlu0 %4066
    %4068 = vrot.lane.b32.xlu0 %v30, 30
    %v4069 = vpop.permute.xlu0 %4068
    %4070 = vrot.lane.b32.xlu0 %v32, 30
    %v4071 = vpop.permute.xlu0 %4070
    %4072 = vrot.lane.b32.xlu0 %v27, 30
    %v4073 = vpop.permute.xlu0 %4072
    %4074 = vrot.lane.b32.xlu0 %v29, 30
    %v4075 = vpop.permute.xlu0 %4074
    %4076 = vrot.lane.b32.xlu0 %v31, 30
    %v4077 = vpop.permute.xlu0 %4076
    %4078 = vrot.lane.b32.xlu0 %v33, 30
    %v4079 = vpop.permute.xlu0 %4078
    %vm4080 = vcmp.lt.s32.totalorder %v84, 30
    %v4081 = vsel %vm4080, %v4065, %v4073
    %v4082 = vsel %vm4080, %v4067, %v4075
    %v4083 = vsel %vm4080, %v4069, %v4077
    %v4084 = vsel %vm4080, %v4071, %v4079
    %v4085 = vsel %vm4080, %v4073, %v4065
    %v4086 = vsel %vm4080, %v4075, %v4067
    %v4087 = vsel %vm4080, %v4077, %v4069
    %v4088 = vsel %vm4080, %v4079, %v4071
    %v4089 = vsub.f32 %v18, %v4085
    %v4090 = vsub.f32 %v19, %v4081
    %v4091 = vsub.f32 %v20, %v4086
    %v4092 = vsub.f32 %v21, %v4082
    %v4093 = vsub.f32 %v22, %v4087
    %v4094 = vsub.f32 %v23, %v4083
    %v4095 = vsub.f32 %v24, %v4088
    %v4096 = vsub.f32 %v25, %v4084
    %v4097 = vmul.f32 %v4089, %v4089
    %v4098 = vmul.f32 %v4090, %v4090
    %v4099 = vmul.f32 %v4091, %v4091
    %v4100 = vmul.f32 %v4092, %v4092
    %v4101 = vmul.f32 %v4093, %v4093
    %v4102 = vmul.f32 %v4094, %v4094
    %v4103 = vmul.f32 %v4095, %v4095
    %v4104 = vmul.f32 %v4096, %v4096
    %4105 = vmatprep.subr.mxu0 0.0
    %4106 = vmatpush1.msra.mxu0 %v49
    %4107 = vmatprep.subr.mxu0 0.0
    %4108 = vmatpush1.msra.mxu0 %v48
    %4109 = vmatprep.subr.mxu0 0.0
    %4110 = vmatpush1.msra.mxu0 %v47
    %4111 = vmatprep.subr.mxu0 0.0
    %4112 = vmatpush1.msra.mxu0 %v46
    %4113 = vmatprep.subr.mxu0 0.0
    %4114 = vmatpush1.msra.mxu0 %v45
    %4115 = vmatprep.subr.mxu0 0.0
    %4116 = vmatpush1.msra.mxu0 %v44
    %4117 = vmatprep.subr.mxu0 0.0
    %4118 = vmatpush1.msra.mxu0 %v43
    %4119 = vmatprep.subr.mxu0 0.0
    %4120 = vmatpush1.msra.mxu0 %v42
    %4121 = vmatprep.subr.mxu0 0.0
    %4122 = vmatpush1.msra.mxu0 %v41
    %4123 = vmatprep.subr.mxu0 0.0
    %4124 = vmatpush1.msra.mxu0 %v40
    %4125 = vmatprep.subr.mxu0 0.0
    %4126 = vmatpush1.msra.mxu0 %v39
    %4127 = vmatprep.subr.mxu0 0.0
    %4128 = vmatpush1.msra.mxu0 %v38
    %4129 = vmatprep.subr.mxu0 0.0
    %4130 = vmatpush1.msra.mxu0 %v37
    %4131 = vmatprep.subr.mxu0 0.0
    %4132 = vmatpush1.msra.mxu0 %v36
    %4133 = vmatprep.subr.mxu0 0.0
    %4134 = vmatpush1.msra.mxu0 %v35
    %4135 = vmatprep.subr.mxu0 0.0
    %4136 = vmatpush1.msra.mxu0 %v34
    %4137 = vmatprep.subr.mxu0 0.0
    %4138 = vmatpush2.msra.mxu0 %v65
    %4139 = vmatprep.subr.mxu0 0.0
    %4140 = vmatpush2.msra.mxu0 %v64
    %4141 = vmatprep.subr.mxu0 0.0
    %4142 = vmatpush2.msra.mxu0 %v63
    %4143 = vmatprep.subr.mxu0 0.0
    %4144 = vmatpush2.msra.mxu0 %v62
    %4145 = vmatprep.subr.mxu0 0.0
    %4146 = vmatpush2.msra.mxu0 %v61
    %4147 = vmatprep.subr.mxu0 0.0
    %4148 = vmatpush2.msra.mxu0 %v60
    %4149 = vmatprep.subr.mxu0 0.0
    %4150 = vmatpush2.msra.mxu0 %v59
    %4151 = vmatprep.subr.mxu0 0.0
    %4152 = vmatpush2.msra.mxu0 %v58
    %4153 = vmatprep.subr.mxu0 0.0
    %4154 = vmatpush2.msra.mxu0 %v57
    %4155 = vmatprep.subr.mxu0 0.0
    %4156 = vmatpush2.msra.mxu0 %v56
    %4157 = vmatprep.subr.mxu0 0.0
    %4158 = vmatpush2.msra.mxu0 %v55
    %4159 = vmatprep.subr.mxu0 0.0
    %4160 = vmatpush2.msra.mxu0 %v54
    %4161 = vmatprep.subr.mxu0 0.0
    %4162 = vmatpush2.msra.mxu0 %v53
    %4163 = vmatprep.subr.mxu0 0.0
    %4164 = vmatpush2.msra.mxu0 %v52
    %4165 = vmatprep.subr.mxu0 0.0
    %4166 = vmatpush2.msra.mxu0 %v51
    %4167 = vmatprep.subr.mxu0 0.0
    %4168 = vmatpush2.msra.mxu0 %v50
    %4169 = vmatprep.mubr.f32.mxu0 %v4098
    %4170 = vmatmul.mubr.f32.gmra.mxu0 %v4097
    %v4171 = vpop.f32.mrf.mxu0
    %v4172 = vadd.f32 0.0, %v4171
    %v4173 = vpop.f32.mrf.mxu0
    %4174 = vmatprep.mubr.f32.mxu0 %v4100
    %4175 = vmatmul.mubr.f32.gmra.mxu0 %v4099
    %v4176 = vpop.f32.mrf.mxu0
    %v4177 = vadd.f32 0.0, %v4176
    %v4178 = vpop.f32.mrf.mxu0
    %4179 = vmatprep.mubr.f32.mxu0 %v4102
    %4180 = vmatmul.mubr.f32.gmra.mxu0 %v4101
    %v4181 = vpop.f32.mrf.mxu0
    %v4182 = vadd.f32 0.0, %v4181
    %v4183 = vpop.f32.mrf.mxu0
    %4184 = vmatprep.mubr.f32.mxu0 %v4104
    %4185 = vmatmul.mubr.f32.gmra.mxu0 %v4103
    %v4186 = vpop.f32.mrf.mxu0
    %v4187 = vadd.f32 0.0, %v4186
    %v4188 = vpop.f32.mrf.mxu0
    %4189 = vdwg.mxu0
    %4190 = vmatprep.subr.mxu0 0.0
    %4191 = vmatpush1.msra.mxu0 0.0
    %4192 = vmatprep.subr.mxu0 0.0
    %4193 = vmatpush1.msra.mxu0 0.0
    %4194 = vmatprep.subr.mxu0 0.0
    %4195 = vmatpush1.msra.mxu0 0.0
    %4196 = vmatprep.subr.mxu0 0.0
    %4197 = vmatpush1.msra.mxu0 0.0
    %4198 = vmatprep.subr.mxu0 0.0
    %4199 = vmatpush1.msra.mxu0 0.0
    %4200 = vmatprep.subr.mxu0 0.0
    %4201 = vmatpush1.msra.mxu0 0.0
    %4202 = vmatprep.subr.mxu0 0.0
    %4203 = vmatpush1.msra.mxu0 0.0
    %4204 = vmatprep.subr.mxu0 0.0
    %4205 = vmatpush1.msra.mxu0 0.0
    %4206 = vmatprep.subr.mxu0 0.0
    %4207 = vmatpush1.msra.mxu0 0.0
    %4208 = vmatprep.subr.mxu0 0.0
    %4209 = vmatpush1.msra.mxu0 0.0
    %4210 = vmatprep.subr.mxu0 0.0
    %4211 = vmatpush1.msra.mxu0 0.0
    %4212 = vmatprep.subr.mxu0 0.0
    %4213 = vmatpush1.msra.mxu0 0.0
    %4214 = vmatprep.subr.mxu0 0.0
    %4215 = vmatpush1.msra.mxu0 %v4187
    %4216 = vmatprep.subr.mxu0 0.0
    %4217 = vmatpush1.msra.mxu0 %v4182
    %4218 = vmatprep.subr.mxu0 0.0
    %4219 = vmatpush1.msra.mxu0 %v4177
    %4220 = vmatprep.subr.mxu0 0.0
    %4221 = vmatpush1.msra.mxu0 %v4172
    %4222 = vmatprep.subr.mxu0 0.0
    %4223 = vmatpush2.msra.mxu0 0.0
    %4224 = vmatprep.subr.mxu0 0.0
    %4225 = vmatpush2.msra.mxu0 0.0
    %4226 = vmatprep.subr.mxu0 0.0
    %4227 = vmatpush2.msra.mxu0 0.0
    %4228 = vmatprep.subr.mxu0 0.0
    %4229 = vmatpush2.msra.mxu0 0.0
    %4230 = vmatprep.subr.mxu0 0.0
    %4231 = vmatpush2.msra.mxu0 0.0
    %4232 = vmatprep.subr.mxu0 0.0
    %4233 = vmatpush2.msra.mxu0 0.0
    %4234 = vmatprep.subr.mxu0 0.0
    %4235 = vmatpush2.msra.mxu0 0.0
    %4236 = vmatprep.subr.mxu0 0.0
    %4237 = vmatpush2.msra.mxu0 0.0
    %4238 = vmatprep.subr.mxu0 0.0
    %4239 = vmatpush2.msra.mxu0 0.0
    %4240 = vmatprep.subr.mxu0 0.0
    %4241 = vmatpush2.msra.mxu0 0.0
    %4242 = vmatprep.subr.mxu0 0.0
    %4243 = vmatpush2.msra.mxu0 0.0
    %4244 = vmatprep.subr.mxu0 0.0
    %4245 = vmatpush2.msra.mxu0 0.0
    %4246 = vmatprep.subr.mxu0 0.0
    %4247 = vmatpush2.msra.mxu0 0.0
    %4248 = vmatprep.subr.mxu0 0.0
    %4249 = vmatpush2.msra.mxu0 0.0
    %4250 = vmatprep.subr.mxu0 0.0
    %4251 = vmatpush2.msra.mxu0 0.0
    %4252 = vmatprep.subr.mxu0 0.0
    %4253 = vmatpush2.msra.mxu0 0.0
    %4254 = vmatprep.mubr.f32.mxu0 0.0
    %4255 = vmatmul.mubr.f32.gmra.mxu0 %v197
    %v4256 = vpop.f32.mrf.mxu0
    %v4257 = vadd.f32 0.0, %v4256
    %v4258 = vpop.f32.mrf.mxu0
    %4259 = vdwg.mxu0
    %4261 = vrot.lane.b32.xlu0 %v4257, 108
    %v4262 = vpop.permute.xlu0 %4261
    %v4264 = vmin.f32 %v4063, %v4262
    %4265 = vrot.lane.b32.xlu0 %v26, 14
    %v4266 = vpop.permute.xlu0 %4265
    %4267 = vrot.lane.b32.xlu0 %v28, 14
    %v4268 = vpop.permute.xlu0 %4267
    %4269 = vrot.lane.b32.xlu0 %v30, 14
    %v4270 = vpop.permute.xlu0 %4269
    %4271 = vrot.lane.b32.xlu0 %v32, 14
    %v4272 = vpop.permute.xlu0 %4271
    %4273 = vrot.lane.b32.xlu0 %v27, 14
    %v4274 = vpop.permute.xlu0 %4273
    %4275 = vrot.lane.b32.xlu0 %v29, 14
    %v4276 = vpop.permute.xlu0 %4275
    %4277 = vrot.lane.b32.xlu0 %v31, 14
    %v4278 = vpop.permute.xlu0 %4277
    %4279 = vrot.lane.b32.xlu0 %v33, 14
    %v4280 = vpop.permute.xlu0 %4279
    %vm4281 = vcmp.lt.s32.totalorder %v84, 14
    %v4282 = vsel %vm4281, %v4266, %v4274
    %v4283 = vsel %vm4281, %v4268, %v4276
    %v4284 = vsel %vm4281, %v4270, %v4278
    %v4285 = vsel %vm4281, %v4272, %v4280
    %v4286 = vsel %vm4281, %v4274, %v4266
    %v4287 = vsel %vm4281, %v4276, %v4268
    %v4288 = vsel %vm4281, %v4278, %v4270
    %v4289 = vsel %vm4281, %v4280, %v4272
    %v4290 = vsub.f32 %v18, %v4286
    %v4291 = vsub.f32 %v19, %v4282
    %v4292 = vsub.f32 %v20, %v4287
    %v4293 = vsub.f32 %v21, %v4283
    %v4294 = vsub.f32 %v22, %v4288
    %v4295 = vsub.f32 %v23, %v4284
    %v4296 = vsub.f32 %v24, %v4289
    %v4297 = vsub.f32 %v25, %v4285
    %v4298 = vmul.f32 %v4290, %v4290
    %v4299 = vmul.f32 %v4291, %v4291
    %v4300 = vmul.f32 %v4292, %v4292
    %v4301 = vmul.f32 %v4293, %v4293
    %v4302 = vmul.f32 %v4294, %v4294
    %v4303 = vmul.f32 %v4295, %v4295
    %v4304 = vmul.f32 %v4296, %v4296
    %v4305 = vmul.f32 %v4297, %v4297
    %4306 = vmatprep.subr.mxu0 0.0
    %4307 = vmatpush1.msra.mxu0 %v49
    %4308 = vmatprep.subr.mxu0 0.0
    %4309 = vmatpush1.msra.mxu0 %v48
    %4310 = vmatprep.subr.mxu0 0.0
    %4311 = vmatpush1.msra.mxu0 %v47
    %4312 = vmatprep.subr.mxu0 0.0
    %4313 = vmatpush1.msra.mxu0 %v46
    %4314 = vmatprep.subr.mxu0 0.0
    %4315 = vmatpush1.msra.mxu0 %v45
    %4316 = vmatprep.subr.mxu0 0.0
    %4317 = vmatpush1.msra.mxu0 %v44
    %4318 = vmatprep.subr.mxu0 0.0
    %4319 = vmatpush1.msra.mxu0 %v43
    %4320 = vmatprep.subr.mxu0 0.0
    %4321 = vmatpush1.msra.mxu0 %v42
    %4322 = vmatprep.subr.mxu0 0.0
    %4323 = vmatpush1.msra.mxu0 %v41
    %4324 = vmatprep.subr.mxu0 0.0
    %4325 = vmatpush1.msra.mxu0 %v40
    %4326 = vmatprep.subr.mxu0 0.0
    %4327 = vmatpush1.msra.mxu0 %v39
    %4328 = vmatprep.subr.mxu0 0.0
    %4329 = vmatpush1.msra.mxu0 %v38
    %4330 = vmatprep.subr.mxu0 0.0
    %4331 = vmatpush1.msra.mxu0 %v37
    %4332 = vmatprep.subr.mxu0 0.0
    %4333 = vmatpush1.msra.mxu0 %v36
    %4334 = vmatprep.subr.mxu0 0.0
    %4335 = vmatpush1.msra.mxu0 %v35
    %4336 = vmatprep.subr.mxu0 0.0
    %4337 = vmatpush1.msra.mxu0 %v34
    %4338 = vmatprep.subr.mxu0 0.0
    %4339 = vmatpush2.msra.mxu0 %v65
    %4340 = vmatprep.subr.mxu0 0.0
    %4341 = vmatpush2.msra.mxu0 %v64
    %4342 = vmatprep.subr.mxu0 0.0
    %4343 = vmatpush2.msra.mxu0 %v63
    %4344 = vmatprep.subr.mxu0 0.0
    %4345 = vmatpush2.msra.mxu0 %v62
    %4346 = vmatprep.subr.mxu0 0.0
    %4347 = vmatpush2.msra.mxu0 %v61
    %4348 = vmatprep.subr.mxu0 0.0
    %4349 = vmatpush2.msra.mxu0 %v60
    %4350 = vmatprep.subr.mxu0 0.0
    %4351 = vmatpush2.msra.mxu0 %v59
    %4352 = vmatprep.subr.mxu0 0.0
    %4353 = vmatpush2.msra.mxu0 %v58
    %4354 = vmatprep.subr.mxu0 0.0
    %4355 = vmatpush2.msra.mxu0 %v57
    %4356 = vmatprep.subr.mxu0 0.0
    %4357 = vmatpush2.msra.mxu0 %v56
    %4358 = vmatprep.subr.mxu0 0.0
    %4359 = vmatpush2.msra.mxu0 %v55
    %4360 = vmatprep.subr.mxu0 0.0
    %4361 = vmatpush2.msra.mxu0 %v54
    %4362 = vmatprep.subr.mxu0 0.0
    %4363 = vmatpush2.msra.mxu0 %v53
    %4364 = vmatprep.subr.mxu0 0.0
    %4365 = vmatpush2.msra.mxu0 %v52
    %4366 = vmatprep.subr.mxu0 0.0
    %4367 = vmatpush2.msra.mxu0 %v51
    %4368 = vmatprep.subr.mxu0 0.0
    %4369 = vmatpush2.msra.mxu0 %v50
    %4370 = vmatprep.mubr.f32.mxu0 %v4299
    %4371 = vmatmul.mubr.f32.gmra.mxu0 %v4298
    %v4372 = vpop.f32.mrf.mxu0
    %v4373 = vadd.f32 0.0, %v4372
    %v4374 = vpop.f32.mrf.mxu0
    %4375 = vmatprep.mubr.f32.mxu0 %v4301
    %4376 = vmatmul.mubr.f32.gmra.mxu0 %v4300
    %v4377 = vpop.f32.mrf.mxu0
    %v4378 = vadd.f32 0.0, %v4377
    %v4379 = vpop.f32.mrf.mxu0
    %4380 = vmatprep.mubr.f32.mxu0 %v4303
    %4381 = vmatmul.mubr.f32.gmra.mxu0 %v4302
    %v4382 = vpop.f32.mrf.mxu0
    %v4383 = vadd.f32 0.0, %v4382
    %v4384 = vpop.f32.mrf.mxu0
    %4385 = vmatprep.mubr.f32.mxu0 %v4305
    %4386 = vmatmul.mubr.f32.gmra.mxu0 %v4304
    %v4387 = vpop.f32.mrf.mxu0
    %v4388 = vadd.f32 0.0, %v4387
    %v4389 = vpop.f32.mrf.mxu0
    %4390 = vdwg.mxu0
    %4391 = vmatprep.subr.mxu0 0.0
    %4392 = vmatpush1.msra.mxu0 0.0
    %4393 = vmatprep.subr.mxu0 0.0
    %4394 = vmatpush1.msra.mxu0 0.0
    %4395 = vmatprep.subr.mxu0 0.0
    %4396 = vmatpush1.msra.mxu0 0.0
    %4397 = vmatprep.subr.mxu0 0.0
    %4398 = vmatpush1.msra.mxu0 0.0
    %4399 = vmatprep.subr.mxu0 0.0
    %4400 = vmatpush1.msra.mxu0 0.0
    %4401 = vmatprep.subr.mxu0 0.0
    %4402 = vmatpush1.msra.mxu0 0.0
    %4403 = vmatprep.subr.mxu0 0.0
    %4404 = vmatpush1.msra.mxu0 0.0
    %4405 = vmatprep.subr.mxu0 0.0
    %4406 = vmatpush1.msra.mxu0 0.0
    %4407 = vmatprep.subr.mxu0 0.0
    %4408 = vmatpush1.msra.mxu0 0.0
    %4409 = vmatprep.subr.mxu0 0.0
    %4410 = vmatpush1.msra.mxu0 0.0
    %4411 = vmatprep.subr.mxu0 0.0
    %4412 = vmatpush1.msra.mxu0 0.0
    %4413 = vmatprep.subr.mxu0 0.0
    %4414 = vmatpush1.msra.mxu0 0.0
    %4415 = vmatprep.subr.mxu0 0.0
    %4416 = vmatpush1.msra.mxu0 %v4388
    %4417 = vmatprep.subr.mxu0 0.0
    %4418 = vmatpush1.msra.mxu0 %v4383
    %4419 = vmatprep.subr.mxu0 0.0
    %4420 = vmatpush1.msra.mxu0 %v4378
    %4421 = vmatprep.subr.mxu0 0.0
    %4422 = vmatpush1.msra.mxu0 %v4373
    %4423 = vmatprep.subr.mxu0 0.0
    %4424 = vmatpush2.msra.mxu0 0.0
    %4425 = vmatprep.subr.mxu0 0.0
    %4426 = vmatpush2.msra.mxu0 0.0
    %4427 = vmatprep.subr.mxu0 0.0
    %4428 = vmatpush2.msra.mxu0 0.0
    %4429 = vmatprep.subr.mxu0 0.0
    %4430 = vmatpush2.msra.mxu0 0.0
    %4431 = vmatprep.subr.mxu0 0.0
    %4432 = vmatpush2.msra.mxu0 0.0
    %4433 = vmatprep.subr.mxu0 0.0
    %4434 = vmatpush2.msra.mxu0 0.0
    %4435 = vmatprep.subr.mxu0 0.0
    %4436 = vmatpush2.msra.mxu0 0.0
    %4437 = vmatprep.subr.mxu0 0.0
    %4438 = vmatpush2.msra.mxu0 0.0
    %4439 = vmatprep.subr.mxu0 0.0
    %4440 = vmatpush2.msra.mxu0 0.0
    %4441 = vmatprep.subr.mxu0 0.0
    %4442 = vmatpush2.msra.mxu0 0.0
    %4443 = vmatprep.subr.mxu0 0.0
    %4444 = vmatpush2.msra.mxu0 0.0
    %4445 = vmatprep.subr.mxu0 0.0
    %4446 = vmatpush2.msra.mxu0 0.0
    %4447 = vmatprep.subr.mxu0 0.0
    %4448 = vmatpush2.msra.mxu0 0.0
    %4449 = vmatprep.subr.mxu0 0.0
    %4450 = vmatpush2.msra.mxu0 0.0
    %4451 = vmatprep.subr.mxu0 0.0
    %4452 = vmatpush2.msra.mxu0 0.0
    %4453 = vmatprep.subr.mxu0 0.0
    %4454 = vmatpush2.msra.mxu0 0.0
    %4455 = vmatprep.mubr.f32.mxu0 0.0
    %4456 = vmatmul.mubr.f32.gmra.mxu0 %v197
    %v4457 = vpop.f32.mrf.mxu0
    %v4458 = vadd.f32 0.0, %v4457
    %v4459 = vpop.f32.mrf.mxu0
    %4460 = vdwg.mxu0
    %4462 = vrot.lane.b32.xlu0 %v4458, 107
    %v4463 = vpop.permute.xlu0 %4462
    %v4465 = vmin.f32 %v4264, %v4463
    %4466 = vrot.lane.b32.xlu0 %v26, 126
    %v4467 = vpop.permute.xlu0 %4466
    %4468 = vrot.lane.b32.xlu0 %v28, 126
    %v4469 = vpop.permute.xlu0 %4468
    %4470 = vrot.lane.b32.xlu0 %v30, 126
    %v4471 = vpop.permute.xlu0 %4470
    %4472 = vrot.lane.b32.xlu0 %v32, 126
    %v4473 = vpop.permute.xlu0 %4472
    %4474 = vrot.lane.b32.xlu0 %v27, 126
    %v4475 = vpop.permute.xlu0 %4474
    %4476 = vrot.lane.b32.xlu0 %v29, 126
    %v4477 = vpop.permute.xlu0 %4476
    %4478 = vrot.lane.b32.xlu0 %v31, 126
    %v4479 = vpop.permute.xlu0 %4478
    %4480 = vrot.lane.b32.xlu0 %v33, 126
    %v4481 = vpop.permute.xlu0 %4480
    %vm4482 = vcmp.lt.s32.totalorder %v84, 126
    %v4483 = vsel %vm4482, %v4467, %v4475
    %v4484 = vsel %vm4482, %v4469, %v4477
    %v4485 = vsel %vm4482, %v4471, %v4479
    %v4486 = vsel %vm4482, %v4473, %v4481
    %v4487 = vsel %vm4482, %v4475, %v4467
    %v4488 = vsel %vm4482, %v4477, %v4469
    %v4489 = vsel %vm4482, %v4479, %v4471
    %v4490 = vsel %vm4482, %v4481, %v4473
    %v4491 = vsub.f32 %v18, %v4483
    %v4492 = vsub.f32 %v19, %v4487
    %v4493 = vsub.f32 %v20, %v4484
    %v4494 = vsub.f32 %v21, %v4488
    %v4495 = vsub.f32 %v22, %v4485
    %v4496 = vsub.f32 %v23, %v4489
    %v4497 = vsub.f32 %v24, %v4486
    %v4498 = vsub.f32 %v25, %v4490
    %v4499 = vmul.f32 %v4491, %v4491
    %v4500 = vmul.f32 %v4492, %v4492
    %v4501 = vmul.f32 %v4493, %v4493
    %v4502 = vmul.f32 %v4494, %v4494
    %v4503 = vmul.f32 %v4495, %v4495
    %v4504 = vmul.f32 %v4496, %v4496
    %v4505 = vmul.f32 %v4497, %v4497
    %v4506 = vmul.f32 %v4498, %v4498
    %4507 = vmatprep.subr.mxu0 0.0
    %4508 = vmatpush1.msra.mxu0 %v49
    %4509 = vmatprep.subr.mxu0 0.0
    %4510 = vmatpush1.msra.mxu0 %v48
    %4511 = vmatprep.subr.mxu0 0.0
    %4512 = vmatpush1.msra.mxu0 %v47
    %4513 = vmatprep.subr.mxu0 0.0
    %4514 = vmatpush1.msra.mxu0 %v46
    %4515 = vmatprep.subr.mxu0 0.0
    %4516 = vmatpush1.msra.mxu0 %v45
    %4517 = vmatprep.subr.mxu0 0.0
    %4518 = vmatpush1.msra.mxu0 %v44
    %4519 = vmatprep.subr.mxu0 0.0
    %4520 = vmatpush1.msra.mxu0 %v43
    %4521 = vmatprep.subr.mxu0 0.0
    %4522 = vmatpush1.msra.mxu0 %v42
    %4523 = vmatprep.subr.mxu0 0.0
    %4524 = vmatpush1.msra.mxu0 %v41
    %4525 = vmatprep.subr.mxu0 0.0
    %4526 = vmatpush1.msra.mxu0 %v40
    %4527 = vmatprep.subr.mxu0 0.0
    %4528 = vmatpush1.msra.mxu0 %v39
    %4529 = vmatprep.subr.mxu0 0.0
    %4530 = vmatpush1.msra.mxu0 %v38
    %4531 = vmatprep.subr.mxu0 0.0
    %4532 = vmatpush1.msra.mxu0 %v37
    %4533 = vmatprep.subr.mxu0 0.0
    %4534 = vmatpush1.msra.mxu0 %v36
    %4535 = vmatprep.subr.mxu0 0.0
    %4536 = vmatpush1.msra.mxu0 %v35
    %4537 = vmatprep.subr.mxu0 0.0
    %4538 = vmatpush1.msra.mxu0 %v34
    %4539 = vmatprep.subr.mxu0 0.0
    %4540 = vmatpush2.msra.mxu0 %v65
    %4541 = vmatprep.subr.mxu0 0.0
    %4542 = vmatpush2.msra.mxu0 %v64
    %4543 = vmatprep.subr.mxu0 0.0
    %4544 = vmatpush2.msra.mxu0 %v63
    %4545 = vmatprep.subr.mxu0 0.0
    %4546 = vmatpush2.msra.mxu0 %v62
    %4547 = vmatprep.subr.mxu0 0.0
    %4548 = vmatpush2.msra.mxu0 %v61
    %4549 = vmatprep.subr.mxu0 0.0
    %4550 = vmatpush2.msra.mxu0 %v60
    %4551 = vmatprep.subr.mxu0 0.0
    %4552 = vmatpush2.msra.mxu0 %v59
    %4553 = vmatprep.subr.mxu0 0.0
    %4554 = vmatpush2.msra.mxu0 %v58
    %4555 = vmatprep.subr.mxu0 0.0
    %4556 = vmatpush2.msra.mxu0 %v57
    %4557 = vmatprep.subr.mxu0 0.0
    %4558 = vmatpush2.msra.mxu0 %v56
    %4559 = vmatprep.subr.mxu0 0.0
    %4560 = vmatpush2.msra.mxu0 %v55
    %4561 = vmatprep.subr.mxu0 0.0
    %4562 = vmatpush2.msra.mxu0 %v54
    %4563 = vmatprep.subr.mxu0 0.0
    %4564 = vmatpush2.msra.mxu0 %v53
    %4565 = vmatprep.subr.mxu0 0.0
    %4566 = vmatpush2.msra.mxu0 %v52
    %4567 = vmatprep.subr.mxu0 0.0
    %4568 = vmatpush2.msra.mxu0 %v51
    %4569 = vmatprep.subr.mxu0 0.0
    %4570 = vmatpush2.msra.mxu0 %v50
    %4571 = vmatprep.mubr.f32.mxu0 %v4500
    %4572 = vmatmul.mubr.f32.gmra.mxu0 %v4499
    %v4573 = vpop.f32.mrf.mxu0
    %v4574 = vadd.f32 0.0, %v4573
    %v4575 = vpop.f32.mrf.mxu0
    %4576 = vmatprep.mubr.f32.mxu0 %v4502
    %4577 = vmatmul.mubr.f32.gmra.mxu0 %v4501
    %v4578 = vpop.f32.mrf.mxu0
    %v4579 = vadd.f32 0.0, %v4578
    %v4580 = vpop.f32.mrf.mxu0
    %4581 = vmatprep.mubr.f32.mxu0 %v4504
    %4582 = vmatmul.mubr.f32.gmra.mxu0 %v4503
    %v4583 = vpop.f32.mrf.mxu0
    %v4584 = vadd.f32 0.0, %v4583
    %v4585 = vpop.f32.mrf.mxu0
    %4586 = vmatprep.mubr.f32.mxu0 %v4506
    %4587 = vmatmul.mubr.f32.gmra.mxu0 %v4505
    %v4588 = vpop.f32.mrf.mxu0
    %v4589 = vadd.f32 0.0, %v4588
    %v4590 = vpop.f32.mrf.mxu0
    %4591 = vdwg.mxu0
    %4592 = vmatprep.subr.mxu0 0.0
    %4593 = vmatpush1.msra.mxu0 0.0
    %4594 = vmatprep.subr.mxu0 0.0
    %4595 = vmatpush1.msra.mxu0 0.0
    %4596 = vmatprep.subr.mxu0 0.0
    %4597 = vmatpush1.msra.mxu0 0.0
    %4598 = vmatprep.subr.mxu0 0.0
    %4599 = vmatpush1.msra.mxu0 0.0
    %4600 = vmatprep.subr.mxu0 0.0
    %4601 = vmatpush1.msra.mxu0 0.0
    %4602 = vmatprep.subr.mxu0 0.0
    %4603 = vmatpush1.msra.mxu0 0.0
    %4604 = vmatprep.subr.mxu0 0.0
    %4605 = vmatpush1.msra.mxu0 0.0
    %4606 = vmatprep.subr.mxu0 0.0
    %4607 = vmatpush1.msra.mxu0 0.0
    %4608 = vmatprep.subr.mxu0 0.0
    %4609 = vmatpush1.msra.mxu0 0.0
    %4610 = vmatprep.subr.mxu0 0.0
    %4611 = vmatpush1.msra.mxu0 0.0
    %4612 = vmatprep.subr.mxu0 0.0
    %4613 = vmatpush1.msra.mxu0 0.0
    %4614 = vmatprep.subr.mxu0 0.0
    %4615 = vmatpush1.msra.mxu0 0.0
    %4616 = vmatprep.subr.mxu0 0.0
    %4617 = vmatpush1.msra.mxu0 %v4589
    %4618 = vmatprep.subr.mxu0 0.0
    %4619 = vmatpush1.msra.mxu0 %v4584
    %4620 = vmatprep.subr.mxu0 0.0
    %4621 = vmatpush1.msra.mxu0 %v4579
    %4622 = vmatprep.subr.mxu0 0.0
    %4623 = vmatpush1.msra.mxu0 %v4574
    %4624 = vmatprep.subr.mxu0 0.0
    %4625 = vmatpush2.msra.mxu0 0.0
    %4626 = vmatprep.subr.mxu0 0.0
    %4627 = vmatpush2.msra.mxu0 0.0
    %4628 = vmatprep.subr.mxu0 0.0
    %4629 = vmatpush2.msra.mxu0 0.0
    %4630 = vmatprep.subr.mxu0 0.0
    %4631 = vmatpush2.msra.mxu0 0.0
    %4632 = vmatprep.subr.mxu0 0.0
    %4633 = vmatpush2.msra.mxu0 0.0
    %4634 = vmatprep.subr.mxu0 0.0
    %4635 = vmatpush2.msra.mxu0 0.0
    %4636 = vmatprep.subr.mxu0 0.0
    %4637 = vmatpush2.msra.mxu0 0.0
    %4638 = vmatprep.subr.mxu0 0.0
    %4639 = vmatpush2.msra.mxu0 0.0
    %4640 = vmatprep.subr.mxu0 0.0
    %4641 = vmatpush2.msra.mxu0 0.0
    %4642 = vmatprep.subr.mxu0 0.0
    %4643 = vmatpush2.msra.mxu0 0.0
    %4644 = vmatprep.subr.mxu0 0.0
    %4645 = vmatpush2.msra.mxu0 0.0
    %4646 = vmatprep.subr.mxu0 0.0
    %4647 = vmatpush2.msra.mxu0 0.0
    %4648 = vmatprep.subr.mxu0 0.0
    %4649 = vmatpush2.msra.mxu0 0.0
    %4650 = vmatprep.subr.mxu0 0.0
    %4651 = vmatpush2.msra.mxu0 0.0
    %4652 = vmatprep.subr.mxu0 0.0
    %4653 = vmatpush2.msra.mxu0 0.0
    %4654 = vmatprep.subr.mxu0 0.0
    %4655 = vmatpush2.msra.mxu0 0.0
    %4656 = vmatprep.mubr.f32.mxu0 0.0
    %4657 = vmatmul.mubr.f32.gmra.mxu0 %v197
    %v4658 = vpop.f32.mrf.mxu0
    %v4659 = vadd.f32 0.0, %v4658
    %v4660 = vpop.f32.mrf.mxu0
    %4661 = vdwg.mxu0
    %4663 = vrot.lane.b32.xlu0 %v4659, 106
    %v4664 = vpop.permute.xlu0 %4663
    %v4666 = vmin.f32 %v4465, %v4664
    %4667 = vrot.lane.b32.xlu0 %v26, 110
    %v4668 = vpop.permute.xlu0 %4667
    %4669 = vrot.lane.b32.xlu0 %v28, 110
    %v4670 = vpop.permute.xlu0 %4669
    %4671 = vrot.lane.b32.xlu0 %v30, 110
    %v4672 = vpop.permute.xlu0 %4671
    %4673 = vrot.lane.b32.xlu0 %v32, 110
    %v4674 = vpop.permute.xlu0 %4673
    %4675 = vrot.lane.b32.xlu0 %v27, 110
    %v4676 = vpop.permute.xlu0 %4675
    %4677 = vrot.lane.b32.xlu0 %v29, 110
    %v4678 = vpop.permute.xlu0 %4677
    %4679 = vrot.lane.b32.xlu0 %v31, 110
    %v4680 = vpop.permute.xlu0 %4679
    %4681 = vrot.lane.b32.xlu0 %v33, 110
    %v4682 = vpop.permute.xlu0 %4681
    %vm4683 = vcmp.lt.s32.totalorder %v84, 110
    %v4684 = vsel %vm4683, %v4668, %v4676
    %v4685 = vsel %vm4683, %v4670, %v4678
    %v4686 = vsel %vm4683, %v4672, %v4680
    %v4687 = vsel %vm4683, %v4674, %v4682
    %v4688 = vsel %vm4683, %v4676, %v4668
    %v4689 = vsel %vm4683, %v4678, %v4670
    %v4690 = vsel %vm4683, %v4680, %v4672
    %v4691 = vsel %vm4683, %v4682, %v4674
    %v4692 = vsub.f32 %v18, %v4684
    %v4693 = vsub.f32 %v19, %v4688
    %v4694 = vsub.f32 %v20, %v4685
    %v4695 = vsub.f32 %v21, %v4689
    %v4696 = vsub.f32 %v22, %v4686
    %v4697 = vsub.f32 %v23, %v4690
    %v4698 = vsub.f32 %v24, %v4687
    %v4699 = vsub.f32 %v25, %v4691
    %v4700 = vmul.f32 %v4692, %v4692
    %v4701 = vmul.f32 %v4693, %v4693
    %v4702 = vmul.f32 %v4694, %v4694
    %v4703 = vmul.f32 %v4695, %v4695
    %v4704 = vmul.f32 %v4696, %v4696
    %v4705 = vmul.f32 %v4697, %v4697
    %v4706 = vmul.f32 %v4698, %v4698
    %v4707 = vmul.f32 %v4699, %v4699
    %4708 = vmatprep.subr.mxu0 0.0
    %4709 = vmatpush1.msra.mxu0 %v49
    %4710 = vmatprep.subr.mxu0 0.0
    %4711 = vmatpush1.msra.mxu0 %v48
    %4712 = vmatprep.subr.mxu0 0.0
    %4713 = vmatpush1.msra.mxu0 %v47
    %4714 = vmatprep.subr.mxu0 0.0
    %4715 = vmatpush1.msra.mxu0 %v46
    %4716 = vmatprep.subr.mxu0 0.0
    %4717 = vmatpush1.msra.mxu0 %v45
    %4718 = vmatprep.subr.mxu0 0.0
    %4719 = vmatpush1.msra.mxu0 %v44
    %4720 = vmatprep.subr.mxu0 0.0
    %4721 = vmatpush1.msra.mxu0 %v43
    %4722 = vmatprep.subr.mxu0 0.0
    %4723 = vmatpush1.msra.mxu0 %v42
    %4724 = vmatprep.subr.mxu0 0.0
    %4725 = vmatpush1.msra.mxu0 %v41
    %4726 = vmatprep.subr.mxu0 0.0
    %4727 = vmatpush1.msra.mxu0 %v40
    %4728 = vmatprep.subr.mxu0 0.0
    %4729 = vmatpush1.msra.mxu0 %v39
    %4730 = vmatprep.subr.mxu0 0.0
    %4731 = vmatpush1.msra.mxu0 %v38
    %4732 = vmatprep.subr.mxu0 0.0
    %4733 = vmatpush1.msra.mxu0 %v37
    %4734 = vmatprep.subr.mxu0 0.0
    %4735 = vmatpush1.msra.mxu0 %v36
    %4736 = vmatprep.subr.mxu0 0.0
    %4737 = vmatpush1.msra.mxu0 %v35
    %4738 = vmatprep.subr.mxu0 0.0
    %4739 = vmatpush1.msra.mxu0 %v34
    %4740 = vmatprep.subr.mxu0 0.0
    %4741 = vmatpush2.msra.mxu0 %v65
    %4742 = vmatprep.subr.mxu0 0.0
    %4743 = vmatpush2.msra.mxu0 %v64
    %4744 = vmatprep.subr.mxu0 0.0
    %4745 = vmatpush2.msra.mxu0 %v63
    %4746 = vmatprep.subr.mxu0 0.0
    %4747 = vmatpush2.msra.mxu0 %v62
    %4748 = vmatprep.subr.mxu0 0.0
    %4749 = vmatpush2.msra.mxu0 %v61
    %4750 = vmatprep.subr.mxu0 0.0
    %4751 = vmatpush2.msra.mxu0 %v60
    %4752 = vmatprep.subr.mxu0 0.0
    %4753 = vmatpush2.msra.mxu0 %v59
    %4754 = vmatprep.subr.mxu0 0.0
    %4755 = vmatpush2.msra.mxu0 %v58
    %4756 = vmatprep.subr.mxu0 0.0
    %4757 = vmatpush2.msra.mxu0 %v57
    %4758 = vmatprep.subr.mxu0 0.0
    %4759 = vmatpush2.msra.mxu0 %v56
    %4760 = vmatprep.subr.mxu0 0.0
    %4761 = vmatpush2.msra.mxu0 %v55
    %4762 = vmatprep.subr.mxu0 0.0
    %4763 = vmatpush2.msra.mxu0 %v54
    %4764 = vmatprep.subr.mxu0 0.0
    %4765 = vmatpush2.msra.mxu0 %v53
    %4766 = vmatprep.subr.mxu0 0.0
    %4767 = vmatpush2.msra.mxu0 %v52
    %4768 = vmatprep.subr.mxu0 0.0
    %4769 = vmatpush2.msra.mxu0 %v51
    %4770 = vmatprep.subr.mxu0 0.0
    %4771 = vmatpush2.msra.mxu0 %v50
    %4772 = vmatprep.mubr.f32.mxu0 %v4701
    %4773 = vmatmul.mubr.f32.gmra.mxu0 %v4700
    %v4774 = vpop.f32.mrf.mxu0
    %v4775 = vadd.f32 0.0, %v4774
    %v4776 = vpop.f32.mrf.mxu0
    %4777 = vmatprep.mubr.f32.mxu0 %v4703
    %4778 = vmatmul.mubr.f32.gmra.mxu0 %v4702
    %v4779 = vpop.f32.mrf.mxu0
    %v4780 = vadd.f32 0.0, %v4779
    %v4781 = vpop.f32.mrf.mxu0
    %4782 = vmatprep.mubr.f32.mxu0 %v4705
    %4783 = vmatmul.mubr.f32.gmra.mxu0 %v4704
    %v4784 = vpop.f32.mrf.mxu0
    %v4785 = vadd.f32 0.0, %v4784
    %v4786 = vpop.f32.mrf.mxu0
    %4787 = vmatprep.mubr.f32.mxu0 %v4707
    %4788 = vmatmul.mubr.f32.gmra.mxu0 %v4706
    %v4789 = vpop.f32.mrf.mxu0
    %v4790 = vadd.f32 0.0, %v4789
    %v4791 = vpop.f32.mrf.mxu0
    %4792 = vdwg.mxu0
    %4793 = vmatprep.subr.mxu0 0.0
    %4794 = vmatpush1.msra.mxu0 0.0
    %4795 = vmatprep.subr.mxu0 0.0
    %4796 = vmatpush1.msra.mxu0 0.0
    %4797 = vmatprep.subr.mxu0 0.0
    %4798 = vmatpush1.msra.mxu0 0.0
    %4799 = vmatprep.subr.mxu0 0.0
    %4800 = vmatpush1.msra.mxu0 0.0
    %4801 = vmatprep.subr.mxu0 0.0
    %4802 = vmatpush1.msra.mxu0 0.0
    %4803 = vmatprep.subr.mxu0 0.0
    %4804 = vmatpush1.msra.mxu0 0.0
    %4805 = vmatprep.subr.mxu0 0.0
    %4806 = vmatpush1.msra.mxu0 0.0
    %4807 = vmatprep.subr.mxu0 0.0
    %4808 = vmatpush1.msra.mxu0 0.0
    %4809 = vmatprep.subr.mxu0 0.0
    %4810 = vmatpush1.msra.mxu0 0.0
    %4811 = vmatprep.subr.mxu0 0.0
    %4812 = vmatpush1.msra.mxu0 0.0
    %4813 = vmatprep.subr.mxu0 0.0
    %4814 = vmatpush1.msra.mxu0 0.0
    %4815 = vmatprep.subr.mxu0 0.0
    %4816 = vmatpush1.msra.mxu0 0.0
    %4817 = vmatprep.subr.mxu0 0.0
    %4818 = vmatpush1.msra.mxu0 %v4790
    %4819 = vmatprep.subr.mxu0 0.0
    %4820 = vmatpush1.msra.mxu0 %v4785
    %4821 = vmatprep.subr.mxu0 0.0
    %4822 = vmatpush1.msra.mxu0 %v4780
    %4823 = vmatprep.subr.mxu0 0.0
    %4824 = vmatpush1.msra.mxu0 %v4775
    %4825 = vmatprep.subr.mxu0 0.0
    %4826 = vmatpush2.msra.mxu0 0.0
    %4827 = vmatprep.subr.mxu0 0.0
    %4828 = vmatpush2.msra.mxu0 0.0
    %4829 = vmatprep.subr.mxu0 0.0
    %4830 = vmatpush2.msra.mxu0 0.0
    %4831 = vmatprep.subr.mxu0 0.0
    %4832 = vmatpush2.msra.mxu0 0.0
    %4833 = vmatprep.subr.mxu0 0.0
    %4834 = vmatpush2.msra.mxu0 0.0
    %4835 = vmatprep.subr.mxu0 0.0
    %4836 = vmatpush2.msra.mxu0 0.0
    %4837 = vmatprep.subr.mxu0 0.0
    %4838 = vmatpush2.msra.mxu0 0.0
    %4839 = vmatprep.subr.mxu0 0.0
    %4840 = vmatpush2.msra.mxu0 0.0
    %4841 = vmatprep.subr.mxu0 0.0
    %4842 = vmatpush2.msra.mxu0 0.0
    %4843 = vmatprep.subr.mxu0 0.0
    %4844 = vmatpush2.msra.mxu0 0.0
    %4845 = vmatprep.subr.mxu0 0.0
    %4846 = vmatpush2.msra.mxu0 0.0
    %4847 = vmatprep.subr.mxu0 0.0
    %4848 = vmatpush2.msra.mxu0 0.0
    %4849 = vmatprep.subr.mxu0 0.0
    %4850 = vmatpush2.msra.mxu0 0.0
    %4851 = vmatprep.subr.mxu0 0.0
    %4852 = vmatpush2.msra.mxu0 0.0
    %4853 = vmatprep.subr.mxu0 0.0
    %4854 = vmatpush2.msra.mxu0 0.0
    %4855 = vmatprep.subr.mxu0 0.0
    %4856 = vmatpush2.msra.mxu0 0.0
    %4857 = vmatprep.mubr.f32.mxu0 0.0
    %4858 = vmatmul.mubr.f32.gmra.mxu0 %v197
    %v4859 = vpop.f32.mrf.mxu0
    %v4860 = vadd.f32 0.0, %v4859
    %v4861 = vpop.f32.mrf.mxu0
    %4862 = vdwg.mxu0
    %4864 = vrot.lane.b32.xlu0 %v4860, 105
    %v4865 = vpop.permute.xlu0 %4864
    %v4867 = vmin.f32 %v4666, %v4865
    %4868 = vrot.lane.b32.xlu0 %v26, 94
    %v4869 = vpop.permute.xlu0 %4868
    %4870 = vrot.lane.b32.xlu0 %v28, 94
    %v4871 = vpop.permute.xlu0 %4870
    %4872 = vrot.lane.b32.xlu0 %v30, 94
    %v4873 = vpop.permute.xlu0 %4872
    %4874 = vrot.lane.b32.xlu0 %v32, 94
    %v4875 = vpop.permute.xlu0 %4874
    %4876 = vrot.lane.b32.xlu0 %v27, 94
    %v4877 = vpop.permute.xlu0 %4876
    %4878 = vrot.lane.b32.xlu0 %v29, 94
    %v4879 = vpop.permute.xlu0 %4878
    %4880 = vrot.lane.b32.xlu0 %v31, 94
    %v4881 = vpop.permute.xlu0 %4880
    %4882 = vrot.lane.b32.xlu0 %v33, 94
    %v4883 = vpop.permute.xlu0 %4882
    %vm4884 = vcmp.lt.s32.totalorder %v84, 94
    %v4885 = vsel %vm4884, %v4869, %v4877
    %v4886 = vsel %vm4884, %v4871, %v4879
    %v4887 = vsel %vm4884, %v4873, %v4881
    %v4888 = vsel %vm4884, %v4875, %v4883
    %v4889 = vsel %vm4884, %v4877, %v4869
    %v4890 = vsel %vm4884, %v4879, %v4871
    %v4891 = vsel %vm4884, %v4881, %v4873
    %v4892 = vsel %vm4884, %v4883, %v4875
    %v4893 = vsub.f32 %v18, %v4885
    %v4894 = vsub.f32 %v19, %v4889
    %v4895 = vsub.f32 %v20, %v4886
    %v4896 = vsub.f32 %v21, %v4890
    %v4897 = vsub.f32 %v22, %v4887
    %v4898 = vsub.f32 %v23, %v4891
    %v4899 = vsub.f32 %v24, %v4888
    %v4900 = vsub.f32 %v25, %v4892
    %v4901 = vmul.f32 %v4893, %v4893
    %v4902 = vmul.f32 %v4894, %v4894
    %v4903 = vmul.f32 %v4895, %v4895
    %v4904 = vmul.f32 %v4896, %v4896
    %v4905 = vmul.f32 %v4897, %v4897
    %v4906 = vmul.f32 %v4898, %v4898
    %v4907 = vmul.f32 %v4899, %v4899
    %v4908 = vmul.f32 %v4900, %v4900
    %4909 = vmatprep.subr.mxu0 0.0
    %4910 = vmatpush1.msra.mxu0 %v49
    %4911 = vmatprep.subr.mxu0 0.0
    %4912 = vmatpush1.msra.mxu0 %v48
    %4913 = vmatprep.subr.mxu0 0.0
    %4914 = vmatpush1.msra.mxu0 %v47
    %4915 = vmatprep.subr.mxu0 0.0
    %4916 = vmatpush1.msra.mxu0 %v46
    %4917 = vmatprep.subr.mxu0 0.0
    %4918 = vmatpush1.msra.mxu0 %v45
    %4919 = vmatprep.subr.mxu0 0.0
    %4920 = vmatpush1.msra.mxu0 %v44
    %4921 = vmatprep.subr.mxu0 0.0
    %4922 = vmatpush1.msra.mxu0 %v43
    %4923 = vmatprep.subr.mxu0 0.0
    %4924 = vmatpush1.msra.mxu0 %v42
    %4925 = vmatprep.subr.mxu0 0.0
    %4926 = vmatpush1.msra.mxu0 %v41
    %4927 = vmatprep.subr.mxu0 0.0
    %4928 = vmatpush1.msra.mxu0 %v40
    %4929 = vmatprep.subr.mxu0 0.0
    %4930 = vmatpush1.msra.mxu0 %v39
    %4931 = vmatprep.subr.mxu0 0.0
    %4932 = vmatpush1.msra.mxu0 %v38
    %4933 = vmatprep.subr.mxu0 0.0
    %4934 = vmatpush1.msra.mxu0 %v37
    %4935 = vmatprep.subr.mxu0 0.0
    %4936 = vmatpush1.msra.mxu0 %v36
    %4937 = vmatprep.subr.mxu0 0.0
    %4938 = vmatpush1.msra.mxu0 %v35
    %4939 = vmatprep.subr.mxu0 0.0
    %4940 = vmatpush1.msra.mxu0 %v34
    %4941 = vmatprep.subr.mxu0 0.0
    %4942 = vmatpush2.msra.mxu0 %v65
    %4943 = vmatprep.subr.mxu0 0.0
    %4944 = vmatpush2.msra.mxu0 %v64
    %4945 = vmatprep.subr.mxu0 0.0
    %4946 = vmatpush2.msra.mxu0 %v63
    %4947 = vmatprep.subr.mxu0 0.0
    %4948 = vmatpush2.msra.mxu0 %v62
    %4949 = vmatprep.subr.mxu0 0.0
    %4950 = vmatpush2.msra.mxu0 %v61
    %4951 = vmatprep.subr.mxu0 0.0
    %4952 = vmatpush2.msra.mxu0 %v60
    %4953 = vmatprep.subr.mxu0 0.0
    %4954 = vmatpush2.msra.mxu0 %v59
    %4955 = vmatprep.subr.mxu0 0.0
    %4956 = vmatpush2.msra.mxu0 %v58
    %4957 = vmatprep.subr.mxu0 0.0
    %4958 = vmatpush2.msra.mxu0 %v57
    %4959 = vmatprep.subr.mxu0 0.0
    %4960 = vmatpush2.msra.mxu0 %v56
    %4961 = vmatprep.subr.mxu0 0.0
    %4962 = vmatpush2.msra.mxu0 %v55
    %4963 = vmatprep.subr.mxu0 0.0
    %4964 = vmatpush2.msra.mxu0 %v54
    %4965 = vmatprep.subr.mxu0 0.0
    %4966 = vmatpush2.msra.mxu0 %v53
    %4967 = vmatprep.subr.mxu0 0.0
    %4968 = vmatpush2.msra.mxu0 %v52
    %4969 = vmatprep.subr.mxu0 0.0
    %4970 = vmatpush2.msra.mxu0 %v51
    %4971 = vmatprep.subr.mxu0 0.0
    %4972 = vmatpush2.msra.mxu0 %v50
    %4973 = vmatprep.mubr.f32.mxu0 %v4902
    %4974 = vmatmul.mubr.f32.gmra.mxu0 %v4901
    %v4975 = vpop.f32.mrf.mxu0
    %v4976 = vadd.f32 0.0, %v4975
    %v4977 = vpop.f32.mrf.mxu0
    %4978 = vmatprep.mubr.f32.mxu0 %v4904
    %4979 = vmatmul.mubr.f32.gmra.mxu0 %v4903
    %v4980 = vpop.f32.mrf.mxu0
    %v4981 = vadd.f32 0.0, %v4980
    %v4982 = vpop.f32.mrf.mxu0
    %4983 = vmatprep.mubr.f32.mxu0 %v4906
    %4984 = vmatmul.mubr.f32.gmra.mxu0 %v4905
    %v4985 = vpop.f32.mrf.mxu0
    %v4986 = vadd.f32 0.0, %v4985
    %v4987 = vpop.f32.mrf.mxu0
    %4988 = vmatprep.mubr.f32.mxu0 %v4908
    %4989 = vmatmul.mubr.f32.gmra.mxu0 %v4907
    %v4990 = vpop.f32.mrf.mxu0
    %v4991 = vadd.f32 0.0, %v4990
    %v4992 = vpop.f32.mrf.mxu0
    %4993 = vdwg.mxu0
    %4994 = vmatprep.subr.mxu0 0.0
    %4995 = vmatpush1.msra.mxu0 0.0
    %4996 = vmatprep.subr.mxu0 0.0
    %4997 = vmatpush1.msra.mxu0 0.0
    %4998 = vmatprep.subr.mxu0 0.0
    %4999 = vmatpush1.msra.mxu0 0.0
    %5000 = vmatprep.subr.mxu0 0.0
    %5001 = vmatpush1.msra.mxu0 0.0
    %5002 = vmatprep.subr.mxu0 0.0
    %5003 = vmatpush1.msra.mxu0 0.0
    %5004 = vmatprep.subr.mxu0 0.0
    %5005 = vmatpush1.msra.mxu0 0.0
    %5006 = vmatprep.subr.mxu0 0.0
    %5007 = vmatpush1.msra.mxu0 0.0
    %5008 = vmatprep.subr.mxu0 0.0
    %5009 = vmatpush1.msra.mxu0 0.0
    %5010 = vmatprep.subr.mxu0 0.0
    %5011 = vmatpush1.msra.mxu0 0.0
    %5012 = vmatprep.subr.mxu0 0.0
    %5013 = vmatpush1.msra.mxu0 0.0
    %5014 = vmatprep.subr.mxu0 0.0
    %5015 = vmatpush1.msra.mxu0 0.0
    %5016 = vmatprep.subr.mxu0 0.0
    %5017 = vmatpush1.msra.mxu0 0.0
    %5018 = vmatprep.subr.mxu0 0.0
    %5019 = vmatpush1.msra.mxu0 %v4991
    %5020 = vmatprep.subr.mxu0 0.0
    %5021 = vmatpush1.msra.mxu0 %v4986
    %5022 = vmatprep.subr.mxu0 0.0
    %5023 = vmatpush1.msra.mxu0 %v4981
    %5024 = vmatprep.subr.mxu0 0.0
    %5025 = vmatpush1.msra.mxu0 %v4976
    %5026 = vmatprep.subr.mxu0 0.0
    %5027 = vmatpush2.msra.mxu0 0.0
    %5028 = vmatprep.subr.mxu0 0.0
    %5029 = vmatpush2.msra.mxu0 0.0
    %5030 = vmatprep.subr.mxu0 0.0
    %5031 = vmatpush2.msra.mxu0 0.0
    %5032 = vmatprep.subr.mxu0 0.0
    %5033 = vmatpush2.msra.mxu0 0.0
    %5034 = vmatprep.subr.mxu0 0.0
    %5035 = vmatpush2.msra.mxu0 0.0
    %5036 = vmatprep.subr.mxu0 0.0
    %5037 = vmatpush2.msra.mxu0 0.0
    %5038 = vmatprep.subr.mxu0 0.0
    %5039 = vmatpush2.msra.mxu0 0.0
    %5040 = vmatprep.subr.mxu0 0.0
    %5041 = vmatpush2.msra.mxu0 0.0
    %5042 = vmatprep.subr.mxu0 0.0
    %5043 = vmatpush2.msra.mxu0 0.0
    %5044 = vmatprep.subr.mxu0 0.0
    %5045 = vmatpush2.msra.mxu0 0.0
    %5046 = vmatprep.subr.mxu0 0.0
    %5047 = vmatpush2.msra.mxu0 0.0
    %5048 = vmatprep.subr.mxu0 0.0
    %5049 = vmatpush2.msra.mxu0 0.0
    %5050 = vmatprep.subr.mxu0 0.0
    %5051 = vmatpush2.msra.mxu0 0.0
    %5052 = vmatprep.subr.mxu0 0.0
    %5053 = vmatpush2.msra.mxu0 0.0
    %5054 = vmatprep.subr.mxu0 0.0
    %5055 = vmatpush2.msra.mxu0 0.0
    %5056 = vmatprep.subr.mxu0 0.0
    %5057 = vmatpush2.msra.mxu0 0.0
    %5058 = vmatprep.mubr.f32.mxu0 0.0
    %5059 = vmatmul.mubr.f32.gmra.mxu0 %v197
    %v5060 = vpop.f32.mrf.mxu0
    %v5061 = vadd.f32 0.0, %v5060
    %v5062 = vpop.f32.mrf.mxu0
    %5063 = vdwg.mxu0
    %5065 = vrot.lane.b32.xlu0 %v5061, 104
    %v5066 = vpop.permute.xlu0 %5065
    %v5068 = vmin.f32 %v4867, %v5066
    %5070 = vset.pattern.permute.xlu0 0
    %5071 = vperm.xlu0 %5070, %v5068
    %v5072 = vpop.permute.xlu0 %5071
    %5074 = vst [vmem:[#allocation2] sm:$0xff] %v5072
    // Predicated region
    $region18: #{tpu_custom_call.1} parent=1 // pred_check
      _
    $region19: #{tpu_custom_call.1} parent=1 // pred_check_branch
      %5076 = sbr.rel (0) target = $region21
    $region20: #{tpu_custom_call.1} parent=1 // pred_region
      %s5078 = ssub.s32 128, 128
      %5079 = vsyncadd [#allocation3], %s5078
      %s5081 = sshll.u32 [#allocation2], 4
      %s5082 = int_to_ptr.vmem [resolvable:$true] %s5081
      %5084 = dma.vmem_to_hbm [thread:$0]  %s5082, 128, %s4, [#allocation3]
    $region21: #{tpu_custom_call.1} parent=1 // pred_fallthru
      _
    // Predicated region
    $region22: #{tpu_custom_call.1} parent=1 // pred_check
      _
    $region23: #{tpu_custom_call.1} parent=1 // pred_check_branch
      %5086 = sbr.rel (0) target = $region25
    $region24: #{tpu_custom_call.1} parent=1 // pred_region
      %5087 = dma.done [#allocation3], 128
    $region25: #{tpu_custom_call.1} parent=1 // pred_fallthru
      _
    %5088 = vsyncpa [#allocation3], 1

</llo_original>
